<compile_context>
chip_gen: v7x
topology: tpu7x:2x2x1
jax: 0.10.0
libtpu: 0.0.40
codegen_flags: <defaults>
</compile_context>

<pallas_src>
import functools

import jax
import jax.numpy as jnp
from jax.experimental import pallas as pl
from jax.experimental.pallas import tpu as pltpu


# --------------------------------------------------------------------------
# Fused kernel: bi-LSTM recurrence + banded local attention + mean pool + MLP
# --------------------------------------------------------------------------
def emotion_kernel(attn_window, T, H,
                   x_ref,       # [T, bb, D]   bf16 time-major input block
                   wih_ref,     # [D, 8H]      bf16 [W_ih_fwd | W_ih_bwd], gates (i,f,o,g)
                   whh_ref,     # [2H, 8H]     bf16 block-diag [W_hh_fwd ; W_hh_bwd]
                   b_ref,       # [1, 8H]      f32  [b_fwd | b_bwd]
                   waf_ref,     # [1, H]       f32  attention weight, fwd half
                   wab_ref,     # [1, H]       f32  attention weight, bwd half
                   ba_ref,      # [1, 1]       f32
                   w1f_ref,     # [H, H]       bf16 classifier W1 rows for fwd pool
                   w1b_ref,     # [H, H]       bf16 classifier W1 rows for bwd pool
                   b1_ref,      # [1, H]       f32
                   w2_ref,      # [H, EP]      bf16 (cols zero-padded to 128)
                   b2_ref,      # [1, EP]      f32
                   out_ref,     # [bb, EP]     f32
                   xpf_scr,     # VMEM [T, bb, 4H] bf16  fwd input projections
                   xpb_scr,     # VMEM [T, bb, 4H] bf16  bwd input projections (time-reversed)
                   hf_scr,      # VMEM [T, bb, H]  f32   fwd hidden states
                   hb_scr):     # VMEM [T, bb, H]  f32   bwd hidden states
    bb = x_ref.shape[1]
    H3, H4 = 3 * H, 4 * H
    unroll = T if T <= 16 else 4

    # ---- 1. Hoisted input projection (per time step; no [T*bb,D] reshape copy).
    wih = wih_ref[...]
    bias = b_ref[...]

    def proj_step(t, carry):
        p = jnp.dot(x_ref[t], wih, preferred_element_type=jnp.float32) + bias  # [bb, 8H]
        xpf_scr[t] = p[:, :H4].astype(jnp.bfloat16)
        xpb_scr[T - 1 - t] = p[:, H4:].astype(jnp.bfloat16)   # store bwd time-reversed
        return carry

    jax.lax.fori_loop(0, T, proj_step, 0, unroll=unroll)

    # ---- 2. Fused bidirectional recurrence: one 8H-wide MXU call per step.
    whh = whh_ref[...]

    def gates(z, c):
        # gate order (i, f, o, g): one sigmoid over 3H lanes, one tanh over H.
        s = jax.nn.sigmoid(z[:, :H3])
        g = jnp.tanh(z[:, H3:])
        c_new = s[:, H:2 * H] * c + s[:, :H] * g
        h_new = s[:, 2 * H:H3] * jnp.tanh(c_new)
        return h_new, c_new

    def rec_step(t, carry):
        hcat, cf, cb = carry                                   # hcat = [hf | hb]
        r = jnp.dot(hcat.astype(jnp.bfloat16), whh,
                    preferred_element_type=jnp.float32)        # [bb, 8H]
        zf = xpf_scr[t].astype(jnp.float32) + r[:, :H4]
        zb = xpb_scr[t].astype(jnp.float32) + r[:, H4:]
        hf, cf = gates(zf, cf)
        hb, cb = gates(zb, cb)
        hf_scr[t] = hf
        hb_scr[T - 1 - t] = hb                                 # back to original time index
        return jnp.concatenate([hf, hb], axis=-1), cf, cb

    h0 = jnp.zeros((bb, 2 * H), jnp.float32)
    c0 = jnp.zeros((bb, H), jnp.float32)
    jax.lax.fori_loop(0, T, rec_step, (h0, c0, c0), unroll=unroll)

    # ---- 3. Local attention + mean pool, O(T) memory; no hf|hb lane concat.
    # alpha[t, j] = e_j / D_t (score depends only on key j), mean over t
    # collapses to per-key weights w_j = e_j * (band @ 1/D)_j / T.
    hf = hf_scr[...]                                           # [T, bb, H]
    hb = hb_scr[...]
    scores = (jnp.sum(hf * waf_ref[...][None], axis=-1)
              + jnp.sum(hb * wab_ref[...][None], axis=-1)
              + ba_ref[...])                                   # [T, bb]
    m = jnp.max(scores, axis=0, keepdims=True)
    e = jnp.exp(scores - m)

    rows = jax.lax.broadcasted_iota(jnp.int32, (T, T), 0)
    cols = jax.lax.broadcasted_iota(jnp.int32, (T, T), 1)
    band = (jnp.abs(rows - cols) <= attn_window).astype(jnp.float32)
    # For long T, replace the two [T,T] band matmuls with windowed prefix sums.
    denom = jnp.dot(band, e, preferred_element_type=jnp.float32)       # [T, bb]
    g = jnp.dot(band, pl.reciprocal(denom, approx=True),
                preferred_element_type=jnp.float32)                    # [T, bb]
    weight = e * g * (1.0 / T)                                         # [T, bb]
    pooled_f = jnp.sum(weight[:, :, None] * hf, axis=0)                # [bb, H]
    pooled_b = jnp.sum(weight[:, :, None] * hb, axis=0)                # [bb, H]

    # ---- 4. Classifier MLP (bf16 MXU operands, f32 accumulation, W1 split).
    h1 = jnp.maximum(
        jnp.dot(pooled_f.astype(jnp.bfloat16), w1f_ref[...],
                preferred_element_type=jnp.float32)
        + jnp.dot(pooled_b.astype(jnp.bfloat16), w1b_ref[...],
                  preferred_element_type=jnp.float32)
        + b1_ref[...], 0.0)
    out_ref[...] = (jnp.dot(h1.astype(jnp.bfloat16), w2_ref[...],
                            preferred_element_type=jnp.float32) + b2_ref[...])


# --------------------------------------------------------------------------
# Wrapper
# --------------------------------------------------------------------------
def _reorder_gates(w, H):
    # PyTorch LSTM gate order (i, f, g, o) -> (i, f, o, g) along the last axis
    # so the three sigmoid gates are one contiguous lane slice in the kernel.
    return jnp.concatenate(
        [w[..., :H], w[..., H:2 * H], w[..., 3 * H:], w[..., 2 * H:3 * H]], axis=-1)


def emotion_model_forward(features, params, attn_window):
    B, T, D = features.shape
    H = params['whh_f'].shape[0]
    E = params['w2'].shape[1]
    EP = ((E + 127) // 128) * 128            # lane-dense output (sliced back below)

    # --- batch block: as large as a per-generation VMEM budget allows.
    def _block_bytes(bb):
        xp = 2 * T * bb * 4 * H * 2          # two bf16 xp scratches
        hs = 2 * T * bb * H * 4              # two f32 hidden scratches
        xin = 2 * T * bb * D * 2             # double-buffered bf16 input block
        out = 2 * bb * EP * 4                # double-buffered output block
        return xp + hs + xin + out

    budget = 36 * 1024 * 1024                # fits v7x's 64 MiB/TC with headroom
    bb = B                                   # fallback: whole batch in one block
    for cand in (256, 128, 64, 32, 16, 8):   # <B blocks must be multiples of 8
        if cand <= B and B % cand == 0 and _block_bytes(cand) <= budget:
            bb = cand
            break
    nb = B // bb
    # Note: on v7x prefer shapes giving an even nb so the ("parallel",) axis
    # splits across both TensorCores.

    x_tm = jnp.transpose(features, (1, 0, 2)).astype(jnp.bfloat16)       # [T, B, D]

    r = functools.partial(_reorder_gates, H=H)
    wih = jnp.concatenate([r(params['wih_f']), r(params['wih_b'])],
                          axis=1).astype(jnp.bfloat16)                   # [D, 8H]
    whh = jnp.zeros((2 * H, 8 * H), jnp.float32)
    whh = whh.at[:H, :4 * H].set(r(params['whh_f']))
    whh = whh.at[H:, 4 * H:].set(r(params['whh_b'])).astype(jnp.bfloat16)  # block-diag
    bias = jnp.concatenate([r(params['b_f']), r(params['b_b'])], axis=1)  # [1, 8H]

    waf = params['w_attn'][:, :H]
    wab = params['w_attn'][:, H:]
    w1f = params['w1'][:H].astype(jnp.bfloat16)
    w1b = params['w1'][H:].astype(jnp.bfloat16)
    w2 = jnp.zeros((H, EP), jnp.float32).at[:, :E].set(params['w2']).astype(jnp.bfloat16)
    b2 = jnp.zeros((1, EP), jnp.float32).at[:, :E].set(params['b2'])

    kernel = functools.partial(emotion_kernel, attn_window, T, H)
    const = lambda i: (0, 0)

    out = pl.pallas_call(
        kernel,
        grid=(nb,),
        out_shape=jax.ShapeDtypeStruct((B, EP), jnp.float32),
        in_specs=[
            pl.BlockSpec((T, bb, D), lambda i: (0, i, 0)),   # x (time-major, bf16)
            pl.BlockSpec((D, 8 * H), const),                 # W_ih fused
            pl.BlockSpec((2 * H, 8 * H), const),             # W_hh block-diag
            pl.BlockSpec((1, 8 * H), const),                 # bias
            pl.BlockSpec((1, H), const),                     # attn weight (fwd)
            pl.BlockSpec((1, H), const),                     # attn weight (bwd)
            pl.BlockSpec((1, 1), const),                     # attn bias
            pl.BlockSpec((H, H), const),                     # W1 (fwd rows)
            pl.BlockSpec((H, H), const),                     # W1 (bwd rows)
            pl.BlockSpec((1, H), const),                     # b1
            pl.BlockSpec((H, EP), const),                    # W2 (lane-padded)
            pl.BlockSpec((1, EP), const),                    # b2 (lane-padded)
        ],
        out_specs=pl.BlockSpec((bb, EP), lambda i: (i, 0)),
        scratch_shapes=[
            pltpu.VMEM((T, bb, 4 * H), jnp.bfloat16),
            pltpu.VMEM((T, bb, 4 * H), jnp.bfloat16),
            pltpu.VMEM((T, bb, H), jnp.float32),
            pltpu.VMEM((T, bb, H), jnp.float32),
        ],
        compiler_params=pltpu.CompilerParams(
            dimension_semantics=("parallel",),
            vmem_limit_bytes=48 * 1024 * 1024),
    )(x_tm, wih, whh, bias, waf, wab, params['b_attn'],
      w1f, w1b, params['b1'], w2, b2)
    return out[:, :E]


# --------------------------------------------------------------------------
# Deterministic synthetic parameters (shapes follow the PyTorch module,
# LSTM weights gate-stacked [in, 4H] in PyTorch order (i,f,g,o),
# Linear weights stored as [in, out]).
# --------------------------------------------------------------------------
def init_params(key, feature_dim, hidden_size, num_emotions):
    ks = jax.random.split(key, 12)
    s = 0.1
    H = hidden_size

    def u(k, shape):
        return jax.random.uniform(k, shape, jnp.float32, -s, s)

    return dict(
        wih_f=u(ks[0], (feature_dim, 4 * H)),
        whh_f=u(ks[1], (H, 4 * H)),
        b_f=u(ks[2], (1, 4 * H)),
        wih_b=u(ks[3], (feature_dim, 4 * H)),
        whh_b=u(ks[4], (H, 4 * H)),
        b_b=u(ks[5], (1, 4 * H)),
        w_attn=u(ks[6], (1, 2 * H)),   # LocalAttention: Linear(2H -> 1)
        b_attn=u(ks[7], (1, 1)),
        w1=u(ks[8], (2 * H, H)),       # classifier: Linear(2H->H), ReLU, Linear(H->E)
        b1=u(ks[9], (1, H)),
        w2=u(ks[10], (H, num_emotions)),
        b2=u(ks[11], (1, num_emotions)),
    )


# --------------------------------------------------------------------------
# Pure-JAX f32 reference mirroring the PyTorch forward (correctness check).
# --------------------------------------------------------------------------
def reference_forward(features, params, attn_window):
    B, T, _ = features.shape
    H = params['whh_f'].shape[0]

    def run_dir(x_tm, wih, whh, b):
        def cell(carry, x_t):
            h, c = carry
            z = x_t @ wih + h @ whh + b                      # [B, 4H], order (i,f,g,o)
            i = jax.nn.sigmoid(z[:, :H])
            f = jax.nn.sigmoid(z[:, H:2 * H])
            g = jnp.tanh(z[:, 2 * H:3 * H])
            o = jax.nn.sigmoid(z[:, 3 * H:])
            c = f * c + i * g
            h = o * jnp.tanh(c)
            return (h, c), h
        h0 = jnp.zeros((B, H), jnp.float32)
        _, hs = jax.lax.scan(cell, (h0, jnp.zeros_like(h0)), x_tm)
        return hs                                            # [T, B, H]

    x_tm = jnp.transpose(features, (1, 0, 2))
    hf = run_dir(x_tm, params['wih_f'], params['whh_f'], params['b_f'])
    hb = run_dir(x_tm[::-1], params['wih_b'], params['whh_b'], params['b_b'])[::-1]
    lstm_out = jnp.transpose(jnp.concatenate([hf, hb], -1), (1, 0, 2))   # [B,T,2H]

    w_attn = params['w_attn'].reshape(-1)
    outs = []
    for t in range(T):
        s0 = max(0, t - attn_window)
        e0 = min(T, t + attn_window + 1)
        ctx = lstm_out[:, s0:e0, :]
        sc = ctx @ w_attn + params['b_attn'][0, 0]
        alpha = jax.nn.softmax(sc, axis=1)[..., None]
        outs.append(jnp.sum(ctx * alpha, axis=1, keepdims=True))
    attn_out = jnp.concatenate(outs, axis=1)
    pooled = attn_out.mean(axis=1)
    h1 = jax.nn.relu(pooled @ params['w1'] + params['b1'])
    return h1 @ params['w2'] + params['b2']


if __name__ == "__main__":
    B, T = 2, 8
    feature_dim, hidden_size, num_emotions, attn_window = 64, 32, 8, 2

    key = jax.random.PRNGKey(0)
    kx, kp = jax.random.split(key)
    features = jax.random.normal(kx, (B, T, feature_dim), jnp.float32)
    params = init_params(kp, feature_dim, hidden_size, num_emotions)

    logits = emotion_model_forward(features, params, attn_window)
    logits = jax.block_until_ready(logits)

    ref = reference_forward(features, params, attn_window)
    assert logits.shape == (B, num_emotions)
    assert bool(jnp.all(jnp.isfinite(logits)))
    # bf16 MXU operands / bf16 xp scratch (f32 accumulation) vs f32 reference.
    err = float(jnp.max(jnp.abs(logits - ref)))
    assert bool(jnp.allclose(logits, ref, atol=2e-2, rtol=2e-2)), (
        "max abs diff = %g" % err)

    print("KERNEL_OK")
</pallas_src>

<mosaic_0001>
module attributes {stable_mosaic.version = 11 : i64} {
  func.func @emotion_kernel(%arg0: i32, %arg1: memref<8x2x64xbf16, #tpu.memory_space<vmem>>, %arg2: memref<64x256xbf16, #tpu.memory_space<vmem>>, %arg3: memref<64x256xbf16, #tpu.memory_space<vmem>>, %arg4: memref<1x256xf32, #tpu.memory_space<vmem>>, %arg5: memref<1x32xf32, #tpu.memory_space<vmem>>, %arg6: memref<1x32xf32, #tpu.memory_space<vmem>>, %arg7: memref<1x1xf32, #tpu.memory_space<vmem>>, %arg8: memref<32x32xbf16, #tpu.memory_space<vmem>>, %arg9: memref<32x32xbf16, #tpu.memory_space<vmem>>, %arg10: memref<1x32xf32, #tpu.memory_space<vmem>>, %arg11: memref<32x128xbf16, #tpu.memory_space<vmem>>, %arg12: memref<1x128xf32, #tpu.memory_space<vmem>>, %arg13: memref<2x128xf32, #tpu.memory_space<vmem>>, %arg14: memref<8x2x128xbf16, #tpu.memory_space<vmem>>, %arg15: memref<8x2x128xbf16, #tpu.memory_space<vmem>>, %arg16: memref<8x2x32xf32, #tpu.memory_space<vmem>>, %arg17: memref<8x2x32xf32, #tpu.memory_space<vmem>>) attributes {dimension_semantics = [#tpu.dimension_semantics<parallel>], iteration_bounds = array<i64: 1>, scalar_prefetch = 0 : i64, scratch_operands = 4 : i64, tpu.core_type = #tpu.core_type<tc>, window_params = [{transform_indices = @transform_0, window_bounds = array<i64: 8, 2, 64>}, {pipeline_mode = #tpu.pipeline_mode<synchronous>, transform_indices = @transform_1, window_bounds = array<i64: 64, 256>}, {pipeline_mode = #tpu.pipeline_mode<synchronous>, transform_indices = @transform_2, window_bounds = array<i64: 64, 256>}, {pipeline_mode = #tpu.pipeline_mode<synchronous>, transform_indices = @transform_3, window_bounds = array<i64: 1, 256>}, {pipeline_mode = #tpu.pipeline_mode<synchronous>, transform_indices = @transform_4, window_bounds = array<i64: 1, 32>}, {pipeline_mode = #tpu.pipeline_mode<synchronous>, transform_indices = @transform_5, window_bounds = array<i64: 1, 32>}, {pipeline_mode = #tpu.pipeline_mode<synchronous>, transform_indices = @transform_6, window_bounds = array<i64: 1, 1>}, {pipeline_mode = #tpu.pipeline_mode<synchronous>, transform_indices = @transform_7, window_bounds = array<i64: 32, 32>}, {pipeline_mode = #tpu.pipeline_mode<synchronous>, transform_indices = @transform_8, window_bounds = array<i64: 32, 32>}, {pipeline_mode = #tpu.pipeline_mode<synchronous>, transform_indices = @transform_9, window_bounds = array<i64: 1, 32>}, {pipeline_mode = #tpu.pipeline_mode<synchronous>, transform_indices = @transform_10, window_bounds = array<i64: 32, 128>}, {pipeline_mode = #tpu.pipeline_mode<synchronous>, transform_indices = @transform_11, window_bounds = array<i64: 1, 128>}, {transform_indices = @transform_12, window_bounds = array<i64: 2, 128>}]} {
    %c0 = arith.constant 0 : index
    %c0_0 = arith.constant 0 : index
    %0 = vector.load %arg2[%c0, %c0_0] : memref<64x256xbf16, #tpu.memory_space<vmem>>, vector<64x256xbf16>
    %c0_1 = arith.constant 0 : index
    %c0_2 = arith.constant 0 : index
    %1 = vector.load %arg4[%c0_1, %c0_2] : memref<1x256xf32, #tpu.memory_space<vmem>>, vector<1x256xf32>
    %c0_i32 = arith.constant 0 : i32
    %2 = arith.index_cast %c0_i32 : i32 to index
    %c0_3 = arith.constant 0 : index
    %c0_4 = arith.constant 0 : index
    %3 = vector.load %arg1[%2, %c0_3, %c0_4] : memref<8x2x64xbf16, #tpu.memory_space<vmem>>, vector<1x2x64xbf16>
    %4 = vector.shape_cast %3 : vector<1x2x64xbf16> to vector<2x64xbf16>
    %cst = arith.constant dense<0.000000e+00> : vector<2x256xf32>
    %5 = tpu.matmul %4, %0, %cst {dimension_numbers = #tpu.dot_dimension_numbers<[1], [0], [0], [1], [0, 0, 1, 1], [], []>} : vector<2x64xbf16>, vector<64x256xbf16>, vector<2x256xf32> -> vector<2x256xf32>
    %6 = vector.broadcast %1 : vector<1x256xf32> to vector<2x256xf32>
    %7 = arith.addf %5, %6 : vector<2x256xf32>
    %8 = vector.extract_strided_slice %7 {offsets = [0, 0], sizes = [2, 128], strides = [1, 1]} : vector<2x256xf32> to vector<2x128xf32>
    %9 = arith.truncf %8 : vector<2x128xf32> to vector<2x128xbf16>
    %10 = arith.index_cast %c0_i32 : i32 to index
    %c0_5 = arith.constant 0 : index
    %c0_6 = arith.constant 0 : index
    %11 = vector.load %arg14[%10, %c0_5, %c0_6] : memref<8x2x128xbf16, #tpu.memory_space<vmem>>, vector<1x2x128xbf16>
    %12 = vector.shape_cast %11 : vector<1x2x128xbf16> to vector<2x128xbf16>
    %13 = vector.shape_cast %9 : vector<2x128xbf16> to vector<1x2x128xbf16>
    tpu.vector_store %arg14[%10, %c0_5, %c0_6], %13 {strides = array<i32>} : memref<8x2x128xbf16, #tpu.memory_space<vmem>>, vector<1x2x128xbf16>,
    %14 = vector.extract_strided_slice %7 {offsets = [0, 128], sizes = [2, 128], strides = [1, 1]} : vector<2x256xf32> to vector<2x128xf32>
    %15 = arith.truncf %14 : vector<2x128xf32> to vector<2x128xbf16>
    %c7_i32 = arith.constant 7 : i32
    %16 = arith.subi %c7_i32, %c0_i32 : i32
    %17 = arith.index_cast %16 : i32 to index
    %c0_7 = arith.constant 0 : index
    %c0_8 = arith.constant 0 : index
    %18 = vector.load %arg15[%17, %c0_7, %c0_8] : memref<8x2x128xbf16, #tpu.memory_space<vmem>>, vector<1x2x128xbf16>
    %19 = vector.shape_cast %18 : vector<1x2x128xbf16> to vector<2x128xbf16>
    %20 = vector.shape_cast %15 : vector<2x128xbf16> to vector<1x2x128xbf16>
    tpu.vector_store %arg15[%17, %c0_7, %c0_8], %20 {strides = array<i32>} : memref<8x2x128xbf16, #tpu.memory_space<vmem>>, vector<1x2x128xbf16>,
    %c1_i32 = arith.constant 1 : i32
    %21 = arith.index_cast %c1_i32 : i32 to index
    %c0_9 = arith.constant 0 : index
    %c0_10 = arith.constant 0 : index
    %22 = vector.load %arg1[%21, %c0_9, %c0_10] : memref<8x2x64xbf16, #tpu.memory_space<vmem>>, vector<1x2x64xbf16>
    %23 = vector.shape_cast %22 : vector<1x2x64xbf16> to vector<2x64xbf16>
    %cst_11 = arith.constant dense<0.000000e+00> : vector<2x256xf32>
    %24 = tpu.matmul %23, %0, %cst_11 {dimension_numbers = #tpu.dot_dimension_numbers<[1], [0], [0], [1], [0, 0, 1, 1], [], []>} : vector<2x64xbf16>, vector<64x256xbf16>, vector<2x256xf32> -> vector<2x256xf32>
    %25 = vector.broadcast %1 : vector<1x256xf32> to vector<2x256xf32>
    %26 = arith.addf %24, %25 : vector<2x256xf32>
    %27 = vector.extract_strided_slice %26 {offsets = [0, 0], sizes = [2, 128], strides = [1, 1]} : vector<2x256xf32> to vector<2x128xf32>
    %28 = arith.truncf %27 : vector<2x128xf32> to vector<2x128xbf16>
    %29 = arith.index_cast %c1_i32 : i32 to index
    %c0_12 = arith.constant 0 : index
    %c0_13 = arith.constant 0 : index
    %30 = vector.load %arg14[%29, %c0_12, %c0_13] : memref<8x2x128xbf16, #tpu.memory_space<vmem>>, vector<1x2x128xbf16>
    %31 = vector.shape_cast %30 : vector<1x2x128xbf16> to vector<2x128xbf16>
    %32 = vector.shape_cast %28 : vector<2x128xbf16> to vector<1x2x128xbf16>
    tpu.vector_store %arg14[%29, %c0_12, %c0_13], %32 {strides = array<i32>} : memref<8x2x128xbf16, #tpu.memory_space<vmem>>, vector<1x2x128xbf16>,
    %33 = vector.extract_strided_slice %26 {offsets = [0, 128], sizes = [2, 128], strides = [1, 1]} : vector<2x256xf32> to vector<2x128xf32>
    %34 = arith.truncf %33 : vector<2x128xf32> to vector<2x128xbf16>
    %c7_i32_14 = arith.constant 7 : i32
    %35 = arith.subi %c7_i32_14, %c1_i32 : i32
    %36 = arith.index_cast %35 : i32 to index
    %c0_15 = arith.constant 0 : index
    %c0_16 = arith.constant 0 : index
    %37 = vector.load %arg15[%36, %c0_15, %c0_16] : memref<8x2x128xbf16, #tpu.memory_space<vmem>>, vector<1x2x128xbf16>
    %38 = vector.shape_cast %37 : vector<1x2x128xbf16> to vector<2x128xbf16>
    %39 = vector.shape_cast %34 : vector<2x128xbf16> to vector<1x2x128xbf16>
    tpu.vector_store %arg15[%36, %c0_15, %c0_16], %39 {strides = array<i32>} : memref<8x2x128xbf16, #tpu.memory_space<vmem>>, vector<1x2x128xbf16>,
    %c2_i32 = arith.constant 2 : i32
    %40 = arith.index_cast %c2_i32 : i32 to index
    %c0_17 = arith.constant 0 : index
    %c0_18 = arith.constant 0 : index
    %41 = vector.load %arg1[%40, %c0_17, %c0_18] : memref<8x2x64xbf16, #tpu.memory_space<vmem>>, vector<1x2x64xbf16>
    %42 = vector.shape_cast %41 : vector<1x2x64xbf16> to vector<2x64xbf16>
    %cst_19 = arith.constant dense<0.000000e+00> : vector<2x256xf32>
    %43 = tpu.matmul %42, %0, %cst_19 {dimension_numbers = #tpu.dot_dimension_numbers<[1], [0], [0], [1], [0, 0, 1, 1], [], []>} : vector<2x64xbf16>, vector<64x256xbf16>, vector<2x256xf32> -> vector<2x256xf32>
    %44 = vector.broadcast %1 : vector<1x256xf32> to vector<2x256xf32>
    %45 = arith.addf %43, %44 : vector<2x256xf32>
    %46 = vector.extract_strided_slice %45 {offsets = [0, 0], sizes = [2, 128], strides = [1, 1]} : vector<2x256xf32> to vector<2x128xf32>
    %47 = arith.truncf %46 : vector<2x128xf32> to vector<2x128xbf16>
    %48 = arith.index_cast %c2_i32 : i32 to index
    %c0_20 = arith.constant 0 : index
    %c0_21 = arith.constant 0 : index
    %49 = vector.load %arg14[%48, %c0_20, %c0_21] : memref<8x2x128xbf16, #tpu.memory_space<vmem>>, vector<1x2x128xbf16>
    %50 = vector.shape_cast %49 : vector<1x2x128xbf16> to vector<2x128xbf16>
    %51 = vector.shape_cast %47 : vector<2x128xbf16> to vector<1x2x128xbf16>
    tpu.vector_store %arg14[%48, %c0_20, %c0_21], %51 {strides = array<i32>} : memref<8x2x128xbf16, #tpu.memory_space<vmem>>, vector<1x2x128xbf16>,
    %52 = vector.extract_strided_slice %45 {offsets = [0, 128], sizes = [2, 128], strides = [1, 1]} : vector<2x256xf32> to vector<2x128xf32>
    %53 = arith.truncf %52 : vector<2x128xf32> to vector<2x128xbf16>
    %c7_i32_22 = arith.constant 7 : i32
    %54 = arith.subi %c7_i32_22, %c2_i32 : i32
    %55 = arith.index_cast %54 : i32 to index
    %c0_23 = arith.constant 0 : index
    %c0_24 = arith.constant 0 : index
    %56 = vector.load %arg15[%55, %c0_23, %c0_24] : memref<8x2x128xbf16, #tpu.memory_space<vmem>>, vector<1x2x128xbf16>
    %57 = vector.shape_cast %56 : vector<1x2x128xbf16> to vector<2x128xbf16>
    %58 = vector.shape_cast %53 : vector<2x128xbf16> to vector<1x2x128xbf16>
    tpu.vector_store %arg15[%55, %c0_23, %c0_24], %58 {strides = array<i32>} : memref<8x2x128xbf16, #tpu.memory_space<vmem>>, vector<1x2x128xbf16>,
    %c3_i32 = arith.constant 3 : i32
    %59 = arith.index_cast %c3_i32 : i32 to index
    %c0_25 = arith.constant 0 : index
    %c0_26 = arith.constant 0 : index
    %60 = vector.load %arg1[%59, %c0_25, %c0_26] : memref<8x2x64xbf16, #tpu.memory_space<vmem>>, vector<1x2x64xbf16>
    %61 = vector.shape_cast %60 : vector<1x2x64xbf16> to vector<2x64xbf16>
    %cst_27 = arith.constant dense<0.000000e+00> : vector<2x256xf32>
    %62 = tpu.matmul %61, %0, %cst_27 {dimension_numbers = #tpu.dot_dimension_numbers<[1], [0], [0], [1], [0, 0, 1, 1], [], []>} : vector<2x64xbf16>, vector<64x256xbf16>, vector<2x256xf32> -> vector<2x256xf32>
    %63 = vector.broadcast %1 : vector<1x256xf32> to vector<2x256xf32>
    %64 = arith.addf %62, %63 : vector<2x256xf32>
    %65 = vector.extract_strided_slice %64 {offsets = [0, 0], sizes = [2, 128], strides = [1, 1]} : vector<2x256xf32> to vector<2x128xf32>
    %66 = arith.truncf %65 : vector<2x128xf32> to vector<2x128xbf16>
    %67 = arith.index_cast %c3_i32 : i32 to index
    %c0_28 = arith.constant 0 : index
    %c0_29 = arith.constant 0 : index
    %68 = vector.load %arg14[%67, %c0_28, %c0_29] : memref<8x2x128xbf16, #tpu.memory_space<vmem>>, vector<1x2x128xbf16>
    %69 = vector.shape_cast %68 : vector<1x2x128xbf16> to vector<2x128xbf16>
    %70 = vector.shape_cast %66 : vector<2x128xbf16> to vector<1x2x128xbf16>
    tpu.vector_store %arg14[%67, %c0_28, %c0_29], %70 {strides = array<i32>} : memref<8x2x128xbf16, #tpu.memory_space<vmem>>, vector<1x2x128xbf16>,
    %71 = vector.extract_strided_slice %64 {offsets = [0, 128], sizes = [2, 128], strides = [1, 1]} : vector<2x256xf32> to vector<2x128xf32>
    %72 = arith.truncf %71 : vector<2x128xf32> to vector<2x128xbf16>
    %c7_i32_30 = arith.constant 7 : i32
    %73 = arith.subi %c7_i32_30, %c3_i32 : i32
    %74 = arith.index_cast %73 : i32 to index
    %c0_31 = arith.constant 0 : index
    %c0_32 = arith.constant 0 : index
    %75 = vector.load %arg15[%74, %c0_31, %c0_32] : memref<8x2x128xbf16, #tpu.memory_space<vmem>>, vector<1x2x128xbf16>
    %76 = vector.shape_cast %75 : vector<1x2x128xbf16> to vector<2x128xbf16>
    %77 = vector.shape_cast %72 : vector<2x128xbf16> to vector<1x2x128xbf16>
    tpu.vector_store %arg15[%74, %c0_31, %c0_32], %77 {strides = array<i32>} : memref<8x2x128xbf16, #tpu.memory_space<vmem>>, vector<1x2x128xbf16>,
    %c4_i32 = arith.constant 4 : i32
    %78 = arith.index_cast %c4_i32 : i32 to index
    %c0_33 = arith.constant 0 : index
    %c0_34 = arith.constant 0 : index
    %79 = vector.load %arg1[%78, %c0_33, %c0_34] : memref<8x2x64xbf16, #tpu.memory_space<vmem>>, vector<1x2x64xbf16>
    %80 = vector.shape_cast %79 : vector<1x2x64xbf16> to vector<2x64xbf16>
    %cst_35 = arith.constant dense<0.000000e+00> : vector<2x256xf32>
    %81 = tpu.matmul %80, %0, %cst_35 {dimension_numbers = #tpu.dot_dimension_numbers<[1], [0], [0], [1], [0, 0, 1, 1], [], []>} : vector<2x64xbf16>, vector<64x256xbf16>, vector<2x256xf32> -> vector<2x256xf32>
    %82 = vector.broadcast %1 : vector<1x256xf32> to vector<2x256xf32>
    %83 = arith.addf %81, %82 : vector<2x256xf32>
    %84 = vector.extract_strided_slice %83 {offsets = [0, 0], sizes = [2, 128], strides = [1, 1]} : vector<2x256xf32> to vector<2x128xf32>
    %85 = arith.truncf %84 : vector<2x128xf32> to vector<2x128xbf16>
    %86 = arith.index_cast %c4_i32 : i32 to index
    %c0_36 = arith.constant 0 : index
    %c0_37 = arith.constant 0 : index
    %87 = vector.load %arg14[%86, %c0_36, %c0_37] : memref<8x2x128xbf16, #tpu.memory_space<vmem>>, vector<1x2x128xbf16>
    %88 = vector.shape_cast %87 : vector<1x2x128xbf16> to vector<2x128xbf16>
    %89 = vector.shape_cast %85 : vector<2x128xbf16> to vector<1x2x128xbf16>
    tpu.vector_store %arg14[%86, %c0_36, %c0_37], %89 {strides = array<i32>} : memref<8x2x128xbf16, #tpu.memory_space<vmem>>, vector<1x2x128xbf16>,
    %90 = vector.extract_strided_slice %83 {offsets = [0, 128], sizes = [2, 128], strides = [1, 1]} : vector<2x256xf32> to vector<2x128xf32>
    %91 = arith.truncf %90 : vector<2x128xf32> to vector<2x128xbf16>
    %c7_i32_38 = arith.constant 7 : i32
    %92 = arith.subi %c7_i32_38, %c4_i32 : i32
    %93 = arith.index_cast %92 : i32 to index
    %c0_39 = arith.constant 0 : index
    %c0_40 = arith.constant 0 : index
    %94 = vector.load %arg15[%93, %c0_39, %c0_40] : memref<8x2x128xbf16, #tpu.memory_space<vmem>>, vector<1x2x128xbf16>
    %95 = vector.shape_cast %94 : vector<1x2x128xbf16> to vector<2x128xbf16>
    %96 = vector.shape_cast %91 : vector<2x128xbf16> to vector<1x2x128xbf16>
    tpu.vector_store %arg15[%93, %c0_39, %c0_40], %96 {strides = array<i32>} : memref<8x2x128xbf16, #tpu.memory_space<vmem>>, vector<1x2x128xbf16>,
    %c5_i32 = arith.constant 5 : i32
    %97 = arith.index_cast %c5_i32 : i32 to index
    %c0_41 = arith.constant 0 : index
    %c0_42 = arith.constant 0 : index
    %98 = vector.load %arg1[%97, %c0_41, %c0_42] : memref<8x2x64xbf16, #tpu.memory_space<vmem>>, vector<1x2x64xbf16>
    %99 = vector.shape_cast %98 : vector<1x2x64xbf16> to vector<2x64xbf16>
    %cst_43 = arith.constant dense<0.000000e+00> : vector<2x256xf32>
    %100 = tpu.matmul %99, %0, %cst_43 {dimension_numbers = #tpu.dot_dimension_numbers<[1], [0], [0], [1], [0, 0, 1, 1], [], []>} : vector<2x64xbf16>, vector<64x256xbf16>, vector<2x256xf32> -> vector<2x256xf32>
    %101 = vector.broadcast %1 : vector<1x256xf32> to vector<2x256xf32>
    %102 = arith.addf %100, %101 : vector<2x256xf32>
    %103 = vector.extract_strided_slice %102 {offsets = [0, 0], sizes = [2, 128], strides = [1, 1]} : vector<2x256xf32> to vector<2x128xf32>
    %104 = arith.truncf %103 : vector<2x128xf32> to vector<2x128xbf16>
    %105 = arith.index_cast %c5_i32 : i32 to index
    %c0_44 = arith.constant 0 : index
    %c0_45 = arith.constant 0 : index
    %106 = vector.load %arg14[%105, %c0_44, %c0_45] : memref<8x2x128xbf16, #tpu.memory_space<vmem>>, vector<1x2x128xbf16>
    %107 = vector.shape_cast %106 : vector<1x2x128xbf16> to vector<2x128xbf16>
    %108 = vector.shape_cast %104 : vector<2x128xbf16> to vector<1x2x128xbf16>
    tpu.vector_store %arg14[%105, %c0_44, %c0_45], %108 {strides = array<i32>} : memref<8x2x128xbf16, #tpu.memory_space<vmem>>, vector<1x2x128xbf16>,
    %109 = vector.extract_strided_slice %102 {offsets = [0, 128], sizes = [2, 128], strides = [1, 1]} : vector<2x256xf32> to vector<2x128xf32>
    %110 = arith.truncf %109 : vector<2x128xf32> to vector<2x128xbf16>
    %c7_i32_46 = arith.constant 7 : i32
    %111 = arith.subi %c7_i32_46, %c5_i32 : i32
    %112 = arith.index_cast %111 : i32 to index
    %c0_47 = arith.constant 0 : index
    %c0_48 = arith.constant 0 : index
    %113 = vector.load %arg15[%112, %c0_47, %c0_48] : memref<8x2x128xbf16, #tpu.memory_space<vmem>>, vector<1x2x128xbf16>
    %114 = vector.shape_cast %113 : vector<1x2x128xbf16> to vector<2x128xbf16>
    %115 = vector.shape_cast %110 : vector<2x128xbf16> to vector<1x2x128xbf16>
    tpu.vector_store %arg15[%112, %c0_47, %c0_48], %115 {strides = array<i32>} : memref<8x2x128xbf16, #tpu.memory_space<vmem>>, vector<1x2x128xbf16>,
    %c6_i32 = arith.constant 6 : i32
    %116 = arith.index_cast %c6_i32 : i32 to index
    %c0_49 = arith.constant 0 : index
    %c0_50 = arith.constant 0 : index
    %117 = vector.load %arg1[%116, %c0_49, %c0_50] : memref<8x2x64xbf16, #tpu.memory_space<vmem>>, vector<1x2x64xbf16>
    %118 = vector.shape_cast %117 : vector<1x2x64xbf16> to vector<2x64xbf16>
    %cst_51 = arith.constant dense<0.000000e+00> : vector<2x256xf32>
    %119 = tpu.matmul %118, %0, %cst_51 {dimension_numbers = #tpu.dot_dimension_numbers<[1], [0], [0], [1], [0, 0, 1, 1], [], []>} : vector<2x64xbf16>, vector<64x256xbf16>, vector<2x256xf32> -> vector<2x256xf32>
    %120 = vector.broadcast %1 : vector<1x256xf32> to vector<2x256xf32>
    %121 = arith.addf %119, %120 : vector<2x256xf32>
    %122 = vector.extract_strided_slice %121 {offsets = [0, 0], sizes = [2, 128], strides = [1, 1]} : vector<2x256xf32> to vector<2x128xf32>
    %123 = arith.truncf %122 : vector<2x128xf32> to vector<2x128xbf16>
    %124 = arith.index_cast %c6_i32 : i32 to index
    %c0_52 = arith.constant 0 : index
    %c0_53 = arith.constant 0 : index
    %125 = vector.load %arg14[%124, %c0_52, %c0_53] : memref<8x2x128xbf16, #tpu.memory_space<vmem>>, vector<1x2x128xbf16>
    %126 = vector.shape_cast %125 : vector<1x2x128xbf16> to vector<2x128xbf16>
    %127 = vector.shape_cast %123 : vector<2x128xbf16> to vector<1x2x128xbf16>
    tpu.vector_store %arg14[%124, %c0_52, %c0_53], %127 {strides = array<i32>} : memref<8x2x128xbf16, #tpu.memory_space<vmem>>, vector<1x2x128xbf16>,
    %128 = vector.extract_strided_slice %121 {offsets = [0, 128], sizes = [2, 128], strides = [1, 1]} : vector<2x256xf32> to vector<2x128xf32>
    %129 = arith.truncf %128 : vector<2x128xf32> to vector<2x128xbf16>
    %c7_i32_54 = arith.constant 7 : i32
    %130 = arith.subi %c7_i32_54, %c6_i32 : i32
    %131 = arith.index_cast %130 : i32 to index
    %c0_55 = arith.constant 0 : index
    %c0_56 = arith.constant 0 : index
    %132 = vector.load %arg15[%131, %c0_55, %c0_56] : memref<8x2x128xbf16, #tpu.memory_space<vmem>>, vector<1x2x128xbf16>
    %133 = vector.shape_cast %132 : vector<1x2x128xbf16> to vector<2x128xbf16>
    %134 = vector.shape_cast %129 : vector<2x128xbf16> to vector<1x2x128xbf16>
    tpu.vector_store %arg15[%131, %c0_55, %c0_56], %134 {strides = array<i32>} : memref<8x2x128xbf16, #tpu.memory_space<vmem>>, vector<1x2x128xbf16>,
    %c7_i32_57 = arith.constant 7 : i32
    %135 = arith.index_cast %c7_i32_57 : i32 to index
    %c0_58 = arith.constant 0 : index
    %c0_59 = arith.constant 0 : index
    %136 = vector.load %arg1[%135, %c0_58, %c0_59] : memref<8x2x64xbf16, #tpu.memory_space<vmem>>, vector<1x2x64xbf16>
    %137 = vector.shape_cast %136 : vector<1x2x64xbf16> to vector<2x64xbf16>
    %cst_60 = arith.constant dense<0.000000e+00> : vector<2x256xf32>
    %138 = tpu.matmul %137, %0, %cst_60 {dimension_numbers = #tpu.dot_dimension_numbers<[1], [0], [0], [1], [0, 0, 1, 1], [], []>} : vector<2x64xbf16>, vector<64x256xbf16>, vector<2x256xf32> -> vector<2x256xf32>
    %139 = vector.broadcast %1 : vector<1x256xf32> to vector<2x256xf32>
    %140 = arith.addf %138, %139 : vector<2x256xf32>
    %141 = vector.extract_strided_slice %140 {offsets = [0, 0], sizes = [2, 128], strides = [1, 1]} : vector<2x256xf32> to vector<2x128xf32>
    %142 = arith.truncf %141 : vector<2x128xf32> to vector<2x128xbf16>
    %143 = arith.index_cast %c7_i32_57 : i32 to index
    %c0_61 = arith.constant 0 : index
    %c0_62 = arith.constant 0 : index
    %144 = vector.load %arg14[%143, %c0_61, %c0_62] : memref<8x2x128xbf16, #tpu.memory_space<vmem>>, vector<1x2x128xbf16>
    %145 = vector.shape_cast %144 : vector<1x2x128xbf16> to vector<2x128xbf16>
    %146 = vector.shape_cast %142 : vector<2x128xbf16> to vector<1x2x128xbf16>
    tpu.vector_store %arg14[%143, %c0_61, %c0_62], %146 {strides = array<i32>} : memref<8x2x128xbf16, #tpu.memory_space<vmem>>, vector<1x2x128xbf16>,
    %147 = vector.extract_strided_slice %140 {offsets = [0, 128], sizes = [2, 128], strides = [1, 1]} : vector<2x256xf32> to vector<2x128xf32>
    %148 = arith.truncf %147 : vector<2x128xf32> to vector<2x128xbf16>
    %c7_i32_63 = arith.constant 7 : i32
    %149 = arith.subi %c7_i32_63, %c7_i32_57 : i32
    %150 = arith.index_cast %149 : i32 to index
    %c0_64 = arith.constant 0 : index
    %c0_65 = arith.constant 0 : index
    %151 = vector.load %arg15[%150, %c0_64, %c0_65] : memref<8x2x128xbf16, #tpu.memory_space<vmem>>, vector<1x2x128xbf16>
    %152 = vector.shape_cast %151 : vector<1x2x128xbf16> to vector<2x128xbf16>
    %153 = vector.shape_cast %148 : vector<2x128xbf16> to vector<1x2x128xbf16>
    tpu.vector_store %arg15[%150, %c0_64, %c0_65], %153 {strides = array<i32>} : memref<8x2x128xbf16, #tpu.memory_space<vmem>>, vector<1x2x128xbf16>,
    %c8_i32 = arith.constant 8 : i32
    %c0_66 = arith.constant 0 : index
    %c0_67 = arith.constant 0 : index
    %154 = vector.load %arg3[%c0_66, %c0_67] : memref<64x256xbf16, #tpu.memory_space<vmem>>, vector<64x256xbf16>
    %cst_68 = arith.constant 0.000000e+00 : f32
    %155 = vector.broadcast %cst_68 : f32 to vector<2x64xf32>
    %cst_69 = arith.constant 0.000000e+00 : f32
    %156 = vector.broadcast %cst_69 : f32 to vector<2x32xf32>
    %c0_i32_70 = arith.constant 0 : i32
    %157 = arith.truncf %155 : vector<2x64xf32> to vector<2x64xbf16>
    %cst_71 = arith.constant dense<0.000000e+00> : vector<2x256xf32>
    %158 = tpu.matmul %157, %154, %cst_71 {dimension_numbers = #tpu.dot_dimension_numbers<[1], [0], [0], [1], [0, 0, 1, 1], [], []>} : vector<2x64xbf16>, vector<64x256xbf16>, vector<2x256xf32> -> vector<2x256xf32>
    %159 = arith.index_cast %c0_i32_70 : i32 to index
    %c0_72 = arith.constant 0 : index
    %c0_73 = arith.constant 0 : index
    %160 = vector.load %arg14[%159, %c0_72, %c0_73] : memref<8x2x128xbf16, #tpu.memory_space<vmem>>, vector<1x2x128xbf16>
    %161 = vector.shape_cast %160 : vector<1x2x128xbf16> to vector<2x128xbf16>
    %162 = arith.extf %161 : vector<2x128xbf16> to vector<2x128xf32>
    %163 = vector.extract_strided_slice %158 {offsets = [0, 0], sizes = [2, 128], strides = [1, 1]} : vector<2x256xf32> to vector<2x128xf32>
    %164 = arith.addf %162, %163 : vector<2x128xf32>
    %165 = arith.index_cast %c0_i32_70 : i32 to index
    %c0_74 = arith.constant 0 : index
    %c0_75 = arith.constant 0 : index
    %166 = vector.load %arg15[%165, %c0_74, %c0_75] : memref<8x2x128xbf16, #tpu.memory_space<vmem>>, vector<1x2x128xbf16>
    %167 = vector.shape_cast %166 : vector<1x2x128xbf16> to vector<2x128xbf16>
    %168 = arith.extf %167 : vector<2x128xbf16> to vector<2x128xf32>
    %169 = vector.extract_strided_slice %158 {offsets = [0, 128], sizes = [2, 128], strides = [1, 1]} : vector<2x256xf32> to vector<2x128xf32>
    %170 = arith.addf %168, %169 : vector<2x128xf32>
    %171 = vector.extract_strided_slice %164 {offsets = [0, 0], sizes = [2, 96], strides = [1, 1]} : vector<2x128xf32> to vector<2x96xf32>
    %172 = arith.negf %171 : vector<2x96xf32>
    %173 = math.exp %172 : vector<2x96xf32>
    %cst_76 = arith.constant 1.000000e+00 : f32
    %174 = vector.broadcast %cst_76 : f32 to vector<2x96xf32>
    %175 = arith.addf %174, %173 : vector<2x96xf32>
    %176 = arith.divf %174, %175 : vector<2x96xf32>
    %177 = vector.extract_strided_slice %164 {offsets = [0, 96], sizes = [2, 32], strides = [1, 1]} : vector<2x128xf32> to vector<2x32xf32>
    %178 = math.tanh %177 : vector<2x32xf32>
    %179 = vector.extract_strided_slice %176 {offsets = [0, 32], sizes = [2, 32], strides = [1, 1]} : vector<2x96xf32> to vector<2x32xf32>
    %180 = arith.mulf %179, %156 : vector<2x32xf32>
    %181 = vector.extract_strided_slice %176 {offsets = [0, 0], sizes = [2, 32], strides = [1, 1]} : vector<2x96xf32> to vector<2x32xf32>
    %182 = arith.mulf %181, %178 : vector<2x32xf32>
    %183 = arith.addf %180, %182 : vector<2x32xf32>
    %184 = vector.extract_strided_slice %176 {offsets = [0, 64], sizes = [2, 32], strides = [1, 1]} : vector<2x96xf32> to vector<2x32xf32>
    %185 = math.tanh %183 : vector<2x32xf32>
    %186 = arith.mulf %184, %185 : vector<2x32xf32>
    %187 = vector.extract_strided_slice %170 {offsets = [0, 0], sizes = [2, 96], strides = [1, 1]} : vector<2x128xf32> to vector<2x96xf32>
    %188 = arith.negf %187 : vector<2x96xf32>
    %189 = math.exp %188 : vector<2x96xf32>
    %cst_77 = arith.constant 1.000000e+00 : f32
    %190 = vector.broadcast %cst_77 : f32 to vector<2x96xf32>
    %191 = arith.addf %190, %189 : vector<2x96xf32>
    %192 = arith.divf %190, %191 : vector<2x96xf32>
    %193 = vector.extract_strided_slice %170 {offsets = [0, 96], sizes = [2, 32], strides = [1, 1]} : vector<2x128xf32> to vector<2x32xf32>
    %194 = math.tanh %193 : vector<2x32xf32>
    %195 = vector.extract_strided_slice %192 {offsets = [0, 32], sizes = [2, 32], strides = [1, 1]} : vector<2x96xf32> to vector<2x32xf32>
    %196 = arith.mulf %195, %156 : vector<2x32xf32>
    %197 = vector.extract_strided_slice %192 {offsets = [0, 0], sizes = [2, 32], strides = [1, 1]} : vector<2x96xf32> to vector<2x32xf32>
    %198 = arith.mulf %197, %194 : vector<2x32xf32>
    %199 = arith.addf %196, %198 : vector<2x32xf32>
    %200 = vector.extract_strided_slice %192 {offsets = [0, 64], sizes = [2, 32], strides = [1, 1]} : vector<2x96xf32> to vector<2x32xf32>
    %201 = math.tanh %199 : vector<2x32xf32>
    %202 = arith.mulf %200, %201 : vector<2x32xf32>
    %203 = arith.index_cast %c0_i32_70 : i32 to index
    %c0_78 = arith.constant 0 : index
    %c0_79 = arith.constant 0 : index
    %204 = vector.load %arg16[%203, %c0_78, %c0_79] : memref<8x2x32xf32, #tpu.memory_space<vmem>>, vector<1x2x32xf32>
    %205 = vector.shape_cast %204 : vector<1x2x32xf32> to vector<2x32xf32>
    %206 = vector.shape_cast %186 : vector<2x32xf32> to vector<1x2x32xf32>
    tpu.vector_store %arg16[%203, %c0_78, %c0_79], %206 {strides = array<i32>} : memref<8x2x32xf32, #tpu.memory_space<vmem>>, vector<1x2x32xf32>,
    %c7_i32_80 = arith.constant 7 : i32
    %207 = arith.subi %c7_i32_80, %c0_i32_70 : i32
    %208 = arith.index_cast %207 : i32 to index
    %c0_81 = arith.constant 0 : index
    %c0_82 = arith.constant 0 : index
    %209 = vector.load %arg17[%208, %c0_81, %c0_82] : memref<8x2x32xf32, #tpu.memory_space<vmem>>, vector<1x2x32xf32>
    %210 = vector.shape_cast %209 : vector<1x2x32xf32> to vector<2x32xf32>
    %211 = vector.shape_cast %202 : vector<2x32xf32> to vector<1x2x32xf32>
    tpu.vector_store %arg17[%208, %c0_81, %c0_82], %211 {strides = array<i32>} : memref<8x2x32xf32, #tpu.memory_space<vmem>>, vector<1x2x32xf32>,
    %212 = tpu.concatenate %186, %202 in 1 : vector<2x32xf32>, vector<2x32xf32> -> vector<2x64xf32>
    %c1_i32_83 = arith.constant 1 : i32
    %213 = arith.truncf %212 : vector<2x64xf32> to vector<2x64xbf16>
    %cst_84 = arith.constant dense<0.000000e+00> : vector<2x256xf32>
    %214 = tpu.matmul %213, %154, %cst_84 {dimension_numbers = #tpu.dot_dimension_numbers<[1], [0], [0], [1], [0, 0, 1, 1], [], []>} : vector<2x64xbf16>, vector<64x256xbf16>, vector<2x256xf32> -> vector<2x256xf32>
    %215 = arith.index_cast %c1_i32_83 : i32 to index
    %c0_85 = arith.constant 0 : index
    %c0_86 = arith.constant 0 : index
    %216 = vector.load %arg14[%215, %c0_85, %c0_86] : memref<8x2x128xbf16, #tpu.memory_space<vmem>>, vector<1x2x128xbf16>
    %217 = vector.shape_cast %216 : vector<1x2x128xbf16> to vector<2x128xbf16>
    %218 = arith.extf %217 : vector<2x128xbf16> to vector<2x128xf32>
    %219 = vector.extract_strided_slice %214 {offsets = [0, 0], sizes = [2, 128], strides = [1, 1]} : vector<2x256xf32> to vector<2x128xf32>
    %220 = arith.addf %218, %219 : vector<2x128xf32>
    %221 = arith.index_cast %c1_i32_83 : i32 to index
    %c0_87 = arith.constant 0 : index
    %c0_88 = arith.constant 0 : index
    %222 = vector.load %arg15[%221, %c0_87, %c0_88] : memref<8x2x128xbf16, #tpu.memory_space<vmem>>, vector<1x2x128xbf16>
    %223 = vector.shape_cast %222 : vector<1x2x128xbf16> to vector<2x128xbf16>
    %224 = arith.extf %223 : vector<2x128xbf16> to vector<2x128xf32>
    %225 = vector.extract_strided_slice %214 {offsets = [0, 128], sizes = [2, 128], strides = [1, 1]} : vector<2x256xf32> to vector<2x128xf32>
    %226 = arith.addf %224, %225 : vector<2x128xf32>
    %227 = vector.extract_strided_slice %220 {offsets = [0, 0], sizes = [2, 96], strides = [1, 1]} : vector<2x128xf32> to vector<2x96xf32>
    %228 = arith.negf %227 : vector<2x96xf32>
    %229 = math.exp %228 : vector<2x96xf32>
    %cst_89 = arith.constant 1.000000e+00 : f32
    %230 = vector.broadcast %cst_89 : f32 to vector<2x96xf32>
    %231 = arith.addf %230, %229 : vector<2x96xf32>
    %232 = arith.divf %230, %231 : vector<2x96xf32>
    %233 = vector.extract_strided_slice %220 {offsets = [0, 96], sizes = [2, 32], strides = [1, 1]} : vector<2x128xf32> to vector<2x32xf32>
    %234 = math.tanh %233 : vector<2x32xf32>
    %235 = vector.extract_strided_slice %232 {offsets = [0, 32], sizes = [2, 32], strides = [1, 1]} : vector<2x96xf32> to vector<2x32xf32>
    %236 = arith.mulf %235, %183 : vector<2x32xf32>
    %237 = vector.extract_strided_slice %232 {offsets = [0, 0], sizes = [2, 32], strides = [1, 1]} : vector<2x96xf32> to vector<2x32xf32>
    %238 = arith.mulf %237, %234 : vector<2x32xf32>
    %239 = arith.addf %236, %238 : vector<2x32xf32>
    %240 = vector.extract_strided_slice %232 {offsets = [0, 64], sizes = [2, 32], strides = [1, 1]} : vector<2x96xf32> to vector<2x32xf32>
    %241 = math.tanh %239 : vector<2x32xf32>
    %242 = arith.mulf %240, %241 : vector<2x32xf32>
    %243 = vector.extract_strided_slice %226 {offsets = [0, 0], sizes = [2, 96], strides = [1, 1]} : vector<2x128xf32> to vector<2x96xf32>
    %244 = arith.negf %243 : vector<2x96xf32>
    %245 = math.exp %244 : vector<2x96xf32>
    %cst_90 = arith.constant 1.000000e+00 : f32
    %246 = vector.broadcast %cst_90 : f32 to vector<2x96xf32>
    %247 = arith.addf %246, %245 : vector<2x96xf32>
    %248 = arith.divf %246, %247 : vector<2x96xf32>
    %249 = vector.extract_strided_slice %226 {offsets = [0, 96], sizes = [2, 32], strides = [1, 1]} : vector<2x128xf32> to vector<2x32xf32>
    %250 = math.tanh %249 : vector<2x32xf32>
    %251 = vector.extract_strided_slice %248 {offsets = [0, 32], sizes = [2, 32], strides = [1, 1]} : vector<2x96xf32> to vector<2x32xf32>
    %252 = arith.mulf %251, %199 : vector<2x32xf32>
    %253 = vector.extract_strided_slice %248 {offsets = [0, 0], sizes = [2, 32], strides = [1, 1]} : vector<2x96xf32> to vector<2x32xf32>
    %254 = arith.mulf %253, %250 : vector<2x32xf32>
    %255 = arith.addf %252, %254 : vector<2x32xf32>
    %256 = vector.extract_strided_slice %248 {offsets = [0, 64], sizes = [2, 32], strides = [1, 1]} : vector<2x96xf32> to vector<2x32xf32>
    %257 = math.tanh %255 : vector<2x32xf32>
    %258 = arith.mulf %256, %257 : vector<2x32xf32>
    %259 = arith.index_cast %c1_i32_83 : i32 to index
    %c0_91 = arith.constant 0 : index
    %c0_92 = arith.constant 0 : index
    %260 = vector.load %arg16[%259, %c0_91, %c0_92] : memref<8x2x32xf32, #tpu.memory_space<vmem>>, vector<1x2x32xf32>
    %261 = vector.shape_cast %260 : vector<1x2x32xf32> to vector<2x32xf32>
    %262 = vector.shape_cast %242 : vector<2x32xf32> to vector<1x2x32xf32>
    tpu.vector_store %arg16[%259, %c0_91, %c0_92], %262 {strides = array<i32>} : memref<8x2x32xf32, #tpu.memory_space<vmem>>, vector<1x2x32xf32>,
    %c7_i32_93 = arith.constant 7 : i32
    %263 = arith.subi %c7_i32_93, %c1_i32_83 : i32
    %264 = arith.index_cast %263 : i32 to index
    %c0_94 = arith.constant 0 : index
    %c0_95 = arith.constant 0 : index
    %265 = vector.load %arg17[%264, %c0_94, %c0_95] : memref<8x2x32xf32, #tpu.memory_space<vmem>>, vector<1x2x32xf32>
    %266 = vector.shape_cast %265 : vector<1x2x32xf32> to vector<2x32xf32>
    %267 = vector.shape_cast %258 : vector<2x32xf32> to vector<1x2x32xf32>
    tpu.vector_store %arg17[%264, %c0_94, %c0_95], %267 {strides = array<i32>} : memref<8x2x32xf32, #tpu.memory_space<vmem>>, vector<1x2x32xf32>,
    %268 = tpu.concatenate %242, %258 in 1 : vector<2x32xf32>, vector<2x32xf32> -> vector<2x64xf32>
    %c2_i32_96 = arith.constant 2 : i32
    %269 = arith.truncf %268 : vector<2x64xf32> to vector<2x64xbf16>
    %cst_97 = arith.constant dense<0.000000e+00> : vector<2x256xf32>
    %270 = tpu.matmul %269, %154, %cst_97 {dimension_numbers = #tpu.dot_dimension_numbers<[1], [0], [0], [1], [0, 0, 1, 1], [], []>} : vector<2x64xbf16>, vector<64x256xbf16>, vector<2x256xf32> -> vector<2x256xf32>
    %271 = arith.index_cast %c2_i32_96 : i32 to index
    %c0_98 = arith.constant 0 : index
    %c0_99 = arith.constant 0 : index
    %272 = vector.load %arg14[%271, %c0_98, %c0_99] : memref<8x2x128xbf16, #tpu.memory_space<vmem>>, vector<1x2x128xbf16>
    %273 = vector.shape_cast %272 : vector<1x2x128xbf16> to vector<2x128xbf16>
    %274 = arith.extf %273 : vector<2x128xbf16> to vector<2x128xf32>
    %275 = vector.extract_strided_slice %270 {offsets = [0, 0], sizes = [2, 128], strides = [1, 1]} : vector<2x256xf32> to vector<2x128xf32>
    %276 = arith.addf %274, %275 : vector<2x128xf32>
    %277 = arith.index_cast %c2_i32_96 : i32 to index
    %c0_100 = arith.constant 0 : index
    %c0_101 = arith.constant 0 : index
    %278 = vector.load %arg15[%277, %c0_100, %c0_101] : memref<8x2x128xbf16, #tpu.memory_space<vmem>>, vector<1x2x128xbf16>
    %279 = vector.shape_cast %278 : vector<1x2x128xbf16> to vector<2x128xbf16>
    %280 = arith.extf %279 : vector<2x128xbf16> to vector<2x128xf32>
    %281 = vector.extract_strided_slice %270 {offsets = [0, 128], sizes = [2, 128], strides = [1, 1]} : vector<2x256xf32> to vector<2x128xf32>
    %282 = arith.addf %280, %281 : vector<2x128xf32>
    %283 = vector.extract_strided_slice %276 {offsets = [0, 0], sizes = [2, 96], strides = [1, 1]} : vector<2x128xf32> to vector<2x96xf32>
    %284 = arith.negf %283 : vector<2x96xf32>
    %285 = math.exp %284 : vector<2x96xf32>
    %cst_102 = arith.constant 1.000000e+00 : f32
    %286 = vector.broadcast %cst_102 : f32 to vector<2x96xf32>
    %287 = arith.addf %286, %285 : vector<2x96xf32>
    %288 = arith.divf %286, %287 : vector<2x96xf32>
    %289 = vector.extract_strided_slice %276 {offsets = [0, 96], sizes = [2, 32], strides = [1, 1]} : vector<2x128xf32> to vector<2x32xf32>
    %290 = math.tanh %289 : vector<2x32xf32>
    %291 = vector.extract_strided_slice %288 {offsets = [0, 32], sizes = [2, 32], strides = [1, 1]} : vector<2x96xf32> to vector<2x32xf32>
    %292 = arith.mulf %291, %239 : vector<2x32xf32>
    %293 = vector.extract_strided_slice %288 {offsets = [0, 0], sizes = [2, 32], strides = [1, 1]} : vector<2x96xf32> to vector<2x32xf32>
    %294 = arith.mulf %293, %290 : vector<2x32xf32>
    %295 = arith.addf %292, %294 : vector<2x32xf32>
    %296 = vector.extract_strided_slice %288 {offsets = [0, 64], sizes = [2, 32], strides = [1, 1]} : vector<2x96xf32> to vector<2x32xf32>
    %297 = math.tanh %295 : vector<2x32xf32>
    %298 = arith.mulf %296, %297 : vector<2x32xf32>
    %299 = vector.extract_strided_slice %282 {offsets = [0, 0], sizes = [2, 96], strides = [1, 1]} : vector<2x128xf32> to vector<2x96xf32>
    %300 = arith.negf %299 : vector<2x96xf32>
    %301 = math.exp %300 : vector<2x96xf32>
    %cst_103 = arith.constant 1.000000e+00 : f32
    %302 = vector.broadcast %cst_103 : f32 to vector<2x96xf32>
    %303 = arith.addf %302, %301 : vector<2x96xf32>
    %304 = arith.divf %302, %303 : vector<2x96xf32>
    %305 = vector.extract_strided_slice %282 {offsets = [0, 96], sizes = [2, 32], strides = [1, 1]} : vector<2x128xf32> to vector<2x32xf32>
    %306 = math.tanh %305 : vector<2x32xf32>
    %307 = vector.extract_strided_slice %304 {offsets = [0, 32], sizes = [2, 32], strides = [1, 1]} : vector<2x96xf32> to vector<2x32xf32>
    %308 = arith.mulf %307, %255 : vector<2x32xf32>
    %309 = vector.extract_strided_slice %304 {offsets = [0, 0], sizes = [2, 32], strides = [1, 1]} : vector<2x96xf32> to vector<2x32xf32>
    %310 = arith.mulf %309, %306 : vector<2x32xf32>
    %311 = arith.addf %308, %310 : vector<2x32xf32>
    %312 = vector.extract_strided_slice %304 {offsets = [0, 64], sizes = [2, 32], strides = [1, 1]} : vector<2x96xf32> to vector<2x32xf32>
    %313 = math.tanh %311 : vector<2x32xf32>
    %314 = arith.mulf %312, %313 : vector<2x32xf32>
    %315 = arith.index_cast %c2_i32_96 : i32 to index
    %c0_104 = arith.constant 0 : index
    %c0_105 = arith.constant 0 : index
    %316 = vector.load %arg16[%315, %c0_104, %c0_105] : memref<8x2x32xf32, #tpu.memory_space<vmem>>, vector<1x2x32xf32>
    %317 = vector.shape_cast %316 : vector<1x2x32xf32> to vector<2x32xf32>
    %318 = vector.shape_cast %298 : vector<2x32xf32> to vector<1x2x32xf32>
    tpu.vector_store %arg16[%315, %c0_104, %c0_105], %318 {strides = array<i32>} : memref<8x2x32xf32, #tpu.memory_space<vmem>>, vector<1x2x32xf32>,
    %c7_i32_106 = arith.constant 7 : i32
    %319 = arith.subi %c7_i32_106, %c2_i32_96 : i32
    %320 = arith.index_cast %319 : i32 to index
    %c0_107 = arith.constant 0 : index
    %c0_108 = arith.constant 0 : index
    %321 = vector.load %arg17[%320, %c0_107, %c0_108] : memref<8x2x32xf32, #tpu.memory_space<vmem>>, vector<1x2x32xf32>
    %322 = vector.shape_cast %321 : vector<1x2x32xf32> to vector<2x32xf32>
    %323 = vector.shape_cast %314 : vector<2x32xf32> to vector<1x2x32xf32>
    tpu.vector_store %arg17[%320, %c0_107, %c0_108], %323 {strides = array<i32>} : memref<8x2x32xf32, #tpu.memory_space<vmem>>, vector<1x2x32xf32>,
    %324 = tpu.concatenate %298, %314 in 1 : vector<2x32xf32>, vector<2x32xf32> -> vector<2x64xf32>
    %c3_i32_109 = arith.constant 3 : i32
    %325 = arith.truncf %324 : vector<2x64xf32> to vector<2x64xbf16>
    %cst_110 = arith.constant dense<0.000000e+00> : vector<2x256xf32>
    %326 = tpu.matmul %325, %154, %cst_110 {dimension_numbers = #tpu.dot_dimension_numbers<[1], [0], [0], [1], [0, 0, 1, 1], [], []>} : vector<2x64xbf16>, vector<64x256xbf16>, vector<2x256xf32> -> vector<2x256xf32>
    %327 = arith.index_cast %c3_i32_109 : i32 to index
    %c0_111 = arith.constant 0 : index
    %c0_112 = arith.constant 0 : index
    %328 = vector.load %arg14[%327, %c0_111, %c0_112] : memref<8x2x128xbf16, #tpu.memory_space<vmem>>, vector<1x2x128xbf16>
    %329 = vector.shape_cast %328 : vector<1x2x128xbf16> to vector<2x128xbf16>
    %330 = arith.extf %329 : vector<2x128xbf16> to vector<2x128xf32>
    %331 = vector.extract_strided_slice %326 {offsets = [0, 0], sizes = [2, 128], strides = [1, 1]} : vector<2x256xf32> to vector<2x128xf32>
    %332 = arith.addf %330, %331 : vector<2x128xf32>
    %333 = arith.index_cast %c3_i32_109 : i32 to index
    %c0_113 = arith.constant 0 : index
    %c0_114 = arith.constant 0 : index
    %334 = vector.load %arg15[%333, %c0_113, %c0_114] : memref<8x2x128xbf16, #tpu.memory_space<vmem>>, vector<1x2x128xbf16>
    %335 = vector.shape_cast %334 : vector<1x2x128xbf16> to vector<2x128xbf16>
    %336 = arith.extf %335 : vector<2x128xbf16> to vector<2x128xf32>
    %337 = vector.extract_strided_slice %326 {offsets = [0, 128], sizes = [2, 128], strides = [1, 1]} : vector<2x256xf32> to vector<2x128xf32>
    %338 = arith.addf %336, %337 : vector<2x128xf32>
    %339 = vector.extract_strided_slice %332 {offsets = [0, 0], sizes = [2, 96], strides = [1, 1]} : vector<2x128xf32> to vector<2x96xf32>
    %340 = arith.negf %339 : vector<2x96xf32>
    %341 = math.exp %340 : vector<2x96xf32>
    %cst_115 = arith.constant 1.000000e+00 : f32
    %342 = vector.broadcast %cst_115 : f32 to vector<2x96xf32>
    %343 = arith.addf %342, %341 : vector<2x96xf32>
    %344 = arith.divf %342, %343 : vector<2x96xf32>
    %345 = vector.extract_strided_slice %332 {offsets = [0, 96], sizes = [2, 32], strides = [1, 1]} : vector<2x128xf32> to vector<2x32xf32>
    %346 = math.tanh %345 : vector<2x32xf32>
    %347 = vector.extract_strided_slice %344 {offsets = [0, 32], sizes = [2, 32], strides = [1, 1]} : vector<2x96xf32> to vector<2x32xf32>
    %348 = arith.mulf %347, %295 : vector<2x32xf32>
    %349 = vector.extract_strided_slice %344 {offsets = [0, 0], sizes = [2, 32], strides = [1, 1]} : vector<2x96xf32> to vector<2x32xf32>
    %350 = arith.mulf %349, %346 : vector<2x32xf32>
    %351 = arith.addf %348, %350 : vector<2x32xf32>
    %352 = vector.extract_strided_slice %344 {offsets = [0, 64], sizes = [2, 32], strides = [1, 1]} : vector<2x96xf32> to vector<2x32xf32>
    %353 = math.tanh %351 : vector<2x32xf32>
    %354 = arith.mulf %352, %353 : vector<2x32xf32>
    %355 = vector.extract_strided_slice %338 {offsets = [0, 0], sizes = [2, 96], strides = [1, 1]} : vector<2x128xf32> to vector<2x96xf32>
    %356 = arith.negf %355 : vector<2x96xf32>
    %357 = math.exp %356 : vector<2x96xf32>
    %cst_116 = arith.constant 1.000000e+00 : f32
    %358 = vector.broadcast %cst_116 : f32 to vector<2x96xf32>
    %359 = arith.addf %358, %357 : vector<2x96xf32>
    %360 = arith.divf %358, %359 : vector<2x96xf32>
    %361 = vector.extract_strided_slice %338 {offsets = [0, 96], sizes = [2, 32], strides = [1, 1]} : vector<2x128xf32> to vector<2x32xf32>
    %362 = math.tanh %361 : vector<2x32xf32>
    %363 = vector.extract_strided_slice %360 {offsets = [0, 32], sizes = [2, 32], strides = [1, 1]} : vector<2x96xf32> to vector<2x32xf32>
    %364 = arith.mulf %363, %311 : vector<2x32xf32>
    %365 = vector.extract_strided_slice %360 {offsets = [0, 0], sizes = [2, 32], strides = [1, 1]} : vector<2x96xf32> to vector<2x32xf32>
    %366 = arith.mulf %365, %362 : vector<2x32xf32>
    %367 = arith.addf %364, %366 : vector<2x32xf32>
    %368 = vector.extract_strided_slice %360 {offsets = [0, 64], sizes = [2, 32], strides = [1, 1]} : vector<2x96xf32> to vector<2x32xf32>
    %369 = math.tanh %367 : vector<2x32xf32>
    %370 = arith.mulf %368, %369 : vector<2x32xf32>
    %371 = arith.index_cast %c3_i32_109 : i32 to index
    %c0_117 = arith.constant 0 : index
    %c0_118 = arith.constant 0 : index
    %372 = vector.load %arg16[%371, %c0_117, %c0_118] : memref<8x2x32xf32, #tpu.memory_space<vmem>>, vector<1x2x32xf32>
    %373 = vector.shape_cast %372 : vector<1x2x32xf32> to vector<2x32xf32>
    %374 = vector.shape_cast %354 : vector<2x32xf32> to vector<1x2x32xf32>
    tpu.vector_store %arg16[%371, %c0_117, %c0_118], %374 {strides = array<i32>} : memref<8x2x32xf32, #tpu.memory_space<vmem>>, vector<1x2x32xf32>,
    %c7_i32_119 = arith.constant 7 : i32
    %375 = arith.subi %c7_i32_119, %c3_i32_109 : i32
    %376 = arith.index_cast %375 : i32 to index
    %c0_120 = arith.constant 0 : index
    %c0_121 = arith.constant 0 : index
    %377 = vector.load %arg17[%376, %c0_120, %c0_121] : memref<8x2x32xf32, #tpu.memory_space<vmem>>, vector<1x2x32xf32>
    %378 = vector.shape_cast %377 : vector<1x2x32xf32> to vector<2x32xf32>
    %379 = vector.shape_cast %370 : vector<2x32xf32> to vector<1x2x32xf32>
    tpu.vector_store %arg17[%376, %c0_120, %c0_121], %379 {strides = array<i32>} : memref<8x2x32xf32, #tpu.memory_space<vmem>>, vector<1x2x32xf32>,
    %380 = tpu.concatenate %354, %370 in 1 : vector<2x32xf32>, vector<2x32xf32> -> vector<2x64xf32>
    %c4_i32_122 = arith.constant 4 : i32
    %381 = arith.truncf %380 : vector<2x64xf32> to vector<2x64xbf16>
    %cst_123 = arith.constant dense<0.000000e+00> : vector<2x256xf32>
    %382 = tpu.matmul %381, %154, %cst_123 {dimension_numbers = #tpu.dot_dimension_numbers<[1], [0], [0], [1], [0, 0, 1, 1], [], []>} : vector<2x64xbf16>, vector<64x256xbf16>, vector<2x256xf32> -> vector<2x256xf32>
    %383 = arith.index_cast %c4_i32_122 : i32 to index
    %c0_124 = arith.constant 0 : index
    %c0_125 = arith.constant 0 : index
    %384 = vector.load %arg14[%383, %c0_124, %c0_125] : memref<8x2x128xbf16, #tpu.memory_space<vmem>>, vector<1x2x128xbf16>
    %385 = vector.shape_cast %384 : vector<1x2x128xbf16> to vector<2x128xbf16>
    %386 = arith.extf %385 : vector<2x128xbf16> to vector<2x128xf32>
    %387 = vector.extract_strided_slice %382 {offsets = [0, 0], sizes = [2, 128], strides = [1, 1]} : vector<2x256xf32> to vector<2x128xf32>
    %388 = arith.addf %386, %387 : vector<2x128xf32>
    %389 = arith.index_cast %c4_i32_122 : i32 to index
    %c0_126 = arith.constant 0 : index
    %c0_127 = arith.constant 0 : index
    %390 = vector.load %arg15[%389, %c0_126, %c0_127] : memref<8x2x128xbf16, #tpu.memory_space<vmem>>, vector<1x2x128xbf16>
    %391 = vector.shape_cast %390 : vector<1x2x128xbf16> to vector<2x128xbf16>
    %392 = arith.extf %391 : vector<2x128xbf16> to vector<2x128xf32>
    %393 = vector.extract_strided_slice %382 {offsets = [0, 128], sizes = [2, 128], strides = [1, 1]} : vector<2x256xf32> to vector<2x128xf32>
    %394 = arith.addf %392, %393 : vector<2x128xf32>
    %395 = vector.extract_strided_slice %388 {offsets = [0, 0], sizes = [2, 96], strides = [1, 1]} : vector<2x128xf32> to vector<2x96xf32>
    %396 = arith.negf %395 : vector<2x96xf32>
    %397 = math.exp %396 : vector<2x96xf32>
    %cst_128 = arith.constant 1.000000e+00 : f32
    %398 = vector.broadcast %cst_128 : f32 to vector<2x96xf32>
    %399 = arith.addf %398, %397 : vector<2x96xf32>
    %400 = arith.divf %398, %399 : vector<2x96xf32>
    %401 = vector.extract_strided_slice %388 {offsets = [0, 96], sizes = [2, 32], strides = [1, 1]} : vector<2x128xf32> to vector<2x32xf32>
    %402 = math.tanh %401 : vector<2x32xf32>
    %403 = vector.extract_strided_slice %400 {offsets = [0, 32], sizes = [2, 32], strides = [1, 1]} : vector<2x96xf32> to vector<2x32xf32>
    %404 = arith.mulf %403, %351 : vector<2x32xf32>
    %405 = vector.extract_strided_slice %400 {offsets = [0, 0], sizes = [2, 32], strides = [1, 1]} : vector<2x96xf32> to vector<2x32xf32>
    %406 = arith.mulf %405, %402 : vector<2x32xf32>
    %407 = arith.addf %404, %406 : vector<2x32xf32>
    %408 = vector.extract_strided_slice %400 {offsets = [0, 64], sizes = [2, 32], strides = [1, 1]} : vector<2x96xf32> to vector<2x32xf32>
    %409 = math.tanh %407 : vector<2x32xf32>
    %410 = arith.mulf %408, %409 : vector<2x32xf32>
    %411 = vector.extract_strided_slice %394 {offsets = [0, 0], sizes = [2, 96], strides = [1, 1]} : vector<2x128xf32> to vector<2x96xf32>
    %412 = arith.negf %411 : vector<2x96xf32>
    %413 = math.exp %412 : vector<2x96xf32>
    %cst_129 = arith.constant 1.000000e+00 : f32
    %414 = vector.broadcast %cst_129 : f32 to vector<2x96xf32>
    %415 = arith.addf %414, %413 : vector<2x96xf32>
    %416 = arith.divf %414, %415 : vector<2x96xf32>
    %417 = vector.extract_strided_slice %394 {offsets = [0, 96], sizes = [2, 32], strides = [1, 1]} : vector<2x128xf32> to vector<2x32xf32>
    %418 = math.tanh %417 : vector<2x32xf32>
    %419 = vector.extract_strided_slice %416 {offsets = [0, 32], sizes = [2, 32], strides = [1, 1]} : vector<2x96xf32> to vector<2x32xf32>
    %420 = arith.mulf %419, %367 : vector<2x32xf32>
    %421 = vector.extract_strided_slice %416 {offsets = [0, 0], sizes = [2, 32], strides = [1, 1]} : vector<2x96xf32> to vector<2x32xf32>
    %422 = arith.mulf %421, %418 : vector<2x32xf32>
    %423 = arith.addf %420, %422 : vector<2x32xf32>
    %424 = vector.extract_strided_slice %416 {offsets = [0, 64], sizes = [2, 32], strides = [1, 1]} : vector<2x96xf32> to vector<2x32xf32>
    %425 = math.tanh %423 : vector<2x32xf32>
    %426 = arith.mulf %424, %425 : vector<2x32xf32>
    %427 = arith.index_cast %c4_i32_122 : i32 to index
    %c0_130 = arith.constant 0 : index
    %c0_131 = arith.constant 0 : index
    %428 = vector.load %arg16[%427, %c0_130, %c0_131] : memref<8x2x32xf32, #tpu.memory_space<vmem>>, vector<1x2x32xf32>
    %429 = vector.shape_cast %428 : vector<1x2x32xf32> to vector<2x32xf32>
    %430 = vector.shape_cast %410 : vector<2x32xf32> to vector<1x2x32xf32>
    tpu.vector_store %arg16[%427, %c0_130, %c0_131], %430 {strides = array<i32>} : memref<8x2x32xf32, #tpu.memory_space<vmem>>, vector<1x2x32xf32>,
    %c7_i32_132 = arith.constant 7 : i32
    %431 = arith.subi %c7_i32_132, %c4_i32_122 : i32
    %432 = arith.index_cast %431 : i32 to index
    %c0_133 = arith.constant 0 : index
    %c0_134 = arith.constant 0 : index
    %433 = vector.load %arg17[%432, %c0_133, %c0_134] : memref<8x2x32xf32, #tpu.memory_space<vmem>>, vector<1x2x32xf32>
    %434 = vector.shape_cast %433 : vector<1x2x32xf32> to vector<2x32xf32>
    %435 = vector.shape_cast %426 : vector<2x32xf32> to vector<1x2x32xf32>
    tpu.vector_store %arg17[%432, %c0_133, %c0_134], %435 {strides = array<i32>} : memref<8x2x32xf32, #tpu.memory_space<vmem>>, vector<1x2x32xf32>,
    %436 = tpu.concatenate %410, %426 in 1 : vector<2x32xf32>, vector<2x32xf32> -> vector<2x64xf32>
    %c5_i32_135 = arith.constant 5 : i32
    %437 = arith.truncf %436 : vector<2x64xf32> to vector<2x64xbf16>
    %cst_136 = arith.constant dense<0.000000e+00> : vector<2x256xf32>
    %438 = tpu.matmul %437, %154, %cst_136 {dimension_numbers = #tpu.dot_dimension_numbers<[1], [0], [0], [1], [0, 0, 1, 1], [], []>} : vector<2x64xbf16>, vector<64x256xbf16>, vector<2x256xf32> -> vector<2x256xf32>
    %439 = arith.index_cast %c5_i32_135 : i32 to index
    %c0_137 = arith.constant 0 : index
    %c0_138 = arith.constant 0 : index
    %440 = vector.load %arg14[%439, %c0_137, %c0_138] : memref<8x2x128xbf16, #tpu.memory_space<vmem>>, vector<1x2x128xbf16>
    %441 = vector.shape_cast %440 : vector<1x2x128xbf16> to vector<2x128xbf16>
    %442 = arith.extf %441 : vector<2x128xbf16> to vector<2x128xf32>
    %443 = vector.extract_strided_slice %438 {offsets = [0, 0], sizes = [2, 128], strides = [1, 1]} : vector<2x256xf32> to vector<2x128xf32>
    %444 = arith.addf %442, %443 : vector<2x128xf32>
    %445 = arith.index_cast %c5_i32_135 : i32 to index
    %c0_139 = arith.constant 0 : index
    %c0_140 = arith.constant 0 : index
    %446 = vector.load %arg15[%445, %c0_139, %c0_140] : memref<8x2x128xbf16, #tpu.memory_space<vmem>>, vector<1x2x128xbf16>
    %447 = vector.shape_cast %446 : vector<1x2x128xbf16> to vector<2x128xbf16>
    %448 = arith.extf %447 : vector<2x128xbf16> to vector<2x128xf32>
    %449 = vector.extract_strided_slice %438 {offsets = [0, 128], sizes = [2, 128], strides = [1, 1]} : vector<2x256xf32> to vector<2x128xf32>
    %450 = arith.addf %448, %449 : vector<2x128xf32>
    %451 = vector.extract_strided_slice %444 {offsets = [0, 0], sizes = [2, 96], strides = [1, 1]} : vector<2x128xf32> to vector<2x96xf32>
    %452 = arith.negf %451 : vector<2x96xf32>
    %453 = math.exp %452 : vector<2x96xf32>
    %cst_141 = arith.constant 1.000000e+00 : f32
    %454 = vector.broadcast %cst_141 : f32 to vector<2x96xf32>
    %455 = arith.addf %454, %453 : vector<2x96xf32>
    %456 = arith.divf %454, %455 : vector<2x96xf32>
    %457 = vector.extract_strided_slice %444 {offsets = [0, 96], sizes = [2, 32], strides = [1, 1]} : vector<2x128xf32> to vector<2x32xf32>
    %458 = math.tanh %457 : vector<2x32xf32>
    %459 = vector.extract_strided_slice %456 {offsets = [0, 32], sizes = [2, 32], strides = [1, 1]} : vector<2x96xf32> to vector<2x32xf32>
    %460 = arith.mulf %459, %407 : vector<2x32xf32>
    %461 = vector.extract_strided_slice %456 {offsets = [0, 0], sizes = [2, 32], strides = [1, 1]} : vector<2x96xf32> to vector<2x32xf32>
    %462 = arith.mulf %461, %458 : vector<2x32xf32>
    %463 = arith.addf %460, %462 : vector<2x32xf32>
    %464 = vector.extract_strided_slice %456 {offsets = [0, 64], sizes = [2, 32], strides = [1, 1]} : vector<2x96xf32> to vector<2x32xf32>
    %465 = math.tanh %463 : vector<2x32xf32>
    %466 = arith.mulf %464, %465 : vector<2x32xf32>
    %467 = vector.extract_strided_slice %450 {offsets = [0, 0], sizes = [2, 96], strides = [1, 1]} : vector<2x128xf32> to vector<2x96xf32>
    %468 = arith.negf %467 : vector<2x96xf32>
    %469 = math.exp %468 : vector<2x96xf32>
    %cst_142 = arith.constant 1.000000e+00 : f32
    %470 = vector.broadcast %cst_142 : f32 to vector<2x96xf32>
    %471 = arith.addf %470, %469 : vector<2x96xf32>
    %472 = arith.divf %470, %471 : vector<2x96xf32>
    %473 = vector.extract_strided_slice %450 {offsets = [0, 96], sizes = [2, 32], strides = [1, 1]} : vector<2x128xf32> to vector<2x32xf32>
    %474 = math.tanh %473 : vector<2x32xf32>
    %475 = vector.extract_strided_slice %472 {offsets = [0, 32], sizes = [2, 32], strides = [1, 1]} : vector<2x96xf32> to vector<2x32xf32>
    %476 = arith.mulf %475, %423 : vector<2x32xf32>
    %477 = vector.extract_strided_slice %472 {offsets = [0, 0], sizes = [2, 32], strides = [1, 1]} : vector<2x96xf32> to vector<2x32xf32>
    %478 = arith.mulf %477, %474 : vector<2x32xf32>
    %479 = arith.addf %476, %478 : vector<2x32xf32>
    %480 = vector.extract_strided_slice %472 {offsets = [0, 64], sizes = [2, 32], strides = [1, 1]} : vector<2x96xf32> to vector<2x32xf32>
    %481 = math.tanh %479 : vector<2x32xf32>
    %482 = arith.mulf %480, %481 : vector<2x32xf32>
    %483 = arith.index_cast %c5_i32_135 : i32 to index
    %c0_143 = arith.constant 0 : index
    %c0_144 = arith.constant 0 : index
    %484 = vector.load %arg16[%483, %c0_143, %c0_144] : memref<8x2x32xf32, #tpu.memory_space<vmem>>, vector<1x2x32xf32>
    %485 = vector.shape_cast %484 : vector<1x2x32xf32> to vector<2x32xf32>
    %486 = vector.shape_cast %466 : vector<2x32xf32> to vector<1x2x32xf32>
    tpu.vector_store %arg16[%483, %c0_143, %c0_144], %486 {strides = array<i32>} : memref<8x2x32xf32, #tpu.memory_space<vmem>>, vector<1x2x32xf32>,
    %c7_i32_145 = arith.constant 7 : i32
    %487 = arith.subi %c7_i32_145, %c5_i32_135 : i32
    %488 = arith.index_cast %487 : i32 to index
    %c0_146 = arith.constant 0 : index
    %c0_147 = arith.constant 0 : index
    %489 = vector.load %arg17[%488, %c0_146, %c0_147] : memref<8x2x32xf32, #tpu.memory_space<vmem>>, vector<1x2x32xf32>
    %490 = vector.shape_cast %489 : vector<1x2x32xf32> to vector<2x32xf32>
    %491 = vector.shape_cast %482 : vector<2x32xf32> to vector<1x2x32xf32>
    tpu.vector_store %arg17[%488, %c0_146, %c0_147], %491 {strides = array<i32>} : memref<8x2x32xf32, #tpu.memory_space<vmem>>, vector<1x2x32xf32>,
    %492 = tpu.concatenate %466, %482 in 1 : vector<2x32xf32>, vector<2x32xf32> -> vector<2x64xf32>
    %c6_i32_148 = arith.constant 6 : i32
    %493 = arith.truncf %492 : vector<2x64xf32> to vector<2x64xbf16>
    %cst_149 = arith.constant dense<0.000000e+00> : vector<2x256xf32>
    %494 = tpu.matmul %493, %154, %cst_149 {dimension_numbers = #tpu.dot_dimension_numbers<[1], [0], [0], [1], [0, 0, 1, 1], [], []>} : vector<2x64xbf16>, vector<64x256xbf16>, vector<2x256xf32> -> vector<2x256xf32>
    %495 = arith.index_cast %c6_i32_148 : i32 to index
    %c0_150 = arith.constant 0 : index
    %c0_151 = arith.constant 0 : index
    %496 = vector.load %arg14[%495, %c0_150, %c0_151] : memref<8x2x128xbf16, #tpu.memory_space<vmem>>, vector<1x2x128xbf16>
    %497 = vector.shape_cast %496 : vector<1x2x128xbf16> to vector<2x128xbf16>
    %498 = arith.extf %497 : vector<2x128xbf16> to vector<2x128xf32>
    %499 = vector.extract_strided_slice %494 {offsets = [0, 0], sizes = [2, 128], strides = [1, 1]} : vector<2x256xf32> to vector<2x128xf32>
    %500 = arith.addf %498, %499 : vector<2x128xf32>
    %501 = arith.index_cast %c6_i32_148 : i32 to index
    %c0_152 = arith.constant 0 : index
    %c0_153 = arith.constant 0 : index
    %502 = vector.load %arg15[%501, %c0_152, %c0_153] : memref<8x2x128xbf16, #tpu.memory_space<vmem>>, vector<1x2x128xbf16>
    %503 = vector.shape_cast %502 : vector<1x2x128xbf16> to vector<2x128xbf16>
    %504 = arith.extf %503 : vector<2x128xbf16> to vector<2x128xf32>
    %505 = vector.extract_strided_slice %494 {offsets = [0, 128], sizes = [2, 128], strides = [1, 1]} : vector<2x256xf32> to vector<2x128xf32>
    %506 = arith.addf %504, %505 : vector<2x128xf32>
    %507 = vector.extract_strided_slice %500 {offsets = [0, 0], sizes = [2, 96], strides = [1, 1]} : vector<2x128xf32> to vector<2x96xf32>
    %508 = arith.negf %507 : vector<2x96xf32>
    %509 = math.exp %508 : vector<2x96xf32>
    %cst_154 = arith.constant 1.000000e+00 : f32
    %510 = vector.broadcast %cst_154 : f32 to vector<2x96xf32>
    %511 = arith.addf %510, %509 : vector<2x96xf32>
    %512 = arith.divf %510, %511 : vector<2x96xf32>
    %513 = vector.extract_strided_slice %500 {offsets = [0, 96], sizes = [2, 32], strides = [1, 1]} : vector<2x128xf32> to vector<2x32xf32>
    %514 = math.tanh %513 : vector<2x32xf32>
    %515 = vector.extract_strided_slice %512 {offsets = [0, 32], sizes = [2, 32], strides = [1, 1]} : vector<2x96xf32> to vector<2x32xf32>
    %516 = arith.mulf %515, %463 : vector<2x32xf32>
    %517 = vector.extract_strided_slice %512 {offsets = [0, 0], sizes = [2, 32], strides = [1, 1]} : vector<2x96xf32> to vector<2x32xf32>
    %518 = arith.mulf %517, %514 : vector<2x32xf32>
    %519 = arith.addf %516, %518 : vector<2x32xf32>
    %520 = vector.extract_strided_slice %512 {offsets = [0, 64], sizes = [2, 32], strides = [1, 1]} : vector<2x96xf32> to vector<2x32xf32>
    %521 = math.tanh %519 : vector<2x32xf32>
    %522 = arith.mulf %520, %521 : vector<2x32xf32>
    %523 = vector.extract_strided_slice %506 {offsets = [0, 0], sizes = [2, 96], strides = [1, 1]} : vector<2x128xf32> to vector<2x96xf32>
    %524 = arith.negf %523 : vector<2x96xf32>
    %525 = math.exp %524 : vector<2x96xf32>
    %cst_155 = arith.constant 1.000000e+00 : f32
    %526 = vector.broadcast %cst_155 : f32 to vector<2x96xf32>
    %527 = arith.addf %526, %525 : vector<2x96xf32>
    %528 = arith.divf %526, %527 : vector<2x96xf32>
    %529 = vector.extract_strided_slice %506 {offsets = [0, 96], sizes = [2, 32], strides = [1, 1]} : vector<2x128xf32> to vector<2x32xf32>
    %530 = math.tanh %529 : vector<2x32xf32>
    %531 = vector.extract_strided_slice %528 {offsets = [0, 32], sizes = [2, 32], strides = [1, 1]} : vector<2x96xf32> to vector<2x32xf32>
    %532 = arith.mulf %531, %479 : vector<2x32xf32>
    %533 = vector.extract_strided_slice %528 {offsets = [0, 0], sizes = [2, 32], strides = [1, 1]} : vector<2x96xf32> to vector<2x32xf32>
    %534 = arith.mulf %533, %530 : vector<2x32xf32>
    %535 = arith.addf %532, %534 : vector<2x32xf32>
    %536 = vector.extract_strided_slice %528 {offsets = [0, 64], sizes = [2, 32], strides = [1, 1]} : vector<2x96xf32> to vector<2x32xf32>
    %537 = math.tanh %535 : vector<2x32xf32>
    %538 = arith.mulf %536, %537 : vector<2x32xf32>
    %539 = arith.index_cast %c6_i32_148 : i32 to index
    %c0_156 = arith.constant 0 : index
    %c0_157 = arith.constant 0 : index
    %540 = vector.load %arg16[%539, %c0_156, %c0_157] : memref<8x2x32xf32, #tpu.memory_space<vmem>>, vector<1x2x32xf32>
    %541 = vector.shape_cast %540 : vector<1x2x32xf32> to vector<2x32xf32>
    %542 = vector.shape_cast %522 : vector<2x32xf32> to vector<1x2x32xf32>
    tpu.vector_store %arg16[%539, %c0_156, %c0_157], %542 {strides = array<i32>} : memref<8x2x32xf32, #tpu.memory_space<vmem>>, vector<1x2x32xf32>,
    %c7_i32_158 = arith.constant 7 : i32
    %543 = arith.subi %c7_i32_158, %c6_i32_148 : i32
    %544 = arith.index_cast %543 : i32 to index
    %c0_159 = arith.constant 0 : index
    %c0_160 = arith.constant 0 : index
    %545 = vector.load %arg17[%544, %c0_159, %c0_160] : memref<8x2x32xf32, #tpu.memory_space<vmem>>, vector<1x2x32xf32>
    %546 = vector.shape_cast %545 : vector<1x2x32xf32> to vector<2x32xf32>
    %547 = vector.shape_cast %538 : vector<2x32xf32> to vector<1x2x32xf32>
    tpu.vector_store %arg17[%544, %c0_159, %c0_160], %547 {strides = array<i32>} : memref<8x2x32xf32, #tpu.memory_space<vmem>>, vector<1x2x32xf32>,
    %548 = tpu.concatenate %522, %538 in 1 : vector<2x32xf32>, vector<2x32xf32> -> vector<2x64xf32>
    %c7_i32_161 = arith.constant 7 : i32
    %549 = arith.truncf %548 : vector<2x64xf32> to vector<2x64xbf16>
    %cst_162 = arith.constant dense<0.000000e+00> : vector<2x256xf32>
    %550 = tpu.matmul %549, %154, %cst_162 {dimension_numbers = #tpu.dot_dimension_numbers<[1], [0], [0], [1], [0, 0, 1, 1], [], []>} : vector<2x64xbf16>, vector<64x256xbf16>, vector<2x256xf32> -> vector<2x256xf32>
    %551 = arith.index_cast %c7_i32_161 : i32 to index
    %c0_163 = arith.constant 0 : index
    %c0_164 = arith.constant 0 : index
    %552 = vector.load %arg14[%551, %c0_163, %c0_164] : memref<8x2x128xbf16, #tpu.memory_space<vmem>>, vector<1x2x128xbf16>
    %553 = vector.shape_cast %552 : vector<1x2x128xbf16> to vector<2x128xbf16>
    %554 = arith.extf %553 : vector<2x128xbf16> to vector<2x128xf32>
    %555 = vector.extract_strided_slice %550 {offsets = [0, 0], sizes = [2, 128], strides = [1, 1]} : vector<2x256xf32> to vector<2x128xf32>
    %556 = arith.addf %554, %555 : vector<2x128xf32>
    %557 = arith.index_cast %c7_i32_161 : i32 to index
    %c0_165 = arith.constant 0 : index
    %c0_166 = arith.constant 0 : index
    %558 = vector.load %arg15[%557, %c0_165, %c0_166] : memref<8x2x128xbf16, #tpu.memory_space<vmem>>, vector<1x2x128xbf16>
    %559 = vector.shape_cast %558 : vector<1x2x128xbf16> to vector<2x128xbf16>
    %560 = arith.extf %559 : vector<2x128xbf16> to vector<2x128xf32>
    %561 = vector.extract_strided_slice %550 {offsets = [0, 128], sizes = [2, 128], strides = [1, 1]} : vector<2x256xf32> to vector<2x128xf32>
    %562 = arith.addf %560, %561 : vector<2x128xf32>
    %563 = vector.extract_strided_slice %556 {offsets = [0, 0], sizes = [2, 96], strides = [1, 1]} : vector<2x128xf32> to vector<2x96xf32>
    %564 = arith.negf %563 : vector<2x96xf32>
    %565 = math.exp %564 : vector<2x96xf32>
    %cst_167 = arith.constant 1.000000e+00 : f32
    %566 = vector.broadcast %cst_167 : f32 to vector<2x96xf32>
    %567 = arith.addf %566, %565 : vector<2x96xf32>
    %568 = arith.divf %566, %567 : vector<2x96xf32>
    %569 = vector.extract_strided_slice %556 {offsets = [0, 96], sizes = [2, 32], strides = [1, 1]} : vector<2x128xf32> to vector<2x32xf32>
    %570 = math.tanh %569 : vector<2x32xf32>
    %571 = vector.extract_strided_slice %568 {offsets = [0, 32], sizes = [2, 32], strides = [1, 1]} : vector<2x96xf32> to vector<2x32xf32>
    %572 = arith.mulf %571, %519 : vector<2x32xf32>
    %573 = vector.extract_strided_slice %568 {offsets = [0, 0], sizes = [2, 32], strides = [1, 1]} : vector<2x96xf32> to vector<2x32xf32>
    %574 = arith.mulf %573, %570 : vector<2x32xf32>
    %575 = arith.addf %572, %574 : vector<2x32xf32>
    %576 = vector.extract_strided_slice %568 {offsets = [0, 64], sizes = [2, 32], strides = [1, 1]} : vector<2x96xf32> to vector<2x32xf32>
    %577 = math.tanh %575 : vector<2x32xf32>
    %578 = arith.mulf %576, %577 : vector<2x32xf32>
    %579 = vector.extract_strided_slice %562 {offsets = [0, 0], sizes = [2, 96], strides = [1, 1]} : vector<2x128xf32> to vector<2x96xf32>
    %580 = arith.negf %579 : vector<2x96xf32>
    %581 = math.exp %580 : vector<2x96xf32>
    %cst_168 = arith.constant 1.000000e+00 : f32
    %582 = vector.broadcast %cst_168 : f32 to vector<2x96xf32>
    %583 = arith.addf %582, %581 : vector<2x96xf32>
    %584 = arith.divf %582, %583 : vector<2x96xf32>
    %585 = vector.extract_strided_slice %562 {offsets = [0, 96], sizes = [2, 32], strides = [1, 1]} : vector<2x128xf32> to vector<2x32xf32>
    %586 = math.tanh %585 : vector<2x32xf32>
    %587 = vector.extract_strided_slice %584 {offsets = [0, 32], sizes = [2, 32], strides = [1, 1]} : vector<2x96xf32> to vector<2x32xf32>
    %588 = arith.mulf %587, %535 : vector<2x32xf32>
    %589 = vector.extract_strided_slice %584 {offsets = [0, 0], sizes = [2, 32], strides = [1, 1]} : vector<2x96xf32> to vector<2x32xf32>
    %590 = arith.mulf %589, %586 : vector<2x32xf32>
    %591 = arith.addf %588, %590 : vector<2x32xf32>
    %592 = vector.extract_strided_slice %584 {offsets = [0, 64], sizes = [2, 32], strides = [1, 1]} : vector<2x96xf32> to vector<2x32xf32>
    %593 = math.tanh %591 : vector<2x32xf32>
    %594 = arith.mulf %592, %593 : vector<2x32xf32>
    %595 = arith.index_cast %c7_i32_161 : i32 to index
    %c0_169 = arith.constant 0 : index
    %c0_170 = arith.constant 0 : index
    %596 = vector.load %arg16[%595, %c0_169, %c0_170] : memref<8x2x32xf32, #tpu.memory_space<vmem>>, vector<1x2x32xf32>
    %597 = vector.shape_cast %596 : vector<1x2x32xf32> to vector<2x32xf32>
    %598 = vector.shape_cast %578 : vector<2x32xf32> to vector<1x2x32xf32>
    tpu.vector_store %arg16[%595, %c0_169, %c0_170], %598 {strides = array<i32>} : memref<8x2x32xf32, #tpu.memory_space<vmem>>, vector<1x2x32xf32>,
    %c7_i32_171 = arith.constant 7 : i32
    %599 = arith.subi %c7_i32_171, %c7_i32_161 : i32
    %600 = arith.index_cast %599 : i32 to index
    %c0_172 = arith.constant 0 : index
    %c0_173 = arith.constant 0 : index
    %601 = vector.load %arg17[%600, %c0_172, %c0_173] : memref<8x2x32xf32, #tpu.memory_space<vmem>>, vector<1x2x32xf32>
    %602 = vector.shape_cast %601 : vector<1x2x32xf32> to vector<2x32xf32>
    %603 = vector.shape_cast %594 : vector<2x32xf32> to vector<1x2x32xf32>
    tpu.vector_store %arg17[%600, %c0_172, %c0_173], %603 {strides = array<i32>} : memref<8x2x32xf32, #tpu.memory_space<vmem>>, vector<1x2x32xf32>,
    %604 = tpu.concatenate %578, %594 in 1 : vector<2x32xf32>, vector<2x32xf32> -> vector<2x64xf32>
    %c8_i32_174 = arith.constant 8 : i32
    %c0_175 = arith.constant 0 : index
    %c0_176 = arith.constant 0 : index
    %c0_177 = arith.constant 0 : index
    %605 = vector.load %arg16[%c0_175, %c0_176, %c0_177] : memref<8x2x32xf32, #tpu.memory_space<vmem>>, vector<8x2x32xf32>
    %c0_178 = arith.constant 0 : index
    %c0_179 = arith.constant 0 : index
    %c0_180 = arith.constant 0 : index
    %606 = vector.load %arg17[%c0_178, %c0_179, %c0_180] : memref<8x2x32xf32, #tpu.memory_space<vmem>>, vector<8x2x32xf32>
    %c0_181 = arith.constant 0 : index
    %c0_182 = arith.constant 0 : index
    %607 = vector.load %arg5[%c0_181, %c0_182] : memref<1x32xf32, #tpu.memory_space<vmem>>, vector<1x32xf32>
    %608 = vector.shape_cast %607 : vector<1x32xf32> to vector<1x1x32xf32>
    %609 = vector.broadcast %608 : vector<1x1x32xf32> to vector<8x2x32xf32>
    %610 = arith.mulf %605, %609 : vector<8x2x32xf32>
    %cst_183 = arith.constant dense<0.000000e+00> : vector<8x2xf32>
    %611 = vector.multi_reduction <add>, %610, %cst_183 [2] : vector<8x2x32xf32> to vector<8x2xf32>
    %c0_184 = arith.constant 0 : index
    %c0_185 = arith.constant 0 : index
    %612 = vector.load %arg6[%c0_184, %c0_185] : memref<1x32xf32, #tpu.memory_space<vmem>>, vector<1x32xf32>
    %613 = vector.shape_cast %612 : vector<1x32xf32> to vector<1x1x32xf32>
    %614 = vector.broadcast %613 : vector<1x1x32xf32> to vector<8x2x32xf32>
    %615 = arith.mulf %606, %614 : vector<8x2x32xf32>
    %cst_186 = arith.constant dense<0.000000e+00> : vector<8x2xf32>
    %616 = vector.multi_reduction <add>, %615, %cst_186 [2] : vector<8x2x32xf32> to vector<8x2xf32>
    %617 = arith.addf %611, %616 : vector<8x2xf32>
    %c0_187 = arith.constant 0 : index
    %c0_188 = arith.constant 0 : index
    %618 = vector.load %arg7[%c0_187, %c0_188] : memref<1x1xf32, #tpu.memory_space<vmem>>, vector<1x1xf32>
    %619 = vector.broadcast %618 : vector<1x1xf32> to vector<8x2xf32>
    %620 = arith.addf %617, %619 : vector<8x2xf32>
    %cst_189 = arith.constant dense<0xFF800000> : vector<2xf32>
    %621 = vector.multi_reduction <maximumf>, %620, %cst_189 [0] : vector<8x2xf32> to vector<2xf32>
    %622 = vector.shape_cast %621 : vector<2xf32> to vector<1x2xf32>
    %623 = vector.broadcast %622 : vector<1x2xf32> to vector<8x2xf32>
    %624 = arith.subf %620, %623 : vector<8x2xf32>
    %625 = math.exp %624 : vector<8x2xf32>
    %626 = tpu.iota {dimensions = array<i32: 0>} : vector<8x8xi32>
    %627 = tpu.iota {dimensions = array<i32: 1>} : vector<8x8xi32>
    %628 = arith.subi %626, %627 : vector<8x8xi32>
    %629 = math.absi %628 : vector<8x8xi32>
    %c2_i32_190 = arith.constant 2 : i32
    %630 = vector.broadcast %c2_i32_190 : i32 to vector<8x8xi32>
    %631 = arith.cmpi sle, %629, %630 : vector<8x8xi32>
    %632 = arith.extui %631 : vector<8x8xi1> to vector<8x8xi32>
    %633 = arith.sitofp %632 : vector<8x8xi32> to vector<8x8xf32>
    %cst_191 = arith.constant dense<0.000000e+00> : vector<8x2xf32>
    %634 = tpu.matmul %633, %625, %cst_191 {dimension_numbers = #tpu.dot_dimension_numbers<[1], [0], [0], [1], [0, 0, 1, 1], [], []>} : vector<8x8xf32>, vector<8x2xf32>, vector<8x2xf32> -> vector<8x2xf32>
    %635 = tpu.reciprocal %634 {approx = true} : vector<8x2xf32> -> vector<8x2xf32>
    %cst_192 = arith.constant dense<0.000000e+00> : vector<8x2xf32>
    %636 = tpu.matmul %633, %635, %cst_192 {dimension_numbers = #tpu.dot_dimension_numbers<[1], [0], [0], [1], [0, 0, 1, 1], [], []>} : vector<8x8xf32>, vector<8x2xf32>, vector<8x2xf32> -> vector<8x2xf32>
    %637 = arith.mulf %625, %636 : vector<8x2xf32>
    %cst_193 = arith.constant 1.250000e-01 : f32
    %638 = vector.broadcast %cst_193 : f32 to vector<8x2xf32>
    %639 = arith.mulf %637, %638 : vector<8x2xf32>
    %640 = vector.shape_cast %639 : vector<8x2xf32> to vector<8x2x1xf32>
    %641 = vector.broadcast %640 : vector<8x2x1xf32> to vector<8x2x32xf32>
    %642 = arith.mulf %641, %605 : vector<8x2x32xf32>
    %cst_194 = arith.constant dense<0.000000e+00> : vector<2x32xf32>
    %643 = vector.multi_reduction <add>, %642, %cst_194 [0] : vector<8x2x32xf32> to vector<2x32xf32>
    %644 = vector.shape_cast %639 : vector<8x2xf32> to vector<8x2x1xf32>
    %645 = vector.broadcast %644 : vector<8x2x1xf32> to vector<8x2x32xf32>
    %646 = arith.mulf %645, %606 : vector<8x2x32xf32>
    %cst_195 = arith.constant dense<0.000000e+00> : vector<2x32xf32>
    %647 = vector.multi_reduction <add>, %646, %cst_195 [0] : vector<8x2x32xf32> to vector<2x32xf32>
    %648 = arith.truncf %643 : vector<2x32xf32> to vector<2x32xbf16>
    %c0_196 = arith.constant 0 : index
    %c0_197 = arith.constant 0 : index
    %649 = vector.load %arg8[%c0_196, %c0_197] : memref<32x32xbf16, #tpu.memory_space<vmem>>, vector<32x32xbf16>
    %cst_198 = arith.constant dense<0.000000e+00> : vector<2x32xf32>
    %650 = tpu.matmul %648, %649, %cst_198 {dimension_numbers = #tpu.dot_dimension_numbers<[1], [0], [0], [1], [0, 0, 1, 1], [], []>} : vector<2x32xbf16>, vector<32x32xbf16>, vector<2x32xf32> -> vector<2x32xf32>
    %651 = arith.truncf %647 : vector<2x32xf32> to vector<2x32xbf16>
    %c0_199 = arith.constant 0 : index
    %c0_200 = arith.constant 0 : index
    %652 = vector.load %arg9[%c0_199, %c0_200] : memref<32x32xbf16, #tpu.memory_space<vmem>>, vector<32x32xbf16>
    %cst_201 = arith.constant dense<0.000000e+00> : vector<2x32xf32>
    %653 = tpu.matmul %651, %652, %cst_201 {dimension_numbers = #tpu.dot_dimension_numbers<[1], [0], [0], [1], [0, 0, 1, 1], [], []>} : vector<2x32xbf16>, vector<32x32xbf16>, vector<2x32xf32> -> vector<2x32xf32>
    %654 = arith.addf %650, %653 : vector<2x32xf32>
    %c0_202 = arith.constant 0 : index
    %c0_203 = arith.constant 0 : index
    %655 = vector.load %arg10[%c0_202, %c0_203] : memref<1x32xf32, #tpu.memory_space<vmem>>, vector<1x32xf32>
    %656 = vector.broadcast %655 : vector<1x32xf32> to vector<2x32xf32>
    %657 = arith.addf %654, %656 : vector<2x32xf32>
    %cst_204 = arith.constant 0.000000e+00 : f32
    %658 = vector.broadcast %cst_204 : f32 to vector<2x32xf32>
    %659 = arith.maximumf %657, %658 : vector<2x32xf32>
    %660 = arith.truncf %659 : vector<2x32xf32> to vector<2x32xbf16>
    %c0_205 = arith.constant 0 : index
    %c0_206 = arith.constant 0 : index
    %661 = vector.load %arg11[%c0_205, %c0_206] : memref<32x128xbf16, #tpu.memory_space<vmem>>, vector<32x128xbf16>
    %cst_207 = arith.constant dense<0.000000e+00> : vector<2x128xf32>
    %662 = tpu.matmul %660, %661, %cst_207 {dimension_numbers = #tpu.dot_dimension_numbers<[1], [0], [0], [1], [0, 0, 1, 1], [], []>} : vector<2x32xbf16>, vector<32x128xbf16>, vector<2x128xf32> -> vector<2x128xf32>
    %c0_208 = arith.constant 0 : index
    %c0_209 = arith.constant 0 : index
    %663 = vector.load %arg12[%c0_208, %c0_209] : memref<1x128xf32, #tpu.memory_space<vmem>>, vector<1x128xf32>
    %664 = vector.broadcast %663 : vector<1x128xf32> to vector<2x128xf32>
    %665 = arith.addf %662, %664 : vector<2x128xf32>
    %c0_210 = arith.constant 0 : index
    %c0_211 = arith.constant 0 : index
    %666 = vector.load %arg13[%c0_210, %c0_211] : memref<2x128xf32, #tpu.memory_space<vmem>>, vector<2x128xf32>
    tpu.vector_store %arg13[%c0_210, %c0_211], %665 {strides = array<i32>} : memref<2x128xf32, #tpu.memory_space<vmem>>, vector<2x128xf32>,
    return
  }
  func.func @transform_0(%arg0: i32) -> (i32, i32, i32) {
    %c0_i32 = arith.constant 0 : i32
    %c0_i32_0 = arith.constant 0 : i32
    %c0_i32_1 = arith.constant 0 : i32
    return %c0_i32, %arg0, %c0_i32_0 : i32, i32, i32
  }
  func.func @transform_1(%arg0: i32) -> (i32, i32) {
    %c0_i32 = arith.constant 0 : i32
    %c0_i32_0 = arith.constant 0 : i32
    %c0_i32_1 = arith.constant 0 : i32
    return %c0_i32, %c0_i32_0 : i32, i32
  }
  func.func @transform_2(%arg0: i32) -> (i32, i32) {
    %c0_i32 = arith.constant 0 : i32
    %c0_i32_0 = arith.constant 0 : i32
    %c0_i32_1 = arith.constant 0 : i32
    return %c0_i32, %c0_i32_0 : i32, i32
  }
  func.func @transform_3(%arg0: i32) -> (i32, i32) {
    %c0_i32 = arith.constant 0 : i32
    %c0_i32_0 = arith.constant 0 : i32
    %c0_i32_1 = arith.constant 0 : i32
    return %c0_i32, %c0_i32_0 : i32, i32
  }
  func.func @transform_4(%arg0: i32) -> (i32, i32) {
    %c0_i32 = arith.constant 0 : i32
    %c0_i32_0 = arith.constant 0 : i32
    %c0_i32_1 = arith.constant 0 : i32
    return %c0_i32, %c0_i32_0 : i32, i32
  }
  func.func @transform_5(%arg0: i32) -> (i32, i32) {
    %c0_i32 = arith.constant 0 : i32
    %c0_i32_0 = arith.constant 0 : i32
    %c0_i32_1 = arith.constant 0 : i32
    return %c0_i32, %c0_i32_0 : i32, i32
  }
  func.func @transform_6(%arg0: i32) -> (i32, i32) {
    %c0_i32 = arith.constant 0 : i32
    %c0_i32_0 = arith.constant 0 : i32
    %c0_i32_1 = arith.constant 0 : i32
    return %c0_i32, %c0_i32_0 : i32, i32
  }
  func.func @transform_7(%arg0: i32) -> (i32, i32) {
    %c0_i32 = arith.constant 0 : i32
    %c0_i32_0 = arith.constant 0 : i32
    %c0_i32_1 = arith.constant 0 : i32
    return %c0_i32, %c0_i32_0 : i32, i32
  }
  func.func @transform_8(%arg0: i32) -> (i32, i32) {
    %c0_i32 = arith.constant 0 : i32
    %c0_i32_0 = arith.constant 0 : i32
    %c0_i32_1 = arith.constant 0 : i32
    return %c0_i32, %c0_i32_0 : i32, i32
  }
  func.func @transform_9(%arg0: i32) -> (i32, i32) {
    %c0_i32 = arith.constant 0 : i32
    %c0_i32_0 = arith.constant 0 : i32
    %c0_i32_1 = arith.constant 0 : i32
    return %c0_i32, %c0_i32_0 : i32, i32
  }
  func.func @transform_10(%arg0: i32) -> (i32, i32) {
    %c0_i32 = arith.constant 0 : i32
    %c0_i32_0 = arith.constant 0 : i32
    %c0_i32_1 = arith.constant 0 : i32
    return %c0_i32, %c0_i32_0 : i32, i32
  }
  func.func @transform_11(%arg0: i32) -> (i32, i32) {
    %c0_i32 = arith.constant 0 : i32
    %c0_i32_0 = arith.constant 0 : i32
    %c0_i32_1 = arith.constant 0 : i32
    return %c0_i32, %c0_i32_0 : i32, i32
  }
  func.func @transform_12(%arg0: i32) -> (i32, i32) {
    %c0_i32 = arith.constant 0 : i32
    %c0_i32_0 = arith.constant 0 : i32
    return %arg0, %c0_i32 : i32, i32
  }
}

</mosaic_0001>

<llo_original>
// kernel: tpu_custom_call.1
$region0: #{tpu_custom_call.1}
  #allocation0 [shape = 'u32[]', space=smem, size = 0x4, offset = 0x4, fixed_abs, tag = 'smem constant byte address 0x4 - core index']
  #allocation1 [shape = 'u32[144,128]{1,0:T(1,128)}', space=vmem, size = 0x12000, scoped, tag = 'internal scratch']
  #allocation2 [shape = 'bf16[8,2,128]{2,1,0:T(2,128)(2,1)}', space=vmem, size = 0x1000, scoped, tag = 'scratch operand']
  #allocation3 [shape = 'bf16[8,2,128]{2,1,0:T(2,128)(2,1)}', space=vmem, size = 0x1000, scoped, tag = 'scratch operand']
  #allocation4 [shape = 'f32[8,2,32]{2,1,0:T(2,128)}', space=vmem, size = 0x2000, scoped, tag = 'scratch operand']
  #allocation5 [shape = 'f32[8,2,32]{2,1,0:T(2,128)}', space=vmem, size = 0x2000, scoped, tag = 'scratch operand']
  #allocation6 [shape = 'f32[1,1]{1,0:T(1,128)S(1)}', space=vmem, size = 0x200, scoped, tag = 'scoped memory for tpu_custom_call.1']
  %s0 = inlined_call_operand.hbm [shape: bf16[8,2,64], index: 0, kind: input, shape index: {}]
  %s1 = inlined_call_operand.hbm [shape: bf16[64,256], index: 1, kind: input, shape index: {}]
  %s2 = inlined_call_operand.hbm [shape: bf16[64,256], index: 2, kind: input, shape index: {}]
  %s3 = inlined_call_operand.vmem [shape: f32[1,256], index: 3, kind: input, shape index: {}]
  %s4 = inlined_call_operand.hbm [shape: f32[1,32], index: 4, kind: input, shape index: {}]
  %s5 = inlined_call_operand.hbm [shape: f32[1,32], index: 5, kind: input, shape index: {}]
  %s6 = inlined_call_operand.<no memory space> [shape: f32[1,1], index: 6, kind: input, shape index: {}]
  %s7 = inlined_call_operand.vmem [shape: bf16[32,32], index: 7, kind: input, shape index: {}]
  %s8 = inlined_call_operand.hbm [shape: bf16[32,32], index: 8, kind: input, shape index: {}]
  %s9 = inlined_call_operand.hbm [shape: f32[1,32], index: 9, kind: input, shape index: {}]
  %s10 = inlined_call_operand.vmem [shape: bf16[32,128], index: 10, kind: input, shape index: {}]
  %s11 = inlined_call_operand.vmem [shape: f32[1,128], index: 11, kind: input, shape index: {}]
  %s12 = inlined_call_operand.hbm [shape: f32[2,128], index: 12, kind: output, shape index: {}]
  %s13 = sld [smem:[#allocation0]]
  $region86: #{tpu_custom_call.1} parent=0
    _
  %s15 = ssub.s32 1, %s13
  %s16 = scalar_select 0, %s15, %s13
  %v17 = vstv %s6
  %18 = vst [vmem:[#allocation6] sm:$0x1] %v17
  $region1: #{tpu_custom_call.1} parent=0
    #allocation7 [shape = 'u8[4096]{0}', space=vmem, size = 0x1000, scoped, tag = 'input window, operand 0, single buffered']
    #allocation8 [shape = 's32[1]{0}', space=sflag, size = 0x4, scoped, tag = 'scoped memory for tpu_custom_call.1']
    #allocation9 [shape = 's32[1]{0}', space=sflag, size = 0x4, scoped, tag = 'scoped memory for tpu_custom_call.1']
    #allocation10 [shape = 'u8[32768]{0}', space=vmem, size = 0x8000, scoped, tag = 'input window, operand 1, single buffered']
    #allocation11 [shape = 's32[1]{0}', space=sflag, size = 0x4, scoped, tag = 'scoped memory for tpu_custom_call.1']
    #allocation12 [shape = 'u8[32768]{0}', space=vmem, size = 0x8000, scoped, tag = 'input window, operand 2, single buffered']
    #allocation13 [shape = 'u8[512]{0}', space=vmem, size = 0x400, scoped, tag = 'input window, operand 4, single buffered']
    #allocation14 [shape = 's32[1]{0}', space=sflag, size = 0x4, scoped, tag = 'scoped memory for tpu_custom_call.1']
    #allocation15 [shape = 'u8[512]{0}', space=vmem, size = 0x400, scoped, tag = 'input window, operand 5, single buffered']
    #allocation16 [shape = 'u8[8192]{0}', space=vmem, size = 0x2000, scoped, tag = 'input window, operand 8, single buffered']
    #allocation17 [shape = 's32[1]{0}', space=sflag, size = 0x4, scoped, tag = 'scoped memory for tpu_custom_call.1']
    #allocation18 [shape = 'u8[512]{0}', space=vmem, size = 0x400, scoped, tag = 'input window, operand 9, single buffered']
    #allocation19 [shape = 'u8[1024]{0}', space=vmem, size = 0x400, scoped, tag = 'output window, operand 0, single buffered']
    %19 = vsyncpa [#allocation8], 0
    %20 = vsyncpa [#allocation11], 0
    %21 = vsyncpa [#allocation14], 0
    %22 = vsyncpa [#allocation17], 0
    %23 = vsyncpa [#allocation9], 0
    // Predicated region
    $region2: #{tpu_custom_call.1} parent=1 // pred_check
      _
    $region3: #{tpu_custom_call.1} parent=1 // pred_check_branch
      %25 = sbr.rel (0) target = $region5
    $region4: #{tpu_custom_call.1} parent=1 // pred_region
      %s27 = ssub.s32 128, 128
      %28 = vsyncadd [#allocation8], %s27
      %s29 = sshll.u32 [#allocation7], 4
      %s30 = int_to_ptr.vmem [resolvable:$true] %s29
      %35 = dma.hbm_to_vmem [thread:$0]  %s0, 128, %s30, [#allocation8], 16, 16, 1
    $region5: #{tpu_custom_call.1} parent=1 // pred_fallthru
      _
    // Predicated region
    $region6: #{tpu_custom_call.1} parent=1 // pred_check
      _
    $region7: #{tpu_custom_call.1} parent=1 // pred_check_branch
      %37 = sbr.rel (0) target = $region9
    $region8: #{tpu_custom_call.1} parent=1 // pred_region
      %s39 = ssub.s32 1024, 1024
      %40 = vsyncadd [#allocation11], %s39
      %s41 = sshll.u32 [#allocation10], 4
      %s42 = int_to_ptr.vmem [resolvable:$true] %s41
      %47 = dma.hbm_to_vmem [thread:$0]  %s1, 1024, %s42, [#allocation11], 128, 128, 8
    $region9: #{tpu_custom_call.1} parent=1 // pred_fallthru
      _
    // Predicated region
    $region10: #{tpu_custom_call.1} parent=1 // pred_check
      _
    $region11: #{tpu_custom_call.1} parent=1 // pred_check_branch
      %49 = sbr.rel (0) target = $region13
    $region12: #{tpu_custom_call.1} parent=1 // pred_region
      %s51 = ssub.s32 1024, 1024
      %52 = vsyncadd [#allocation11], %s51
      %s53 = sshll.u32 [#allocation12], 4
      %s54 = int_to_ptr.vmem [resolvable:$true] %s53
      %59 = dma.hbm_to_vmem [thread:$0]  %s2, 1024, %s54, [#allocation11], 128, 128, 8
    $region13: #{tpu_custom_call.1} parent=1 // pred_fallthru
      _
    // Predicated region
    $region14: #{tpu_custom_call.1} parent=1 // pred_check
      _
    $region15: #{tpu_custom_call.1} parent=1 // pred_check_branch
      %61 = sbr.rel (0) target = $region17
    $region16: #{tpu_custom_call.1} parent=1 // pred_region
      _
    $region17: #{tpu_custom_call.1} parent=1 // pred_fallthru
      _
    // Predicated region
    $region18: #{tpu_custom_call.1} parent=1 // pred_check
      _
    $region19: #{tpu_custom_call.1} parent=1 // pred_check_branch
      %63 = sbr.rel (0) target = $region21
    $region20: #{tpu_custom_call.1} parent=1 // pred_region
      %s65 = ssub.s32 16, 16
      %66 = vsyncadd [#allocation14], %s65
      %s68 = sshll.u32 [#allocation13], 4
      %s69 = int_to_ptr.vmem [resolvable:$true] %s68
      %71 = dma.hbm_to_vmem [thread:$0]  %s4, 16, %s69, [#allocation14]
    $region21: #{tpu_custom_call.1} parent=1 // pred_fallthru
      _
    // Predicated region
    $region22: #{tpu_custom_call.1} parent=1 // pred_check
      _
    $region23: #{tpu_custom_call.1} parent=1 // pred_check_branch
      %73 = sbr.rel (0) target = $region25
    $region24: #{tpu_custom_call.1} parent=1 // pred_region
      %s75 = ssub.s32 16, 16
      %76 = vsyncadd [#allocation14], %s75
      %s78 = sshll.u32 [#allocation15], 4
      %s79 = int_to_ptr.vmem [resolvable:$true] %s78
      %81 = dma.hbm_to_vmem [thread:$0]  %s5, 16, %s79, [#allocation14]
    $region25: #{tpu_custom_call.1} parent=1 // pred_fallthru
      _
    // Predicated region
    $region26: #{tpu_custom_call.1} parent=1 // pred_check
      _
    $region27: #{tpu_custom_call.1} parent=1 // pred_check_branch
      %83 = sbr.rel (0) target = $region29
    $region28: #{tpu_custom_call.1} parent=1 // pred_region
      _
    $region29: #{tpu_custom_call.1} parent=1 // pred_fallthru
      _
    // Predicated region
    $region30: #{tpu_custom_call.1} parent=1 // pred_check
      _
    $region31: #{tpu_custom_call.1} parent=1 // pred_check_branch
      %85 = sbr.rel (0) target = $region33
    $region32: #{tpu_custom_call.1} parent=1 // pred_region
      _
    $region33: #{tpu_custom_call.1} parent=1 // pred_fallthru
      _
    // Predicated region
    $region34: #{tpu_custom_call.1} parent=1 // pred_check
      _
    $region35: #{tpu_custom_call.1} parent=1 // pred_check_branch
      %87 = sbr.rel (0) target = $region37
    $region36: #{tpu_custom_call.1} parent=1 // pred_region
      %s89 = ssub.s32 256, 256
      %90 = vsyncadd [#allocation17], %s89
      %s91 = sshll.u32 [#allocation16], 4
      %s92 = int_to_ptr.vmem [resolvable:$true] %s91
      %97 = dma.hbm_to_vmem [thread:$0]  %s8, 256, %s92, [#allocation17], 64, 64, 4
    $region37: #{tpu_custom_call.1} parent=1 // pred_fallthru
      _
    // Predicated region
    $region38: #{tpu_custom_call.1} parent=1 // pred_check
      _
    $region39: #{tpu_custom_call.1} parent=1 // pred_check_branch
      %99 = sbr.rel (0) target = $region41
    $region40: #{tpu_custom_call.1} parent=1 // pred_region
      %s101 = ssub.s32 16, 16
      %102 = vsyncadd [#allocation17], %s101
      %s104 = sshll.u32 [#allocation18], 4
      %s105 = int_to_ptr.vmem [resolvable:$true] %s104
      %107 = dma.hbm_to_vmem [thread:$0]  %s9, 16, %s105, [#allocation17]
    $region41: #{tpu_custom_call.1} parent=1 // pred_fallthru
      _
    // Predicated region
    $region42: #{tpu_custom_call.1} parent=1 // pred_check
      _
    $region43: #{tpu_custom_call.1} parent=1 // pred_check_branch
      %109 = sbr.rel (0) target = $region45
    $region44: #{tpu_custom_call.1} parent=1 // pred_region
      _
    $region45: #{tpu_custom_call.1} parent=1 // pred_fallthru
      _
    // Predicated region
    $region46: #{tpu_custom_call.1} parent=1 // pred_check
      _
    $region47: #{tpu_custom_call.1} parent=1 // pred_check_branch
      %111 = sbr.rel (0) target = $region49
    $region48: #{tpu_custom_call.1} parent=1 // pred_region
      _
    $region49: #{tpu_custom_call.1} parent=1 // pred_fallthru
      _
    // Predicated region
    $region50: #{tpu_custom_call.1} parent=1 // pred_check
      _
    $region51: #{tpu_custom_call.1} parent=1 // pred_check_branch
      %113 = sbr.rel (0) target = $region53
    $region52: #{tpu_custom_call.1} parent=1 // pred_region
      %114 = dma.done [#allocation8], 128
    $region53: #{tpu_custom_call.1} parent=1 // pred_fallthru
      _
    // Predicated region
    $region54: #{tpu_custom_call.1} parent=1 // pred_check
      _
    $region55: #{tpu_custom_call.1} parent=1 // pred_check_branch
      %116 = sbr.rel (0) target = $region57
    $region56: #{tpu_custom_call.1} parent=1 // pred_region
      %117 = dma.done [#allocation11], 1024
    $region57: #{tpu_custom_call.1} parent=1 // pred_fallthru
      _
    // Predicated region
    $region58: #{tpu_custom_call.1} parent=1 // pred_check
      _
    $region59: #{tpu_custom_call.1} parent=1 // pred_check_branch
      %119 = sbr.rel (0) target = $region61
    $region60: #{tpu_custom_call.1} parent=1 // pred_region
      %120 = dma.done [#allocation11], 1024
    $region61: #{tpu_custom_call.1} parent=1 // pred_fallthru
      _
    // Predicated region
    $region62: #{tpu_custom_call.1} parent=1 // pred_check
      _
    $region63: #{tpu_custom_call.1} parent=1 // pred_check_branch
      %122 = sbr.rel (0) target = $region65
    $region64: #{tpu_custom_call.1} parent=1 // pred_region
      %123 = dma.done [#allocation14], 16
    $region65: #{tpu_custom_call.1} parent=1 // pred_fallthru
      _
    // Predicated region
    $region66: #{tpu_custom_call.1} parent=1 // pred_check
      _
    $region67: #{tpu_custom_call.1} parent=1 // pred_check_branch
      %125 = sbr.rel (0) target = $region69
    $region68: #{tpu_custom_call.1} parent=1 // pred_region
      %126 = dma.done [#allocation14], 16
    $region69: #{tpu_custom_call.1} parent=1 // pred_fallthru
      _
    // Predicated region
    $region70: #{tpu_custom_call.1} parent=1 // pred_check
      _
    $region71: #{tpu_custom_call.1} parent=1 // pred_check_branch
      %128 = sbr.rel (0) target = $region73
    $region72: #{tpu_custom_call.1} parent=1 // pred_region
      %129 = dma.done [#allocation17], 256
    $region73: #{tpu_custom_call.1} parent=1 // pred_fallthru
      _
    // Predicated region
    $region74: #{tpu_custom_call.1} parent=1 // pred_check
      _
    $region75: #{tpu_custom_call.1} parent=1 // pred_check_branch
      %131 = sbr.rel (0) target = $region77
    $region76: #{tpu_custom_call.1} parent=1 // pred_region
      %132 = dma.done [#allocation17], 16
    $region77: #{tpu_custom_call.1} parent=1 // pred_fallthru
      _
    %v134 = vld [vmem:[#allocation10] sm:$0xff]
    %v135 = vld [vmem:[#allocation10 + $0x8] sm:$0xff]
    %v136 = vld [vmem:[#allocation10 + $0x10] sm:$0xff]
    %v137 = vld [vmem:[#allocation10 + $0x18] sm:$0xff]
    %v138 = vld [vmem:[#allocation10 + $0x20] sm:$0xff]
    %v139 = vld [vmem:[#allocation10 + $0x28] sm:$0xff]
    %v140 = vld [vmem:[#allocation10 + $0x30] sm:$0xff]
    %v141 = vld [vmem:[#allocation10 + $0x38] sm:$0xff]
    %v142 = vld [vmem:[%s3] sm:$0x3]
    %v143 = vld [vmem:[#allocation7] sm:$0x1]
    %v145 = vlaneseq
    %v146 = vshrl.u32 %v145, 7
    %v147 = vsub.s32 0, %v146
    %v148 = vrot.slane %v142, %v147
    %v149 = vlaneseq
    %v150 = vshrl.u32 %v149, 7
    %v151 = vsub.s32 1, %v150
    %v152 = vrot.slane %v142, %v151
    %v163 = vunpack.c.l.b16 %v134
    %v164 = vunpack.c.h.b16 %v134
    %v165 = vunpack.c.l.b16 %v135
    %v166 = vunpack.c.h.b16 %v135
    %v167 = vunpack.c.l.b16 %v136
    %v168 = vunpack.c.h.b16 %v136
    %v169 = vunpack.c.l.b16 %v137
    %v170 = vunpack.c.h.b16 %v137
    %v171 = vunpack.c.l.b16 %v138
    %v172 = vunpack.c.h.b16 %v138
    %v173 = vunpack.c.l.b16 %v139
    %v174 = vunpack.c.h.b16 %v139
    %v175 = vunpack.c.l.b16 %v140
    %v176 = vunpack.c.h.b16 %v140
    %v177 = vunpack.c.l.b16 %v141
    %v178 = vunpack.c.h.b16 %v141
    %v179 = vpack.c.b16 %v165, %v163
    %v180 = vpack.c.b16 %v166, %v164
    %v181 = vpack.c.b16 %v169, %v167
    %v182 = vpack.c.b16 %v170, %v168
    %v183 = vpack.c.b16 %v173, %v171
    %v184 = vpack.c.b16 %v174, %v172
    %v185 = vpack.c.b16 %v177, %v175
    %v186 = vpack.c.b16 %v178, %v176
    %vm195 = vcmask 523264
    %v197 = vsel %vm195, %v143, 0
    %199 = vmatprep.subr.bf16.mxu0 %v180
    %200 = vmatpush1.bf16.msra.mxu0 %v179
    %201 = vmatprep.subr.bf16.mxu0 %v182
    %202 = vmatpush1.bf16.msra.mxu0 %v181
    %203 = vmatprep.subr.bf16.mxu0 %v184
    %204 = vmatpush1.bf16.msra.mxu0 %v183
    %205 = vmatprep.subr.bf16.mxu0 %v186
    %206 = vmatpush1.bf16.msra.mxu0 %v185
    %207 = vmatprep.subr.bf16.mxu0 0
    %208 = vmatpush1.bf16.msra.mxu0 0
    %209 = vmatprep.subr.bf16.mxu0 0
    %210 = vmatpush1.bf16.msra.mxu0 0
    %211 = vmatprep.subr.bf16.mxu0 0
    %212 = vmatpush1.bf16.msra.mxu0 0
    %213 = vmatprep.subr.bf16.mxu0 0
    %214 = vmatpush1.bf16.msra.mxu0 0
    %215 = vmatprep.subr.bf16.mxu0 0
    %216 = vmatpush1.bf16.msra.mxu0 0
    %217 = vmatprep.subr.bf16.mxu0 0
    %218 = vmatpush1.bf16.msra.mxu0 0
    %219 = vmatprep.subr.bf16.mxu0 0
    %220 = vmatpush1.bf16.msra.mxu0 0
    %221 = vmatprep.subr.bf16.mxu0 0
    %222 = vmatpush1.bf16.msra.mxu0 0
    %223 = vmatprep.subr.bf16.mxu0 0
    %224 = vmatpush1.bf16.msra.mxu0 0
    %225 = vmatprep.subr.bf16.mxu0 0
    %226 = vmatpush1.bf16.msra.mxu0 0
    %227 = vmatprep.subr.bf16.mxu0 0
    %228 = vmatpush1.bf16.msra.mxu0 0
    %229 = vmatprep.subr.bf16.mxu0 0
    %230 = vmatpush1.bf16.msra.mxu0 0
    %231 = vmatprep.mubr.bf16.mxu0 0
    %232 = vmatmul.mubr.bf16.gmra.mrb[0].mxu0 %v197
    %v233 = vpop.f32.mrb[0].mxu0
    %v234 = vadd.f32 %v148, %v233
    %v235 = vpop.f32.mrb[0].mxu0
    %v236 = vadd.f32 %v152, %v235
    %v237 = vpop.f32.mrb[0].mxu0
    %v238 = vpop.f32.mrb[0].mxu0
    %239 = vdwg.mxu0
    %v240 = vpack.c.bf16 %v234, %v234
    %241 = vst [vmem:[#allocation2] sm:$0x1] %v240
    %v242 = vpack.c.bf16 %v236, %v236
    %s243 = scalar_lea.vmem [#allocation3], 7
    %244 = vst [vmem:[%s243] sm:$0x1] %v242
    %s245 = scalar_lea.vmem [#allocation7], 1
    %v246 = vld [vmem:[%s245] sm:$0x1]
    %v248 = vsel %vm195, %v246, 0
    %250 = vmatprep.subr.bf16.mxu0 %v180
    %251 = vmatpush1.bf16.msra.mxu0 %v179
    %252 = vmatprep.subr.bf16.mxu0 %v182
    %253 = vmatpush1.bf16.msra.mxu0 %v181
    %254 = vmatprep.subr.bf16.mxu0 %v184
    %255 = vmatpush1.bf16.msra.mxu0 %v183
    %256 = vmatprep.subr.bf16.mxu0 %v186
    %257 = vmatpush1.bf16.msra.mxu0 %v185
    %258 = vmatprep.subr.bf16.mxu0 0
    %259 = vmatpush1.bf16.msra.mxu0 0
    %260 = vmatprep.subr.bf16.mxu0 0
    %261 = vmatpush1.bf16.msra.mxu0 0
    %262 = vmatprep.subr.bf16.mxu0 0
    %263 = vmatpush1.bf16.msra.mxu0 0
    %264 = vmatprep.subr.bf16.mxu0 0
    %265 = vmatpush1.bf16.msra.mxu0 0
    %266 = vmatprep.subr.bf16.mxu0 0
    %267 = vmatpush1.bf16.msra.mxu0 0
    %268 = vmatprep.subr.bf16.mxu0 0
    %269 = vmatpush1.bf16.msra.mxu0 0
    %270 = vmatprep.subr.bf16.mxu0 0
    %271 = vmatpush1.bf16.msra.mxu0 0
    %272 = vmatprep.subr.bf16.mxu0 0
    %273 = vmatpush1.bf16.msra.mxu0 0
    %274 = vmatprep.subr.bf16.mxu0 0
    %275 = vmatpush1.bf16.msra.mxu0 0
    %276 = vmatprep.subr.bf16.mxu0 0
    %277 = vmatpush1.bf16.msra.mxu0 0
    %278 = vmatprep.subr.bf16.mxu0 0
    %279 = vmatpush1.bf16.msra.mxu0 0
    %280 = vmatprep.subr.bf16.mxu0 0
    %281 = vmatpush1.bf16.msra.mxu0 0
    %282 = vmatprep.mubr.bf16.mxu0 0
    %283 = vmatmul.mubr.bf16.gmra.mrb[0].mxu0 %v248
    %v284 = vpop.f32.mrb[0].mxu0
    %v285 = vadd.f32 %v148, %v284
    %v286 = vpop.f32.mrb[0].mxu0
    %v287 = vadd.f32 %v152, %v286
    %v288 = vpop.f32.mrb[0].mxu0
    %v289 = vpop.f32.mrb[0].mxu0
    %290 = vdwg.mxu0
    %v291 = vpack.c.bf16 %v285, %v285
    %s292 = scalar_lea.vmem [#allocation2], 1
    %293 = vst [vmem:[%s292] sm:$0x1] %v291
    %v294 = vpack.c.bf16 %v287, %v287
    %s295 = scalar_lea.vmem [#allocation3], 6
    %296 = vst [vmem:[%s295] sm:$0x1] %v294
    %s297 = scalar_lea.vmem [#allocation7], 2
    %v298 = vld [vmem:[%s297] sm:$0x1]
    %v300 = vsel %vm195, %v298, 0
    %302 = vmatprep.subr.bf16.mxu0 %v180
    %303 = vmatpush1.bf16.msra.mxu0 %v179
    %304 = vmatprep.subr.bf16.mxu0 %v182
    %305 = vmatpush1.bf16.msra.mxu0 %v181
    %306 = vmatprep.subr.bf16.mxu0 %v184
    %307 = vmatpush1.bf16.msra.mxu0 %v183
    %308 = vmatprep.subr.bf16.mxu0 %v186
    %309 = vmatpush1.bf16.msra.mxu0 %v185
    %310 = vmatprep.subr.bf16.mxu0 0
    %311 = vmatpush1.bf16.msra.mxu0 0
    %312 = vmatprep.subr.bf16.mxu0 0
    %313 = vmatpush1.bf16.msra.mxu0 0
    %314 = vmatprep.subr.bf16.mxu0 0
    %315 = vmatpush1.bf16.msra.mxu0 0
    %316 = vmatprep.subr.bf16.mxu0 0
    %317 = vmatpush1.bf16.msra.mxu0 0
    %318 = vmatprep.subr.bf16.mxu0 0
    %319 = vmatpush1.bf16.msra.mxu0 0
    %320 = vmatprep.subr.bf16.mxu0 0
    %321 = vmatpush1.bf16.msra.mxu0 0
    %322 = vmatprep.subr.bf16.mxu0 0
    %323 = vmatpush1.bf16.msra.mxu0 0
    %324 = vmatprep.subr.bf16.mxu0 0
    %325 = vmatpush1.bf16.msra.mxu0 0
    %326 = vmatprep.subr.bf16.mxu0 0
    %327 = vmatpush1.bf16.msra.mxu0 0
    %328 = vmatprep.subr.bf16.mxu0 0
    %329 = vmatpush1.bf16.msra.mxu0 0
    %330 = vmatprep.subr.bf16.mxu0 0
    %331 = vmatpush1.bf16.msra.mxu0 0
    %332 = vmatprep.subr.bf16.mxu0 0
    %333 = vmatpush1.bf16.msra.mxu0 0
    %334 = vmatprep.mubr.bf16.mxu0 0
    %335 = vmatmul.mubr.bf16.gmra.mrb[0].mxu0 %v300
    %v336 = vpop.f32.mrb[0].mxu0
    %v337 = vadd.f32 %v148, %v336
    %v338 = vpop.f32.mrb[0].mxu0
    %v339 = vadd.f32 %v152, %v338
    %v340 = vpop.f32.mrb[0].mxu0
    %v341 = vpop.f32.mrb[0].mxu0
    %342 = vdwg.mxu0
    %v343 = vpack.c.bf16 %v337, %v337
    %s344 = scalar_lea.vmem [#allocation2], 2
    %345 = vst [vmem:[%s344] sm:$0x1] %v343
    %v346 = vpack.c.bf16 %v339, %v339
    %s347 = scalar_lea.vmem [#allocation3], 5
    %348 = vst [vmem:[%s347] sm:$0x1] %v346
    %s349 = scalar_lea.vmem [#allocation7], 3
    %v350 = vld [vmem:[%s349] sm:$0x1]
    %v352 = vsel %vm195, %v350, 0
    %354 = vmatprep.subr.bf16.mxu0 %v180
    %355 = vmatpush1.bf16.msra.mxu0 %v179
    %356 = vmatprep.subr.bf16.mxu0 %v182
    %357 = vmatpush1.bf16.msra.mxu0 %v181
    %358 = vmatprep.subr.bf16.mxu0 %v184
    %359 = vmatpush1.bf16.msra.mxu0 %v183
    %360 = vmatprep.subr.bf16.mxu0 %v186
    %361 = vmatpush1.bf16.msra.mxu0 %v185
    %362 = vmatprep.subr.bf16.mxu0 0
    %363 = vmatpush1.bf16.msra.mxu0 0
    %364 = vmatprep.subr.bf16.mxu0 0
    %365 = vmatpush1.bf16.msra.mxu0 0
    %366 = vmatprep.subr.bf16.mxu0 0
    %367 = vmatpush1.bf16.msra.mxu0 0
    %368 = vmatprep.subr.bf16.mxu0 0
    %369 = vmatpush1.bf16.msra.mxu0 0
    %370 = vmatprep.subr.bf16.mxu0 0
    %371 = vmatpush1.bf16.msra.mxu0 0
    %372 = vmatprep.subr.bf16.mxu0 0
    %373 = vmatpush1.bf16.msra.mxu0 0
    %374 = vmatprep.subr.bf16.mxu0 0
    %375 = vmatpush1.bf16.msra.mxu0 0
    %376 = vmatprep.subr.bf16.mxu0 0
    %377 = vmatpush1.bf16.msra.mxu0 0
    %378 = vmatprep.subr.bf16.mxu0 0
    %379 = vmatpush1.bf16.msra.mxu0 0
    %380 = vmatprep.subr.bf16.mxu0 0
    %381 = vmatpush1.bf16.msra.mxu0 0
    %382 = vmatprep.subr.bf16.mxu0 0
    %383 = vmatpush1.bf16.msra.mxu0 0
    %384 = vmatprep.subr.bf16.mxu0 0
    %385 = vmatpush1.bf16.msra.mxu0 0
    %386 = vmatprep.mubr.bf16.mxu0 0
    %387 = vmatmul.mubr.bf16.gmra.mrb[0].mxu0 %v352
    %v388 = vpop.f32.mrb[0].mxu0
    %v389 = vadd.f32 %v148, %v388
    %v390 = vpop.f32.mrb[0].mxu0
    %v391 = vadd.f32 %v152, %v390
    %v392 = vpop.f32.mrb[0].mxu0
    %v393 = vpop.f32.mrb[0].mxu0
    %394 = vdwg.mxu0
    %v395 = vpack.c.bf16 %v389, %v389
    %s396 = scalar_lea.vmem [#allocation2], 3
    %397 = vst [vmem:[%s396] sm:$0x1] %v395
    %v398 = vpack.c.bf16 %v391, %v391
    %s399 = scalar_lea.vmem [#allocation3], 4
    %400 = vst [vmem:[%s399] sm:$0x1] %v398
    %s401 = scalar_lea.vmem [#allocation7], 4
    %v402 = vld [vmem:[%s401] sm:$0x1]
    %v404 = vsel %vm195, %v402, 0
    %406 = vmatprep.subr.bf16.mxu0 %v180
    %407 = vmatpush1.bf16.msra.mxu0 %v179
    %408 = vmatprep.subr.bf16.mxu0 %v182
    %409 = vmatpush1.bf16.msra.mxu0 %v181
    %410 = vmatprep.subr.bf16.mxu0 %v184
    %411 = vmatpush1.bf16.msra.mxu0 %v183
    %412 = vmatprep.subr.bf16.mxu0 %v186
    %413 = vmatpush1.bf16.msra.mxu0 %v185
    %414 = vmatprep.subr.bf16.mxu0 0
    %415 = vmatpush1.bf16.msra.mxu0 0
    %416 = vmatprep.subr.bf16.mxu0 0
    %417 = vmatpush1.bf16.msra.mxu0 0
    %418 = vmatprep.subr.bf16.mxu0 0
    %419 = vmatpush1.bf16.msra.mxu0 0
    %420 = vmatprep.subr.bf16.mxu0 0
    %421 = vmatpush1.bf16.msra.mxu0 0
    %422 = vmatprep.subr.bf16.mxu0 0
    %423 = vmatpush1.bf16.msra.mxu0 0
    %424 = vmatprep.subr.bf16.mxu0 0
    %425 = vmatpush1.bf16.msra.mxu0 0
    %426 = vmatprep.subr.bf16.mxu0 0
    %427 = vmatpush1.bf16.msra.mxu0 0
    %428 = vmatprep.subr.bf16.mxu0 0
    %429 = vmatpush1.bf16.msra.mxu0 0
    %430 = vmatprep.subr.bf16.mxu0 0
    %431 = vmatpush1.bf16.msra.mxu0 0
    %432 = vmatprep.subr.bf16.mxu0 0
    %433 = vmatpush1.bf16.msra.mxu0 0
    %434 = vmatprep.subr.bf16.mxu0 0
    %435 = vmatpush1.bf16.msra.mxu0 0
    %436 = vmatprep.subr.bf16.mxu0 0
    %437 = vmatpush1.bf16.msra.mxu0 0
    %438 = vmatprep.mubr.bf16.mxu0 0
    %439 = vmatmul.mubr.bf16.gmra.mrb[0].mxu0 %v404
    %v440 = vpop.f32.mrb[0].mxu0
    %v441 = vadd.f32 %v148, %v440
    %v442 = vpop.f32.mrb[0].mxu0
    %v443 = vadd.f32 %v152, %v442
    %v444 = vpop.f32.mrb[0].mxu0
    %v445 = vpop.f32.mrb[0].mxu0
    %446 = vdwg.mxu0
    %v447 = vpack.c.bf16 %v441, %v441
    %s448 = scalar_lea.vmem [#allocation2], 4
    %449 = vst [vmem:[%s448] sm:$0x1] %v447
    %v450 = vpack.c.bf16 %v443, %v443
    %s451 = scalar_lea.vmem [#allocation3], 3
    %452 = vst [vmem:[%s451] sm:$0x1] %v450
    %s453 = scalar_lea.vmem [#allocation7], 5
    %v454 = vld [vmem:[%s453] sm:$0x1]
    %v456 = vsel %vm195, %v454, 0
    %458 = vmatprep.subr.bf16.mxu0 %v180
    %459 = vmatpush1.bf16.msra.mxu0 %v179
    %460 = vmatprep.subr.bf16.mxu0 %v182
    %461 = vmatpush1.bf16.msra.mxu0 %v181
    %462 = vmatprep.subr.bf16.mxu0 %v184
    %463 = vmatpush1.bf16.msra.mxu0 %v183
    %464 = vmatprep.subr.bf16.mxu0 %v186
    %465 = vmatpush1.bf16.msra.mxu0 %v185
    %466 = vmatprep.subr.bf16.mxu0 0
    %467 = vmatpush1.bf16.msra.mxu0 0
    %468 = vmatprep.subr.bf16.mxu0 0
    %469 = vmatpush1.bf16.msra.mxu0 0
    %470 = vmatprep.subr.bf16.mxu0 0
    %471 = vmatpush1.bf16.msra.mxu0 0
    %472 = vmatprep.subr.bf16.mxu0 0
    %473 = vmatpush1.bf16.msra.mxu0 0
    %474 = vmatprep.subr.bf16.mxu0 0
    %475 = vmatpush1.bf16.msra.mxu0 0
    %476 = vmatprep.subr.bf16.mxu0 0
    %477 = vmatpush1.bf16.msra.mxu0 0
    %478 = vmatprep.subr.bf16.mxu0 0
    %479 = vmatpush1.bf16.msra.mxu0 0
    %480 = vmatprep.subr.bf16.mxu0 0
    %481 = vmatpush1.bf16.msra.mxu0 0
    %482 = vmatprep.subr.bf16.mxu0 0
    %483 = vmatpush1.bf16.msra.mxu0 0
    %484 = vmatprep.subr.bf16.mxu0 0
    %485 = vmatpush1.bf16.msra.mxu0 0
    %486 = vmatprep.subr.bf16.mxu0 0
    %487 = vmatpush1.bf16.msra.mxu0 0
    %488 = vmatprep.subr.bf16.mxu0 0
    %489 = vmatpush1.bf16.msra.mxu0 0
    %490 = vmatprep.mubr.bf16.mxu0 0
    %491 = vmatmul.mubr.bf16.gmra.mrb[0].mxu0 %v456
    %v492 = vpop.f32.mrb[0].mxu0
    %v493 = vadd.f32 %v148, %v492
    %v494 = vpop.f32.mrb[0].mxu0
    %v495 = vadd.f32 %v152, %v494
    %v496 = vpop.f32.mrb[0].mxu0
    %v497 = vpop.f32.mrb[0].mxu0
    %498 = vdwg.mxu0
    %v499 = vpack.c.bf16 %v493, %v493
    %s500 = scalar_lea.vmem [#allocation2], 5
    %501 = vst [vmem:[%s500] sm:$0x1] %v499
    %v502 = vpack.c.bf16 %v495, %v495
    %s503 = scalar_lea.vmem [#allocation3], 2
    %504 = vst [vmem:[%s503] sm:$0x1] %v502
    %s505 = scalar_lea.vmem [#allocation7], 6
    %v506 = vld [vmem:[%s505] sm:$0x1]
    %v508 = vsel %vm195, %v506, 0
    %510 = vmatprep.subr.bf16.mxu0 %v180
    %511 = vmatpush1.bf16.msra.mxu0 %v179
    %512 = vmatprep.subr.bf16.mxu0 %v182
    %513 = vmatpush1.bf16.msra.mxu0 %v181
    %514 = vmatprep.subr.bf16.mxu0 %v184
    %515 = vmatpush1.bf16.msra.mxu0 %v183
    %516 = vmatprep.subr.bf16.mxu0 %v186
    %517 = vmatpush1.bf16.msra.mxu0 %v185
    %518 = vmatprep.subr.bf16.mxu0 0
    %519 = vmatpush1.bf16.msra.mxu0 0
    %520 = vmatprep.subr.bf16.mxu0 0
    %521 = vmatpush1.bf16.msra.mxu0 0
    %522 = vmatprep.subr.bf16.mxu0 0
    %523 = vmatpush1.bf16.msra.mxu0 0
    %524 = vmatprep.subr.bf16.mxu0 0
    %525 = vmatpush1.bf16.msra.mxu0 0
    %526 = vmatprep.subr.bf16.mxu0 0
    %527 = vmatpush1.bf16.msra.mxu0 0
    %528 = vmatprep.subr.bf16.mxu0 0
    %529 = vmatpush1.bf16.msra.mxu0 0
    %530 = vmatprep.subr.bf16.mxu0 0
    %531 = vmatpush1.bf16.msra.mxu0 0
    %532 = vmatprep.subr.bf16.mxu0 0
    %533 = vmatpush1.bf16.msra.mxu0 0
    %534 = vmatprep.subr.bf16.mxu0 0
    %535 = vmatpush1.bf16.msra.mxu0 0
    %536 = vmatprep.subr.bf16.mxu0 0
    %537 = vmatpush1.bf16.msra.mxu0 0
    %538 = vmatprep.subr.bf16.mxu0 0
    %539 = vmatpush1.bf16.msra.mxu0 0
    %540 = vmatprep.subr.bf16.mxu0 0
    %541 = vmatpush1.bf16.msra.mxu0 0
    %542 = vmatprep.mubr.bf16.mxu0 0
    %543 = vmatmul.mubr.bf16.gmra.mrb[0].mxu0 %v508
    %v544 = vpop.f32.mrb[0].mxu0
    %v545 = vadd.f32 %v148, %v544
    %v546 = vpop.f32.mrb[0].mxu0
    %v547 = vadd.f32 %v152, %v546
    %v548 = vpop.f32.mrb[0].mxu0
    %v549 = vpop.f32.mrb[0].mxu0
    %550 = vdwg.mxu0
    %v551 = vpack.c.bf16 %v545, %v545
    %s552 = scalar_lea.vmem [#allocation2], 6
    %553 = vst [vmem:[%s552] sm:$0x1] %v551
    %v554 = vpack.c.bf16 %v547, %v547
    %s555 = scalar_lea.vmem [#allocation3], 1
    %556 = vst [vmem:[%s555] sm:$0x1] %v554
    %s557 = scalar_lea.vmem [#allocation7], 7
    %v558 = vld [vmem:[%s557] sm:$0x1]
    %v560 = vsel %vm195, %v558, 0
    %562 = vmatprep.subr.bf16.mxu0 %v180
    %563 = vmatpush1.bf16.msra.mxu0 %v179
    %564 = vmatprep.subr.bf16.mxu0 %v182
    %565 = vmatpush1.bf16.msra.mxu0 %v181
    %566 = vmatprep.subr.bf16.mxu0 %v184
    %567 = vmatpush1.bf16.msra.mxu0 %v183
    %568 = vmatprep.subr.bf16.mxu0 %v186
    %569 = vmatpush1.bf16.msra.mxu0 %v185
    %570 = vmatprep.subr.bf16.mxu0 0
    %571 = vmatpush1.bf16.msra.mxu0 0
    %572 = vmatprep.subr.bf16.mxu0 0
    %573 = vmatpush1.bf16.msra.mxu0 0
    %574 = vmatprep.subr.bf16.mxu0 0
    %575 = vmatpush1.bf16.msra.mxu0 0
    %576 = vmatprep.subr.bf16.mxu0 0
    %577 = vmatpush1.bf16.msra.mxu0 0
    %578 = vmatprep.subr.bf16.mxu0 0
    %579 = vmatpush1.bf16.msra.mxu0 0
    %580 = vmatprep.subr.bf16.mxu0 0
    %581 = vmatpush1.bf16.msra.mxu0 0
    %582 = vmatprep.subr.bf16.mxu0 0
    %583 = vmatpush1.bf16.msra.mxu0 0
    %584 = vmatprep.subr.bf16.mxu0 0
    %585 = vmatpush1.bf16.msra.mxu0 0
    %586 = vmatprep.subr.bf16.mxu0 0
    %587 = vmatpush1.bf16.msra.mxu0 0
    %588 = vmatprep.subr.bf16.mxu0 0
    %589 = vmatpush1.bf16.msra.mxu0 0
    %590 = vmatprep.subr.bf16.mxu0 0
    %591 = vmatpush1.bf16.msra.mxu0 0
    %592 = vmatprep.subr.bf16.mxu0 0
    %593 = vmatpush1.bf16.msra.mxu0 0
    %594 = vmatprep.mubr.bf16.mxu0 0
    %595 = vmatmul.mubr.bf16.gmra.mrb[0].mxu0 %v560
    %v596 = vpop.f32.mrb[0].mxu0
    %v597 = vadd.f32 %v148, %v596
    %v598 = vpop.f32.mrb[0].mxu0
    %v599 = vadd.f32 %v152, %v598
    %v600 = vpop.f32.mrb[0].mxu0
    %v601 = vpop.f32.mrb[0].mxu0
    %602 = vdwg.mxu0
    %v603 = vpack.c.bf16 %v597, %v597
    %s604 = scalar_lea.vmem [#allocation2], 7
    %605 = vst [vmem:[%s604] sm:$0x1] %v603
    %v606 = vpack.c.bf16 %v599, %v599
    %607 = vst [vmem:[#allocation3] sm:$0x1] %v606
    %v608 = vld [vmem:[#allocation12] sm:$0xff]
    %v609 = vld [vmem:[#allocation12 + $0x8] sm:$0xff]
    %v610 = vld [vmem:[#allocation12 + $0x10] sm:$0xff]
    %v611 = vld [vmem:[#allocation12 + $0x18] sm:$0xff]
    %v612 = vld [vmem:[#allocation12 + $0x20] sm:$0xff]
    %v613 = vld [vmem:[#allocation12 + $0x28] sm:$0xff]
    %v614 = vld [vmem:[#allocation12 + $0x30] sm:$0xff]
    %v615 = vld [vmem:[#allocation12 + $0x38] sm:$0xff]
    %v624 = vunpack.c.l.b16 %v608
    %v625 = vunpack.c.h.b16 %v608
    %v626 = vunpack.c.l.b16 %v609
    %v627 = vunpack.c.h.b16 %v609
    %v628 = vunpack.c.l.b16 %v610
    %v629 = vunpack.c.h.b16 %v610
    %v630 = vunpack.c.l.b16 %v611
    %v631 = vunpack.c.h.b16 %v611
    %v632 = vunpack.c.l.b16 %v612
    %v633 = vunpack.c.h.b16 %v612
    %v634 = vunpack.c.l.b16 %v613
    %v635 = vunpack.c.h.b16 %v613
    %v636 = vunpack.c.l.b16 %v614
    %v637 = vunpack.c.h.b16 %v614
    %v638 = vunpack.c.l.b16 %v615
    %v639 = vunpack.c.h.b16 %v615
    %v640 = vpack.c.b16 %v626, %v624
    %v641 = vpack.c.b16 %v627, %v625
    %v642 = vpack.c.b16 %v630, %v628
    %v643 = vpack.c.b16 %v631, %v629
    %v644 = vpack.c.b16 %v634, %v632
    %v645 = vpack.c.b16 %v635, %v633
    %v646 = vpack.c.b16 %v638, %v636
    %v647 = vpack.c.b16 %v639, %v637
    %v657 = vsel %vm195, 0, 0
    %659 = vmatprep.subr.bf16.mxu0 %v641
    %660 = vmatpush1.bf16.msra.mxu0 %v640
    %661 = vmatprep.subr.bf16.mxu0 %v643
    %662 = vmatpush1.bf16.msra.mxu0 %v642
    %663 = vmatprep.subr.bf16.mxu0 %v645
    %664 = vmatpush1.bf16.msra.mxu0 %v644
    %665 = vmatprep.subr.bf16.mxu0 %v647
    %666 = vmatpush1.bf16.msra.mxu0 %v646
    %667 = vmatprep.subr.bf16.mxu0 0
    %668 = vmatpush1.bf16.msra.mxu0 0
    %669 = vmatprep.subr.bf16.mxu0 0
    %670 = vmatpush1.bf16.msra.mxu0 0
    %671 = vmatprep.subr.bf16.mxu0 0
    %672 = vmatpush1.bf16.msra.mxu0 0
    %673 = vmatprep.subr.bf16.mxu0 0
    %674 = vmatpush1.bf16.msra.mxu0 0
    %675 = vmatprep.subr.bf16.mxu0 0
    %676 = vmatpush1.bf16.msra.mxu0 0
    %677 = vmatprep.subr.bf16.mxu0 0
    %678 = vmatpush1.bf16.msra.mxu0 0
    %679 = vmatprep.subr.bf16.mxu0 0
    %680 = vmatpush1.bf16.msra.mxu0 0
    %681 = vmatprep.subr.bf16.mxu0 0
    %682 = vmatpush1.bf16.msra.mxu0 0
    %683 = vmatprep.subr.bf16.mxu0 0
    %684 = vmatpush1.bf16.msra.mxu0 0
    %685 = vmatprep.subr.bf16.mxu0 0
    %686 = vmatpush1.bf16.msra.mxu0 0
    %687 = vmatprep.subr.bf16.mxu0 0
    %688 = vmatpush1.bf16.msra.mxu0 0
    %689 = vmatprep.subr.bf16.mxu0 0
    %690 = vmatpush1.bf16.msra.mxu0 0
    %691 = vmatprep.mubr.bf16.mxu0 0
    %692 = vmatmul.mubr.bf16.gmra.mrb[0].mxu0 %v657
    %v693 = vpop.f32.mrb[0].mxu0
    %v694 = vadd.f32 0.0, %v693
    %v695 = vpop.f32.mrb[0].mxu0
    %v696 = vadd.f32 0.0, %v695
    %v697 = vpop.f32.mrb[0].mxu0
    %v698 = vpop.f32.mrb[0].mxu0
    %699 = vdwg.mxu0
    %v700 = vld [vmem:[#allocation2] sm:$0x1]
    %v701 = vunpack.c.l.bf16 %v700
    %v702 = vadd.f32 %v701, %v694
    %v703 = vld [vmem:[#allocation3] sm:$0x1]
    %v704 = vunpack.c.l.bf16 %v703
    %v705 = vadd.f32 %v704, %v696
    %v706 = vxor.u32 %v702, 2147483648
    %v707 = vmul.f32 %v706, 1.442695
    %v708 = vpow.pop %v707
    %v709 = vadd.f32 %v708, 1.0
    %v710 = vrcp.pop %v709
    %v711 = vmul.f32 1.0, %v710
    %v712 = vtanh.pop %v702
    %v713 = vmul.f32 %v711, 0.0
    %715 = vrot.lane.b32.xlu0 %v712, 32
    %v716 = vpop.permute.xlu0 %715
    %v718 = vmul.f32 %v711, %v716
    %720 = vrot.lane.b32.xlu0 %v718, 32
    %v721 = vpop.permute.xlu0 %720
    %v723 = vadd.f32 %v713, %v721
    %v724 = vtanh.pop %v723
    %726 = vrot.lane.b32.xlu0 %v724, 32
    %v727 = vpop.permute.xlu0 %726
    %v729 = vmul.f32 %v711, %v727
    %v730 = vxor.u32 %v705, 2147483648
    %v731 = vmul.f32 %v730, 1.442695
    %v732 = vpow.pop %v731
    %v733 = vadd.f32 %v732, 1.0
    %v734 = vrcp.pop %v733
    %v735 = vmul.f32 1.0, %v734
    %v736 = vtanh.pop %v705
    %v737 = vmul.f32 %v735, 0.0
    %739 = vrot.lane.b32.xlu0 %v736, 32
    %v740 = vpop.permute.xlu0 %739
    %v742 = vmul.f32 %v735, %v740
    %744 = vrot.lane.b32.xlu0 %v742, 32
    %v745 = vpop.permute.xlu0 %744
    %v747 = vadd.f32 %v737, %v745
    %v748 = vtanh.pop %v747
    %750 = vrot.lane.b32.xlu0 %v748, 32
    %v751 = vpop.permute.xlu0 %750
    %v753 = vmul.f32 %v735, %v751
    %v756 = vunpack.c.l.s4 1983009808
    %v757 = vunpack.c.0.s8 %v756
    %v758 = vlaneseq
    %v759 = vshrl.u32 %v758, 7
    %v760 = vsub.s32 %v757, %v759
    %v761 = vrot.slane %v729, %v760
    %762 = vrot.lane.b32.xlu0 %v761, 64
    %v763 = vpop.permute.xlu0 %762
    %vm765 = vcmask 254976
    %766 = vst.msk [vmem:[#allocation4] sm:$0x3] %vm765, %v763
    %v769 = vunpack.c.l.s4 1983009808
    %v770 = vunpack.c.0.s8 %v769
    %v771 = vlaneseq
    %v772 = vshrl.u32 %v771, 7
    %v773 = vsub.s32 %v770, %v772
    %v774 = vrot.slane %v753, %v773
    %775 = vrot.lane.b32.xlu0 %v774, 64
    %v776 = vpop.permute.xlu0 %775
    %s778 = scalar_lea.vmem [#allocation5], 14
    %779 = vst.msk [vmem:[%s778] sm:$0x3] %vm765, %v776
    %780 = vrot.lane.b32.xlu0 %v774, 96
    %v781 = vpop.permute.xlu0 %780
    %vm783 = vcmask 261120
    %v784 = vsel %vm783, %v763, %v781
    %v785 = vpack.c.bf16 %v784, %v784
    %v787 = vsel %vm195, %v785, 0
    %789 = vmatprep.subr.bf16.mxu0 %v641
    %790 = vmatpush1.bf16.msra.mxu0 %v640
    %791 = vmatprep.subr.bf16.mxu0 %v643
    %792 = vmatpush1.bf16.msra.mxu0 %v642
    %793 = vmatprep.subr.bf16.mxu0 %v645
    %794 = vmatpush1.bf16.msra.mxu0 %v644
    %795 = vmatprep.subr.bf16.mxu0 %v647
    %796 = vmatpush1.bf16.msra.mxu0 %v646
    %797 = vmatprep.subr.bf16.mxu0 0
    %798 = vmatpush1.bf16.msra.mxu0 0
    %799 = vmatprep.subr.bf16.mxu0 0
    %800 = vmatpush1.bf16.msra.mxu0 0
    %801 = vmatprep.subr.bf16.mxu0 0
    %802 = vmatpush1.bf16.msra.mxu0 0
    %803 = vmatprep.subr.bf16.mxu0 0
    %804 = vmatpush1.bf16.msra.mxu0 0
    %805 = vmatprep.subr.bf16.mxu0 0
    %806 = vmatpush1.bf16.msra.mxu0 0
    %807 = vmatprep.subr.bf16.mxu0 0
    %808 = vmatpush1.bf16.msra.mxu0 0
    %809 = vmatprep.subr.bf16.mxu0 0
    %810 = vmatpush1.bf16.msra.mxu0 0
    %811 = vmatprep.subr.bf16.mxu0 0
    %812 = vmatpush1.bf16.msra.mxu0 0
    %813 = vmatprep.subr.bf16.mxu0 0
    %814 = vmatpush1.bf16.msra.mxu0 0
    %815 = vmatprep.subr.bf16.mxu0 0
    %816 = vmatpush1.bf16.msra.mxu0 0
    %817 = vmatprep.subr.bf16.mxu0 0
    %818 = vmatpush1.bf16.msra.mxu0 0
    %819 = vmatprep.subr.bf16.mxu0 0
    %820 = vmatpush1.bf16.msra.mxu0 0
    %821 = vmatprep.mubr.bf16.mxu0 0
    %822 = vmatmul.mubr.bf16.gmra.mrb[0].mxu0 %v787
    %v823 = vpop.f32.mrb[0].mxu0
    %v824 = vadd.f32 0.0, %v823
    %v825 = vpop.f32.mrb[0].mxu0
    %v826 = vadd.f32 0.0, %v825
    %v827 = vpop.f32.mrb[0].mxu0
    %v828 = vpop.f32.mrb[0].mxu0
    %829 = vdwg.mxu0
    %v830 = vld [vmem:[%s292] sm:$0x1]
    %v831 = vunpack.c.l.bf16 %v830
    %v832 = vadd.f32 %v831, %v824
    %v833 = vld [vmem:[%s555] sm:$0x1]
    %v834 = vunpack.c.l.bf16 %v833
    %v835 = vadd.f32 %v834, %v826
    %v836 = vxor.u32 %v832, 2147483648
    %v837 = vmul.f32 %v836, 1.442695
    %v838 = vpow.pop %v837
    %v839 = vadd.f32 %v838, 1.0
    %v840 = vrcp.pop %v839
    %v841 = vmul.f32 1.0, %v840
    %v842 = vtanh.pop %v832
    %v843 = vmul.f32 %v841, %v723
    %845 = vrot.lane.b32.xlu0 %v842, 32
    %v846 = vpop.permute.xlu0 %845
    %v848 = vmul.f32 %v841, %v846
    %850 = vrot.lane.b32.xlu0 %v848, 32
    %v851 = vpop.permute.xlu0 %850
    %v853 = vadd.f32 %v843, %v851
    %v854 = vtanh.pop %v853
    %856 = vrot.lane.b32.xlu0 %v854, 32
    %v857 = vpop.permute.xlu0 %856
    %v859 = vmul.f32 %v841, %v857
    %v860 = vxor.u32 %v835, 2147483648
    %v861 = vmul.f32 %v860, 1.442695
    %v862 = vpow.pop %v861
    %v863 = vadd.f32 %v862, 1.0
    %v864 = vrcp.pop %v863
    %v865 = vmul.f32 1.0, %v864
    %v866 = vtanh.pop %v835
    %v867 = vmul.f32 %v865, %v747
    %869 = vrot.lane.b32.xlu0 %v866, 32
    %v870 = vpop.permute.xlu0 %869
    %v872 = vmul.f32 %v865, %v870
    %874 = vrot.lane.b32.xlu0 %v872, 32
    %v875 = vpop.permute.xlu0 %874
    %v877 = vadd.f32 %v867, %v875
    %v878 = vtanh.pop %v877
    %880 = vrot.lane.b32.xlu0 %v878, 32
    %v881 = vpop.permute.xlu0 %880
    %v883 = vmul.f32 %v865, %v881
    %v886 = vunpack.c.l.s4 1983009808
    %v887 = vunpack.c.0.s8 %v886
    %v888 = vlaneseq
    %v889 = vshrl.u32 %v888, 7
    %v890 = vsub.s32 %v887, %v889
    %v891 = vrot.slane %v859, %v890
    %892 = vrot.lane.b32.xlu0 %v891, 64
    %v893 = vpop.permute.xlu0 %892
    %s895 = scalar_lea.vmem [#allocation4], 2
    %896 = vst.msk [vmem:[%s895] sm:$0x3] %vm765, %v893
    %v899 = vunpack.c.l.s4 1983009808
    %v900 = vunpack.c.0.s8 %v899
    %v901 = vlaneseq
    %v902 = vshrl.u32 %v901, 7
    %v903 = vsub.s32 %v900, %v902
    %v904 = vrot.slane %v883, %v903
    %905 = vrot.lane.b32.xlu0 %v904, 64
    %v906 = vpop.permute.xlu0 %905
    %s908 = scalar_lea.vmem [#allocation5], 12
    %909 = vst.msk [vmem:[%s908] sm:$0x3] %vm765, %v906
    %910 = vrot.lane.b32.xlu0 %v904, 96
    %v911 = vpop.permute.xlu0 %910
    %v913 = vsel %vm783, %v893, %v911
    %v914 = vpack.c.bf16 %v913, %v913
    %v916 = vsel %vm195, %v914, 0
    %918 = vmatprep.subr.bf16.mxu0 %v641
    %919 = vmatpush1.bf16.msra.mxu0 %v640
    %920 = vmatprep.subr.bf16.mxu0 %v643
    %921 = vmatpush1.bf16.msra.mxu0 %v642
    %922 = vmatprep.subr.bf16.mxu0 %v645
    %923 = vmatpush1.bf16.msra.mxu0 %v644
    %924 = vmatprep.subr.bf16.mxu0 %v647
    %925 = vmatpush1.bf16.msra.mxu0 %v646
    %926 = vmatprep.subr.bf16.mxu0 0
    %927 = vmatpush1.bf16.msra.mxu0 0
    %928 = vmatprep.subr.bf16.mxu0 0
    %929 = vmatpush1.bf16.msra.mxu0 0
    %930 = vmatprep.subr.bf16.mxu0 0
    %931 = vmatpush1.bf16.msra.mxu0 0
    %932 = vmatprep.subr.bf16.mxu0 0
    %933 = vmatpush1.bf16.msra.mxu0 0
    %934 = vmatprep.subr.bf16.mxu0 0
    %935 = vmatpush1.bf16.msra.mxu0 0
    %936 = vmatprep.subr.bf16.mxu0 0
    %937 = vmatpush1.bf16.msra.mxu0 0
    %938 = vmatprep.subr.bf16.mxu0 0
    %939 = vmatpush1.bf16.msra.mxu0 0
    %940 = vmatprep.subr.bf16.mxu0 0
    %941 = vmatpush1.bf16.msra.mxu0 0
    %942 = vmatprep.subr.bf16.mxu0 0
    %943 = vmatpush1.bf16.msra.mxu0 0
    %944 = vmatprep.subr.bf16.mxu0 0
    %945 = vmatpush1.bf16.msra.mxu0 0
    %946 = vmatprep.subr.bf16.mxu0 0
    %947 = vmatpush1.bf16.msra.mxu0 0
    %948 = vmatprep.subr.bf16.mxu0 0
    %949 = vmatpush1.bf16.msra.mxu0 0
    %950 = vmatprep.mubr.bf16.mxu0 0
    %951 = vmatmul.mubr.bf16.gmra.mrb[0].mxu0 %v916
    %v952 = vpop.f32.mrb[0].mxu0
    %v953 = vadd.f32 0.0, %v952
    %v954 = vpop.f32.mrb[0].mxu0
    %v955 = vadd.f32 0.0, %v954
    %v956 = vpop.f32.mrb[0].mxu0
    %v957 = vpop.f32.mrb[0].mxu0
    %958 = vdwg.mxu0
    %v959 = vld [vmem:[%s344] sm:$0x1]
    %v960 = vunpack.c.l.bf16 %v959
    %v961 = vadd.f32 %v960, %v953
    %v962 = vld [vmem:[%s503] sm:$0x1]
    %v963 = vunpack.c.l.bf16 %v962
    %v964 = vadd.f32 %v963, %v955
    %v965 = vxor.u32 %v961, 2147483648
    %v966 = vmul.f32 %v965, 1.442695
    %v967 = vpow.pop %v966
    %v968 = vadd.f32 %v967, 1.0
    %v969 = vrcp.pop %v968
    %v970 = vmul.f32 1.0, %v969
    %v971 = vtanh.pop %v961
    %v972 = vmul.f32 %v970, %v853
    %974 = vrot.lane.b32.xlu0 %v971, 32
    %v975 = vpop.permute.xlu0 %974
    %v977 = vmul.f32 %v970, %v975
    %979 = vrot.lane.b32.xlu0 %v977, 32
    %v980 = vpop.permute.xlu0 %979
    %v982 = vadd.f32 %v972, %v980
    %v983 = vtanh.pop %v982
    %985 = vrot.lane.b32.xlu0 %v983, 32
    %v986 = vpop.permute.xlu0 %985
    %v988 = vmul.f32 %v970, %v986
    %v989 = vxor.u32 %v964, 2147483648
    %v990 = vmul.f32 %v989, 1.442695
    %v991 = vpow.pop %v990
    %v992 = vadd.f32 %v991, 1.0
    %v993 = vrcp.pop %v992
    %v994 = vmul.f32 1.0, %v993
    %v995 = vtanh.pop %v964
    %v996 = vmul.f32 %v994, %v877
    %998 = vrot.lane.b32.xlu0 %v995, 32
    %v999 = vpop.permute.xlu0 %998
    %v1001 = vmul.f32 %v994, %v999
    %1003 = vrot.lane.b32.xlu0 %v1001, 32
    %v1004 = vpop.permute.xlu0 %1003
    %v1006 = vadd.f32 %v996, %v1004
    %v1007 = vtanh.pop %v1006
    %1009 = vrot.lane.b32.xlu0 %v1007, 32
    %v1010 = vpop.permute.xlu0 %1009
    %v1012 = vmul.f32 %v994, %v1010
    %v1015 = vunpack.c.l.s4 1983009808
    %v1016 = vunpack.c.0.s8 %v1015
    %v1017 = vlaneseq
    %v1018 = vshrl.u32 %v1017, 7
    %v1019 = vsub.s32 %v1016, %v1018
    %v1020 = vrot.slane %v988, %v1019
    %1021 = vrot.lane.b32.xlu0 %v1020, 64
    %v1022 = vpop.permute.xlu0 %1021
    %s1024 = scalar_lea.vmem [#allocation4], 4
    %1025 = vst.msk [vmem:[%s1024] sm:$0x3] %vm765, %v1022
    %v1028 = vunpack.c.l.s4 1983009808
    %v1029 = vunpack.c.0.s8 %v1028
    %v1030 = vlaneseq
    %v1031 = vshrl.u32 %v1030, 7
    %v1032 = vsub.s32 %v1029, %v1031
    %v1033 = vrot.slane %v1012, %v1032
    %1034 = vrot.lane.b32.xlu0 %v1033, 64
    %v1035 = vpop.permute.xlu0 %1034
    %s1037 = scalar_lea.vmem [#allocation5], 10
    %1038 = vst.msk [vmem:[%s1037] sm:$0x3] %vm765, %v1035
    %1039 = vrot.lane.b32.xlu0 %v1033, 96
    %v1040 = vpop.permute.xlu0 %1039
    %v1042 = vsel %vm783, %v1022, %v1040
    %v1043 = vpack.c.bf16 %v1042, %v1042
    %v1045 = vsel %vm195, %v1043, 0
    %1047 = vmatprep.subr.bf16.mxu0 %v641
    %1048 = vmatpush1.bf16.msra.mxu0 %v640
    %1049 = vmatprep.subr.bf16.mxu0 %v643
    %1050 = vmatpush1.bf16.msra.mxu0 %v642
    %1051 = vmatprep.subr.bf16.mxu0 %v645
    %1052 = vmatpush1.bf16.msra.mxu0 %v644
    %1053 = vmatprep.subr.bf16.mxu0 %v647
    %1054 = vmatpush1.bf16.msra.mxu0 %v646
    %1055 = vmatprep.subr.bf16.mxu0 0
    %1056 = vmatpush1.bf16.msra.mxu0 0
    %1057 = vmatprep.subr.bf16.mxu0 0
    %1058 = vmatpush1.bf16.msra.mxu0 0
    %1059 = vmatprep.subr.bf16.mxu0 0
    %1060 = vmatpush1.bf16.msra.mxu0 0
    %1061 = vmatprep.subr.bf16.mxu0 0
    %1062 = vmatpush1.bf16.msra.mxu0 0
    %1063 = vmatprep.subr.bf16.mxu0 0
    %1064 = vmatpush1.bf16.msra.mxu0 0
    %1065 = vmatprep.subr.bf16.mxu0 0
    %1066 = vmatpush1.bf16.msra.mxu0 0
    %1067 = vmatprep.subr.bf16.mxu0 0
    %1068 = vmatpush1.bf16.msra.mxu0 0
    %1069 = vmatprep.subr.bf16.mxu0 0
    %1070 = vmatpush1.bf16.msra.mxu0 0
    %1071 = vmatprep.subr.bf16.mxu0 0
    %1072 = vmatpush1.bf16.msra.mxu0 0
    %1073 = vmatprep.subr.bf16.mxu0 0
    %1074 = vmatpush1.bf16.msra.mxu0 0
    %1075 = vmatprep.subr.bf16.mxu0 0
    %1076 = vmatpush1.bf16.msra.mxu0 0
    %1077 = vmatprep.subr.bf16.mxu0 0
    %1078 = vmatpush1.bf16.msra.mxu0 0
    %1079 = vmatprep.mubr.bf16.mxu0 0
    %1080 = vmatmul.mubr.bf16.gmra.mrb[0].mxu0 %v1045
    %v1081 = vpop.f32.mrb[0].mxu0
    %v1082 = vadd.f32 0.0, %v1081
    %v1083 = vpop.f32.mrb[0].mxu0
    %v1084 = vadd.f32 0.0, %v1083
    %v1085 = vpop.f32.mrb[0].mxu0
    %v1086 = vpop.f32.mrb[0].mxu0
    %1087 = vdwg.mxu0
    %v1088 = vld [vmem:[%s396] sm:$0x1]
    %v1089 = vunpack.c.l.bf16 %v1088
    %v1090 = vadd.f32 %v1089, %v1082
    %v1091 = vld [vmem:[%s451] sm:$0x1]
    %v1092 = vunpack.c.l.bf16 %v1091
    %v1093 = vadd.f32 %v1092, %v1084
    %v1094 = vxor.u32 %v1090, 2147483648
    %v1095 = vmul.f32 %v1094, 1.442695
    %v1096 = vpow.pop %v1095
    %v1097 = vadd.f32 %v1096, 1.0
    %v1098 = vrcp.pop %v1097
    %v1099 = vmul.f32 1.0, %v1098
    %v1100 = vtanh.pop %v1090
    %v1101 = vmul.f32 %v1099, %v982
    %1103 = vrot.lane.b32.xlu0 %v1100, 32
    %v1104 = vpop.permute.xlu0 %1103
    %v1106 = vmul.f32 %v1099, %v1104
    %1108 = vrot.lane.b32.xlu0 %v1106, 32
    %v1109 = vpop.permute.xlu0 %1108
    %v1111 = vadd.f32 %v1101, %v1109
    %v1112 = vtanh.pop %v1111
    %1114 = vrot.lane.b32.xlu0 %v1112, 32
    %v1115 = vpop.permute.xlu0 %1114
    %v1117 = vmul.f32 %v1099, %v1115
    %v1118 = vxor.u32 %v1093, 2147483648
    %v1119 = vmul.f32 %v1118, 1.442695
    %v1120 = vpow.pop %v1119
    %v1121 = vadd.f32 %v1120, 1.0
    %v1122 = vrcp.pop %v1121
    %v1123 = vmul.f32 1.0, %v1122
    %v1124 = vtanh.pop %v1093
    %v1125 = vmul.f32 %v1123, %v1006
    %1127 = vrot.lane.b32.xlu0 %v1124, 32
    %v1128 = vpop.permute.xlu0 %1127
    %v1130 = vmul.f32 %v1123, %v1128
    %1132 = vrot.lane.b32.xlu0 %v1130, 32
    %v1133 = vpop.permute.xlu0 %1132
    %v1135 = vadd.f32 %v1125, %v1133
    %v1136 = vtanh.pop %v1135
    %1138 = vrot.lane.b32.xlu0 %v1136, 32
    %v1139 = vpop.permute.xlu0 %1138
    %v1141 = vmul.f32 %v1123, %v1139
    %v1144 = vunpack.c.l.s4 1983009808
    %v1145 = vunpack.c.0.s8 %v1144
    %v1146 = vlaneseq
    %v1147 = vshrl.u32 %v1146, 7
    %v1148 = vsub.s32 %v1145, %v1147
    %v1149 = vrot.slane %v1117, %v1148
    %1150 = vrot.lane.b32.xlu0 %v1149, 64
    %v1151 = vpop.permute.xlu0 %1150
    %s1153 = scalar_lea.vmem [#allocation4], 6
    %1154 = vst.msk [vmem:[%s1153] sm:$0x3] %vm765, %v1151
    %v1157 = vunpack.c.l.s4 1983009808
    %v1158 = vunpack.c.0.s8 %v1157
    %v1159 = vlaneseq
    %v1160 = vshrl.u32 %v1159, 7
    %v1161 = vsub.s32 %v1158, %v1160
    %v1162 = vrot.slane %v1141, %v1161
    %1163 = vrot.lane.b32.xlu0 %v1162, 64
    %v1164 = vpop.permute.xlu0 %1163
    %s1166 = scalar_lea.vmem [#allocation5], 8
    %1167 = vst.msk [vmem:[%s1166] sm:$0x3] %vm765, %v1164
    %1168 = vrot.lane.b32.xlu0 %v1162, 96
    %v1169 = vpop.permute.xlu0 %1168
    %v1171 = vsel %vm783, %v1151, %v1169
    %v1172 = vpack.c.bf16 %v1171, %v1171
    %v1174 = vsel %vm195, %v1172, 0
    %1176 = vmatprep.subr.bf16.mxu0 %v641
    %1177 = vmatpush1.bf16.msra.mxu0 %v640
    %1178 = vmatprep.subr.bf16.mxu0 %v643
    %1179 = vmatpush1.bf16.msra.mxu0 %v642
    %1180 = vmatprep.subr.bf16.mxu0 %v645
    %1181 = vmatpush1.bf16.msra.mxu0 %v644
    %1182 = vmatprep.subr.bf16.mxu0 %v647
    %1183 = vmatpush1.bf16.msra.mxu0 %v646
    %1184 = vmatprep.subr.bf16.mxu0 0
    %1185 = vmatpush1.bf16.msra.mxu0 0
    %1186 = vmatprep.subr.bf16.mxu0 0
    %1187 = vmatpush1.bf16.msra.mxu0 0
    %1188 = vmatprep.subr.bf16.mxu0 0
    %1189 = vmatpush1.bf16.msra.mxu0 0
    %1190 = vmatprep.subr.bf16.mxu0 0
    %1191 = vmatpush1.bf16.msra.mxu0 0
    %1192 = vmatprep.subr.bf16.mxu0 0
    %1193 = vmatpush1.bf16.msra.mxu0 0
    %1194 = vmatprep.subr.bf16.mxu0 0
    %1195 = vmatpush1.bf16.msra.mxu0 0
    %1196 = vmatprep.subr.bf16.mxu0 0
    %1197 = vmatpush1.bf16.msra.mxu0 0
    %1198 = vmatprep.subr.bf16.mxu0 0
    %1199 = vmatpush1.bf16.msra.mxu0 0
    %1200 = vmatprep.subr.bf16.mxu0 0
    %1201 = vmatpush1.bf16.msra.mxu0 0
    %1202 = vmatprep.subr.bf16.mxu0 0
    %1203 = vmatpush1.bf16.msra.mxu0 0
    %1204 = vmatprep.subr.bf16.mxu0 0
    %1205 = vmatpush1.bf16.msra.mxu0 0
    %1206 = vmatprep.subr.bf16.mxu0 0
    %1207 = vmatpush1.bf16.msra.mxu0 0
    %1208 = vmatprep.mubr.bf16.mxu0 0
    %1209 = vmatmul.mubr.bf16.gmra.mrb[0].mxu0 %v1174
    %v1210 = vpop.f32.mrb[0].mxu0
    %v1211 = vadd.f32 0.0, %v1210
    %v1212 = vpop.f32.mrb[0].mxu0
    %v1213 = vadd.f32 0.0, %v1212
    %v1214 = vpop.f32.mrb[0].mxu0
    %v1215 = vpop.f32.mrb[0].mxu0
    %1216 = vdwg.mxu0
    %v1217 = vld [vmem:[%s448] sm:$0x1]
    %v1218 = vunpack.c.l.bf16 %v1217
    %v1219 = vadd.f32 %v1218, %v1211
    %v1220 = vld [vmem:[%s399] sm:$0x1]
    %v1221 = vunpack.c.l.bf16 %v1220
    %v1222 = vadd.f32 %v1221, %v1213
    %v1223 = vxor.u32 %v1219, 2147483648
    %v1224 = vmul.f32 %v1223, 1.442695
    %v1225 = vpow.pop %v1224
    %v1226 = vadd.f32 %v1225, 1.0
    %v1227 = vrcp.pop %v1226
    %v1228 = vmul.f32 1.0, %v1227
    %v1229 = vtanh.pop %v1219
    %v1230 = vmul.f32 %v1228, %v1111
    %1232 = vrot.lane.b32.xlu0 %v1229, 32
    %v1233 = vpop.permute.xlu0 %1232
    %v1235 = vmul.f32 %v1228, %v1233
    %1237 = vrot.lane.b32.xlu0 %v1235, 32
    %v1238 = vpop.permute.xlu0 %1237
    %v1240 = vadd.f32 %v1230, %v1238
    %v1241 = vtanh.pop %v1240
    %1243 = vrot.lane.b32.xlu0 %v1241, 32
    %v1244 = vpop.permute.xlu0 %1243
    %v1246 = vmul.f32 %v1228, %v1244
    %v1247 = vxor.u32 %v1222, 2147483648
    %v1248 = vmul.f32 %v1247, 1.442695
    %v1249 = vpow.pop %v1248
    %v1250 = vadd.f32 %v1249, 1.0
    %v1251 = vrcp.pop %v1250
    %v1252 = vmul.f32 1.0, %v1251
    %v1253 = vtanh.pop %v1222
    %v1254 = vmul.f32 %v1252, %v1135
    %1256 = vrot.lane.b32.xlu0 %v1253, 32
    %v1257 = vpop.permute.xlu0 %1256
    %v1259 = vmul.f32 %v1252, %v1257
    %1261 = vrot.lane.b32.xlu0 %v1259, 32
    %v1262 = vpop.permute.xlu0 %1261
    %v1264 = vadd.f32 %v1254, %v1262
    %v1265 = vtanh.pop %v1264
    %1267 = vrot.lane.b32.xlu0 %v1265, 32
    %v1268 = vpop.permute.xlu0 %1267
    %v1270 = vmul.f32 %v1252, %v1268
    %v1273 = vunpack.c.l.s4 1983009808
    %v1274 = vunpack.c.0.s8 %v1273
    %v1275 = vlaneseq
    %v1276 = vshrl.u32 %v1275, 7
    %v1277 = vsub.s32 %v1274, %v1276
    %v1278 = vrot.slane %v1246, %v1277
    %1279 = vrot.lane.b32.xlu0 %v1278, 64
    %v1280 = vpop.permute.xlu0 %1279
    %s1282 = scalar_lea.vmem [#allocation4], 8
    %1283 = vst.msk [vmem:[%s1282] sm:$0x3] %vm765, %v1280
    %v1286 = vunpack.c.l.s4 1983009808
    %v1287 = vunpack.c.0.s8 %v1286
    %v1288 = vlaneseq
    %v1289 = vshrl.u32 %v1288, 7
    %v1290 = vsub.s32 %v1287, %v1289
    %v1291 = vrot.slane %v1270, %v1290
    %1292 = vrot.lane.b32.xlu0 %v1291, 64
    %v1293 = vpop.permute.xlu0 %1292
    %s1295 = scalar_lea.vmem [#allocation5], 6
    %1296 = vst.msk [vmem:[%s1295] sm:$0x3] %vm765, %v1293
    %1297 = vrot.lane.b32.xlu0 %v1291, 96
    %v1298 = vpop.permute.xlu0 %1297
    %v1300 = vsel %vm783, %v1280, %v1298
    %v1301 = vpack.c.bf16 %v1300, %v1300
    %v1303 = vsel %vm195, %v1301, 0
    %1305 = vmatprep.subr.bf16.mxu0 %v641
    %1306 = vmatpush1.bf16.msra.mxu0 %v640
    %1307 = vmatprep.subr.bf16.mxu0 %v643
    %1308 = vmatpush1.bf16.msra.mxu0 %v642
    %1309 = vmatprep.subr.bf16.mxu0 %v645
    %1310 = vmatpush1.bf16.msra.mxu0 %v644
    %1311 = vmatprep.subr.bf16.mxu0 %v647
    %1312 = vmatpush1.bf16.msra.mxu0 %v646
    %1313 = vmatprep.subr.bf16.mxu0 0
    %1314 = vmatpush1.bf16.msra.mxu0 0
    %1315 = vmatprep.subr.bf16.mxu0 0
    %1316 = vmatpush1.bf16.msra.mxu0 0
    %1317 = vmatprep.subr.bf16.mxu0 0
    %1318 = vmatpush1.bf16.msra.mxu0 0
    %1319 = vmatprep.subr.bf16.mxu0 0
    %1320 = vmatpush1.bf16.msra.mxu0 0
    %1321 = vmatprep.subr.bf16.mxu0 0
    %1322 = vmatpush1.bf16.msra.mxu0 0
    %1323 = vmatprep.subr.bf16.mxu0 0
    %1324 = vmatpush1.bf16.msra.mxu0 0
    %1325 = vmatprep.subr.bf16.mxu0 0
    %1326 = vmatpush1.bf16.msra.mxu0 0
    %1327 = vmatprep.subr.bf16.mxu0 0
    %1328 = vmatpush1.bf16.msra.mxu0 0
    %1329 = vmatprep.subr.bf16.mxu0 0
    %1330 = vmatpush1.bf16.msra.mxu0 0
    %1331 = vmatprep.subr.bf16.mxu0 0
    %1332 = vmatpush1.bf16.msra.mxu0 0
    %1333 = vmatprep.subr.bf16.mxu0 0
    %1334 = vmatpush1.bf16.msra.mxu0 0
    %1335 = vmatprep.subr.bf16.mxu0 0
    %1336 = vmatpush1.bf16.msra.mxu0 0
    %1337 = vmatprep.mubr.bf16.mxu0 0
    %1338 = vmatmul.mubr.bf16.gmra.mrb[0].mxu0 %v1303
    %v1339 = vpop.f32.mrb[0].mxu0
    %v1340 = vadd.f32 0.0, %v1339
    %v1341 = vpop.f32.mrb[0].mxu0
    %v1342 = vadd.f32 0.0, %v1341
    %v1343 = vpop.f32.mrb[0].mxu0
    %v1344 = vpop.f32.mrb[0].mxu0
    %1345 = vdwg.mxu0
    %v1346 = vld [vmem:[%s500] sm:$0x1]
    %v1347 = vunpack.c.l.bf16 %v1346
    %v1348 = vadd.f32 %v1347, %v1340
    %v1349 = vld [vmem:[%s347] sm:$0x1]
    %v1350 = vunpack.c.l.bf16 %v1349
    %v1351 = vadd.f32 %v1350, %v1342
    %v1352 = vxor.u32 %v1348, 2147483648
    %v1353 = vmul.f32 %v1352, 1.442695
    %v1354 = vpow.pop %v1353
    %v1355 = vadd.f32 %v1354, 1.0
    %v1356 = vrcp.pop %v1355
    %v1357 = vmul.f32 1.0, %v1356
    %v1358 = vtanh.pop %v1348
    %v1359 = vmul.f32 %v1357, %v1240
    %1361 = vrot.lane.b32.xlu0 %v1358, 32
    %v1362 = vpop.permute.xlu0 %1361
    %v1364 = vmul.f32 %v1357, %v1362
    %1366 = vrot.lane.b32.xlu0 %v1364, 32
    %v1367 = vpop.permute.xlu0 %1366
    %v1369 = vadd.f32 %v1359, %v1367
    %v1370 = vtanh.pop %v1369
    %1372 = vrot.lane.b32.xlu0 %v1370, 32
    %v1373 = vpop.permute.xlu0 %1372
    %v1375 = vmul.f32 %v1357, %v1373
    %v1376 = vxor.u32 %v1351, 2147483648
    %v1377 = vmul.f32 %v1376, 1.442695
    %v1378 = vpow.pop %v1377
    %v1379 = vadd.f32 %v1378, 1.0
    %v1380 = vrcp.pop %v1379
    %v1381 = vmul.f32 1.0, %v1380
    %v1382 = vtanh.pop %v1351
    %v1383 = vmul.f32 %v1381, %v1264
    %1385 = vrot.lane.b32.xlu0 %v1382, 32
    %v1386 = vpop.permute.xlu0 %1385
    %v1388 = vmul.f32 %v1381, %v1386
    %1390 = vrot.lane.b32.xlu0 %v1388, 32
    %v1391 = vpop.permute.xlu0 %1390
    %v1393 = vadd.f32 %v1383, %v1391
    %v1394 = vtanh.pop %v1393
    %1396 = vrot.lane.b32.xlu0 %v1394, 32
    %v1397 = vpop.permute.xlu0 %1396
    %v1399 = vmul.f32 %v1381, %v1397
    %v1402 = vunpack.c.l.s4 1983009808
    %v1403 = vunpack.c.0.s8 %v1402
    %v1404 = vlaneseq
    %v1405 = vshrl.u32 %v1404, 7
    %v1406 = vsub.s32 %v1403, %v1405
    %v1407 = vrot.slane %v1375, %v1406
    %1408 = vrot.lane.b32.xlu0 %v1407, 64
    %v1409 = vpop.permute.xlu0 %1408
    %s1411 = scalar_lea.vmem [#allocation4], 10
    %1412 = vst.msk [vmem:[%s1411] sm:$0x3] %vm765, %v1409
    %v1415 = vunpack.c.l.s4 1983009808
    %v1416 = vunpack.c.0.s8 %v1415
    %v1417 = vlaneseq
    %v1418 = vshrl.u32 %v1417, 7
    %v1419 = vsub.s32 %v1416, %v1418
    %v1420 = vrot.slane %v1399, %v1419
    %1421 = vrot.lane.b32.xlu0 %v1420, 64
    %v1422 = vpop.permute.xlu0 %1421
    %s1424 = scalar_lea.vmem [#allocation5], 4
    %1425 = vst.msk [vmem:[%s1424] sm:$0x3] %vm765, %v1422
    %1426 = vrot.lane.b32.xlu0 %v1420, 96
    %v1427 = vpop.permute.xlu0 %1426
    %v1429 = vsel %vm783, %v1409, %v1427
    %v1430 = vpack.c.bf16 %v1429, %v1429
    %v1432 = vsel %vm195, %v1430, 0
    %1434 = vmatprep.subr.bf16.mxu0 %v641
    %1435 = vmatpush1.bf16.msra.mxu0 %v640
    %1436 = vmatprep.subr.bf16.mxu0 %v643
    %1437 = vmatpush1.bf16.msra.mxu0 %v642
    %1438 = vmatprep.subr.bf16.mxu0 %v645
    %1439 = vmatpush1.bf16.msra.mxu0 %v644
    %1440 = vmatprep.subr.bf16.mxu0 %v647
    %1441 = vmatpush1.bf16.msra.mxu0 %v646
    %1442 = vmatprep.subr.bf16.mxu0 0
    %1443 = vmatpush1.bf16.msra.mxu0 0
    %1444 = vmatprep.subr.bf16.mxu0 0
    %1445 = vmatpush1.bf16.msra.mxu0 0
    %1446 = vmatprep.subr.bf16.mxu0 0
    %1447 = vmatpush1.bf16.msra.mxu0 0
    %1448 = vmatprep.subr.bf16.mxu0 0
    %1449 = vmatpush1.bf16.msra.mxu0 0
    %1450 = vmatprep.subr.bf16.mxu0 0
    %1451 = vmatpush1.bf16.msra.mxu0 0
    %1452 = vmatprep.subr.bf16.mxu0 0
    %1453 = vmatpush1.bf16.msra.mxu0 0
    %1454 = vmatprep.subr.bf16.mxu0 0
    %1455 = vmatpush1.bf16.msra.mxu0 0
    %1456 = vmatprep.subr.bf16.mxu0 0
    %1457 = vmatpush1.bf16.msra.mxu0 0
    %1458 = vmatprep.subr.bf16.mxu0 0
    %1459 = vmatpush1.bf16.msra.mxu0 0
    %1460 = vmatprep.subr.bf16.mxu0 0
    %1461 = vmatpush1.bf16.msra.mxu0 0
    %1462 = vmatprep.subr.bf16.mxu0 0
    %1463 = vmatpush1.bf16.msra.mxu0 0
    %1464 = vmatprep.subr.bf16.mxu0 0
    %1465 = vmatpush1.bf16.msra.mxu0 0
    %1466 = vmatprep.mubr.bf16.mxu0 0
    %1467 = vmatmul.mubr.bf16.gmra.mrb[0].mxu0 %v1432
    %v1468 = vpop.f32.mrb[0].mxu0
    %v1469 = vadd.f32 0.0, %v1468
    %v1470 = vpop.f32.mrb[0].mxu0
    %v1471 = vadd.f32 0.0, %v1470
    %v1472 = vpop.f32.mrb[0].mxu0
    %v1473 = vpop.f32.mrb[0].mxu0
    %1474 = vdwg.mxu0
    %v1475 = vld [vmem:[%s552] sm:$0x1]
    %v1476 = vunpack.c.l.bf16 %v1475
    %v1477 = vadd.f32 %v1476, %v1469
    %v1478 = vld [vmem:[%s295] sm:$0x1]
    %v1479 = vunpack.c.l.bf16 %v1478
    %v1480 = vadd.f32 %v1479, %v1471
    %v1481 = vxor.u32 %v1477, 2147483648
    %v1482 = vmul.f32 %v1481, 1.442695
    %v1483 = vpow.pop %v1482
    %v1484 = vadd.f32 %v1483, 1.0
    %v1485 = vrcp.pop %v1484
    %v1486 = vmul.f32 1.0, %v1485
    %v1487 = vtanh.pop %v1477
    %v1488 = vmul.f32 %v1486, %v1369
    %1490 = vrot.lane.b32.xlu0 %v1487, 32
    %v1491 = vpop.permute.xlu0 %1490
    %v1493 = vmul.f32 %v1486, %v1491
    %1495 = vrot.lane.b32.xlu0 %v1493, 32
    %v1496 = vpop.permute.xlu0 %1495
    %v1498 = vadd.f32 %v1488, %v1496
    %v1499 = vtanh.pop %v1498
    %1501 = vrot.lane.b32.xlu0 %v1499, 32
    %v1502 = vpop.permute.xlu0 %1501
    %v1504 = vmul.f32 %v1486, %v1502
    %v1505 = vxor.u32 %v1480, 2147483648
    %v1506 = vmul.f32 %v1505, 1.442695
    %v1507 = vpow.pop %v1506
    %v1508 = vadd.f32 %v1507, 1.0
    %v1509 = vrcp.pop %v1508
    %v1510 = vmul.f32 1.0, %v1509
    %v1511 = vtanh.pop %v1480
    %v1512 = vmul.f32 %v1510, %v1393
    %1514 = vrot.lane.b32.xlu0 %v1511, 32
    %v1515 = vpop.permute.xlu0 %1514
    %v1517 = vmul.f32 %v1510, %v1515
    %1519 = vrot.lane.b32.xlu0 %v1517, 32
    %v1520 = vpop.permute.xlu0 %1519
    %v1522 = vadd.f32 %v1512, %v1520
    %v1523 = vtanh.pop %v1522
    %1525 = vrot.lane.b32.xlu0 %v1523, 32
    %v1526 = vpop.permute.xlu0 %1525
    %v1528 = vmul.f32 %v1510, %v1526
    %v1531 = vunpack.c.l.s4 1983009808
    %v1532 = vunpack.c.0.s8 %v1531
    %v1533 = vlaneseq
    %v1534 = vshrl.u32 %v1533, 7
    %v1535 = vsub.s32 %v1532, %v1534
    %v1536 = vrot.slane %v1504, %v1535
    %1537 = vrot.lane.b32.xlu0 %v1536, 64
    %v1538 = vpop.permute.xlu0 %1537
    %s1540 = scalar_lea.vmem [#allocation4], 12
    %1541 = vst.msk [vmem:[%s1540] sm:$0x3] %vm765, %v1538
    %v1544 = vunpack.c.l.s4 1983009808
    %v1545 = vunpack.c.0.s8 %v1544
    %v1546 = vlaneseq
    %v1547 = vshrl.u32 %v1546, 7
    %v1548 = vsub.s32 %v1545, %v1547
    %v1549 = vrot.slane %v1528, %v1548
    %1550 = vrot.lane.b32.xlu0 %v1549, 64
    %v1551 = vpop.permute.xlu0 %1550
    %s1553 = scalar_lea.vmem [#allocation5], 2
    %1554 = vst.msk [vmem:[%s1553] sm:$0x3] %vm765, %v1551
    %1555 = vrot.lane.b32.xlu0 %v1549, 96
    %v1556 = vpop.permute.xlu0 %1555
    %v1558 = vsel %vm783, %v1538, %v1556
    %v1559 = vpack.c.bf16 %v1558, %v1558
    %v1561 = vsel %vm195, %v1559, 0
    %1563 = vmatprep.subr.bf16.mxu0 %v641
    %1564 = vmatpush1.bf16.msra.mxu0 %v640
    %1565 = vmatprep.subr.bf16.mxu0 %v643
    %1566 = vmatpush1.bf16.msra.mxu0 %v642
    %1567 = vmatprep.subr.bf16.mxu0 %v645
    %1568 = vmatpush1.bf16.msra.mxu0 %v644
    %1569 = vmatprep.subr.bf16.mxu0 %v647
    %1570 = vmatpush1.bf16.msra.mxu0 %v646
    %1571 = vmatprep.subr.bf16.mxu0 0
    %1572 = vmatpush1.bf16.msra.mxu0 0
    %1573 = vmatprep.subr.bf16.mxu0 0
    %1574 = vmatpush1.bf16.msra.mxu0 0
    %1575 = vmatprep.subr.bf16.mxu0 0
    %1576 = vmatpush1.bf16.msra.mxu0 0
    %1577 = vmatprep.subr.bf16.mxu0 0
    %1578 = vmatpush1.bf16.msra.mxu0 0
    %1579 = vmatprep.subr.bf16.mxu0 0
    %1580 = vmatpush1.bf16.msra.mxu0 0
    %1581 = vmatprep.subr.bf16.mxu0 0
    %1582 = vmatpush1.bf16.msra.mxu0 0
    %1583 = vmatprep.subr.bf16.mxu0 0
    %1584 = vmatpush1.bf16.msra.mxu0 0
    %1585 = vmatprep.subr.bf16.mxu0 0
    %1586 = vmatpush1.bf16.msra.mxu0 0
    %1587 = vmatprep.subr.bf16.mxu0 0
    %1588 = vmatpush1.bf16.msra.mxu0 0
    %1589 = vmatprep.subr.bf16.mxu0 0
    %1590 = vmatpush1.bf16.msra.mxu0 0
    %1591 = vmatprep.subr.bf16.mxu0 0
    %1592 = vmatpush1.bf16.msra.mxu0 0
    %1593 = vmatprep.subr.bf16.mxu0 0
    %1594 = vmatpush1.bf16.msra.mxu0 0
    %1595 = vmatprep.mubr.bf16.mxu0 0
    %1596 = vmatmul.mubr.bf16.gmra.mrb[0].mxu0 %v1561
    %v1597 = vpop.f32.mrb[0].mxu0
    %v1598 = vadd.f32 0.0, %v1597
    %v1599 = vpop.f32.mrb[0].mxu0
    %v1600 = vadd.f32 0.0, %v1599
    %v1601 = vpop.f32.mrb[0].mxu0
    %v1602 = vpop.f32.mrb[0].mxu0
    %1603 = vdwg.mxu0
    %v1604 = vld [vmem:[%s604] sm:$0x1]
    %v1605 = vunpack.c.l.bf16 %v1604
    %v1606 = vadd.f32 %v1605, %v1598
    %v1607 = vld [vmem:[%s243] sm:$0x1]
    %v1608 = vunpack.c.l.bf16 %v1607
    %v1609 = vadd.f32 %v1608, %v1600
    %v1610 = vxor.u32 %v1606, 2147483648
    %v1611 = vmul.f32 %v1610, 1.442695
    %v1612 = vpow.pop %v1611
    %v1613 = vadd.f32 %v1612, 1.0
    %v1614 = vrcp.pop %v1613
    %v1615 = vmul.f32 1.0, %v1614
    %v1616 = vtanh.pop %v1606
    %v1617 = vmul.f32 %v1615, %v1498
    %1619 = vrot.lane.b32.xlu0 %v1616, 32
    %v1620 = vpop.permute.xlu0 %1619
    %v1622 = vmul.f32 %v1615, %v1620
    %1624 = vrot.lane.b32.xlu0 %v1622, 32
    %v1625 = vpop.permute.xlu0 %1624
    %v1627 = vadd.f32 %v1617, %v1625
    %v1628 = vtanh.pop %v1627
    %1630 = vrot.lane.b32.xlu0 %v1628, 32
    %v1631 = vpop.permute.xlu0 %1630
    %v1633 = vmul.f32 %v1615, %v1631
    %v1634 = vxor.u32 %v1609, 2147483648
    %v1635 = vmul.f32 %v1634, 1.442695
    %v1636 = vpow.pop %v1635
    %v1637 = vadd.f32 %v1636, 1.0
    %v1638 = vrcp.pop %v1637
    %v1639 = vmul.f32 1.0, %v1638
    %v1640 = vtanh.pop %v1609
    %v1641 = vmul.f32 %v1639, %v1522
    %1643 = vrot.lane.b32.xlu0 %v1640, 32
    %v1644 = vpop.permute.xlu0 %1643
    %v1646 = vmul.f32 %v1639, %v1644
    %1648 = vrot.lane.b32.xlu0 %v1646, 32
    %v1649 = vpop.permute.xlu0 %1648
    %v1651 = vadd.f32 %v1641, %v1649
    %v1652 = vtanh.pop %v1651
    %1654 = vrot.lane.b32.xlu0 %v1652, 32
    %v1655 = vpop.permute.xlu0 %1654
    %v1657 = vmul.f32 %v1639, %v1655
    %v1660 = vunpack.c.l.s4 1983009808
    %v1661 = vunpack.c.0.s8 %v1660
    %v1662 = vlaneseq
    %v1663 = vshrl.u32 %v1662, 7
    %v1664 = vsub.s32 %v1661, %v1663
    %v1665 = vrot.slane %v1633, %v1664
    %1666 = vrot.lane.b32.xlu0 %v1665, 64
    %v1667 = vpop.permute.xlu0 %1666
    %s1669 = scalar_lea.vmem [#allocation4], 14
    %1670 = vst.msk [vmem:[%s1669] sm:$0x3] %vm765, %v1667
    %v1673 = vunpack.c.l.s4 1983009808
    %v1674 = vunpack.c.0.s8 %v1673
    %v1675 = vlaneseq
    %v1676 = vshrl.u32 %v1675, 7
    %v1677 = vsub.s32 %v1674, %v1676
    %v1678 = vrot.slane %v1657, %v1677
    %1679 = vrot.lane.b32.xlu0 %v1678, 64
    %v1680 = vpop.permute.xlu0 %1679
    %1682 = vst.msk [vmem:[#allocation5] sm:$0x3] %vm765, %v1680
    %v1683 = vld [vmem:[#allocation4] sm:$0x3]
    %v1684 = vld [vmem:[#allocation4 + $0x2] sm:$0x3]
    %v1685 = vld [vmem:[#allocation4 + $0x4] sm:$0x3]
    %v1686 = vld [vmem:[#allocation4 + $0x6] sm:$0x3]
    %v1687 = vld [vmem:[#allocation4 + $0x8] sm:$0x3]
    %v1688 = vld [vmem:[#allocation4 + $0xa] sm:$0x3]
    %v1689 = vld [vmem:[#allocation4 + $0xc] sm:$0x3]
    %v1690 = vld [vmem:[#allocation4 + $0xe] sm:$0x3]
    %v1691 = vld [vmem:[#allocation5] sm:$0x3]
    %v1692 = vld [vmem:[#allocation5 + $0x2] sm:$0x3]
    %v1693 = vld [vmem:[#allocation5 + $0x4] sm:$0x3]
    %v1694 = vld [vmem:[#allocation5 + $0x6] sm:$0x3]
    %v1695 = vld [vmem:[#allocation5 + $0x8] sm:$0x3]
    %v1696 = vld [vmem:[#allocation5 + $0xa] sm:$0x3]
    %v1697 = vld [vmem:[#allocation5 + $0xc] sm:$0x3]
    %v1698 = vld [vmem:[#allocation5 + $0xe] sm:$0x3]
    %v1699 = vld [vmem:[#allocation13] sm:$0x1]
    %v1701 = vlaneseq
    %v1702 = vshrl.u32 %v1701, 7
    %v1703 = vsub.s32 0, %v1702
    %v1704 = vrot.slane %v1699, %v1703
    %v1706 = vmul.f32 %v1683, %v1704
    %v1707 = vmul.f32 %v1684, %v1704
    %v1708 = vmul.f32 %v1685, %v1704
    %v1709 = vmul.f32 %v1686, %v1704
    %v1710 = vmul.f32 %v1687, %v1704
    %v1711 = vmul.f32 %v1688, %v1704
    %v1712 = vmul.f32 %v1689, %v1704
    %v1713 = vmul.f32 %v1690, %v1704
    %v1714 = vsel %vm765, %v1706, 0.0
    %1715 = vadd.xlane.f32.xlu0 %v1714
    %v1716 = vpop.xlane.xlu0 %1715
    %v1717 = vsel %vm765, %v1707, 0.0
    %1718 = vadd.xlane.f32.xlu0 %v1717
    %v1719 = vpop.xlane.xlu0 %1718
    %v1720 = vsel %vm765, %v1708, 0.0
    %1721 = vadd.xlane.f32.xlu0 %v1720
    %v1722 = vpop.xlane.xlu0 %1721
    %v1723 = vsel %vm765, %v1709, 0.0
    %1724 = vadd.xlane.f32.xlu0 %v1723
    %v1725 = vpop.xlane.xlu0 %1724
    %v1726 = vsel %vm765, %v1710, 0.0
    %1727 = vadd.xlane.f32.xlu0 %v1726
    %v1728 = vpop.xlane.xlu0 %1727
    %v1729 = vsel %vm765, %v1711, 0.0
    %1730 = vadd.xlane.f32.xlu0 %v1729
    %v1731 = vpop.xlane.xlu0 %1730
    %v1732 = vsel %vm765, %v1712, 0.0
    %1733 = vadd.xlane.f32.xlu0 %v1732
    %v1734 = vpop.xlane.xlu0 %1733
    %v1735 = vsel %vm765, %v1713, 0.0
    %1736 = vadd.xlane.f32.xlu0 %v1735
    %v1737 = vpop.xlane.xlu0 %1736
    %v1738 = vld [vmem:[#allocation15] sm:$0x1]
    %v1740 = vlaneseq
    %v1741 = vshrl.u32 %v1740, 7
    %v1742 = vsub.s32 0, %v1741
    %v1743 = vrot.slane %v1738, %v1742
    %v1745 = vmul.f32 %v1691, %v1743
    %v1746 = vmul.f32 %v1692, %v1743
    %v1747 = vmul.f32 %v1693, %v1743
    %v1748 = vmul.f32 %v1694, %v1743
    %v1749 = vmul.f32 %v1695, %v1743
    %v1750 = vmul.f32 %v1696, %v1743
    %v1751 = vmul.f32 %v1697, %v1743
    %v1752 = vmul.f32 %v1698, %v1743
    %v1753 = vsel %vm765, %v1745, 0.0
    %1754 = vadd.xlane.f32.xlu0 %v1753
    %v1755 = vpop.xlane.xlu0 %1754
    %v1756 = vsel %vm765, %v1746, 0.0
    %1757 = vadd.xlane.f32.xlu0 %v1756
    %v1758 = vpop.xlane.xlu0 %1757
    %v1759 = vsel %vm765, %v1747, 0.0
    %1760 = vadd.xlane.f32.xlu0 %v1759
    %v1761 = vpop.xlane.xlu0 %1760
    %v1762 = vsel %vm765, %v1748, 0.0
    %1763 = vadd.xlane.f32.xlu0 %v1762
    %v1764 = vpop.xlane.xlu0 %1763
    %v1765 = vsel %vm765, %v1749, 0.0
    %1766 = vadd.xlane.f32.xlu0 %v1765
    %v1767 = vpop.xlane.xlu0 %1766
    %v1768 = vsel %vm765, %v1750, 0.0
    %1769 = vadd.xlane.f32.xlu0 %v1768
    %v1770 = vpop.xlane.xlu0 %1769
    %v1771 = vsel %vm765, %v1751, 0.0
    %1772 = vadd.xlane.f32.xlu0 %v1771
    %v1773 = vpop.xlane.xlu0 %1772
    %v1774 = vsel %vm765, %v1752, 0.0
    %1775 = vadd.xlane.f32.xlu0 %v1774
    %v1776 = vpop.xlane.xlu0 %1775
    %v1777 = vadd.f32 %v1716, %v1755
    %v1778 = vadd.f32 %v1719, %v1758
    %v1779 = vadd.f32 %v1722, %v1761
    %v1780 = vadd.f32 %v1725, %v1764
    %v1781 = vadd.f32 %v1728, %v1767
    %v1782 = vadd.f32 %v1731, %v1770
    %v1783 = vadd.f32 %v1734, %v1773
    %v1784 = vadd.f32 %v1737, %v1776
    %v1785 = vld [vmem:[#allocation6] sm:$0x1]
    %v1787 = vlaneseq
    %v1788 = vshrl.u32 %v1787, 7
    %v1789 = vsub.s32 0, %v1788
    %v1790 = vrot.slane %v1785, %v1789
    %1791 = vset.pattern.permute.xlu0 0
    %1792 = vperm.xlu0 %1791, %v1790
    %v1793 = vpop.permute.xlu0 %1792
    %v1795 = vadd.f32 %v1777, %v1793
    %v1796 = vadd.f32 %v1778, %v1793
    %v1797 = vadd.f32 %v1779, %v1793
    %v1798 = vadd.f32 %v1780, %v1793
    %v1799 = vadd.f32 %v1781, %v1793
    %v1800 = vadd.f32 %v1782, %v1793
    %v1801 = vadd.f32 %v1783, %v1793
    %v1802 = vadd.f32 %v1784, %v1793
    %vm1803 = vcmask 1041408
    %v1804 = vsel %vm1803, %v1795, -inf
    %v1805 = vsel %vm1803, %v1796, -inf
    %v1806 = vsel %vm1803, %v1797, -inf
    %v1807 = vsel %vm1803, %v1798, -inf
    %v1808 = vsel %vm1803, %v1799, -inf
    %v1809 = vmax.f32 %v1804, %v1808
    %v1810 = vsel %vm1803, %v1800, -inf
    %v1811 = vmax.f32 %v1805, %v1810
    %v1812 = vsel %vm1803, %v1801, -inf
    %v1813 = vmax.f32 %v1806, %v1812
    %v1814 = vsel %vm1803, %v1802, -inf
    %v1815 = vmax.f32 %v1807, %v1814
    %v1816 = vmax.f32 %v1809, %v1811
    %v1817 = vmax.f32 %v1813, %v1815
    %v1818 = vmax.f32 %v1816, %v1817
    %v1819 = vsub.f32 %v1795, %v1818
    %v1820 = vsub.f32 %v1796, %v1818
    %v1821 = vsub.f32 %v1797, %v1818
    %v1822 = vsub.f32 %v1798, %v1818
    %v1823 = vsub.f32 %v1799, %v1818
    %v1824 = vsub.f32 %v1800, %v1818
    %v1825 = vsub.f32 %v1801, %v1818
    %v1826 = vsub.f32 %v1802, %v1818
    %v1827 = vmul.f32 %v1819, 1.442695
    %v1828 = vpow.pop %v1827
    %v1829 = vmul.f32 %v1820, 1.442695
    %v1830 = vpow.pop %v1829
    %v1831 = vmul.f32 %v1821, 1.442695
    %v1832 = vpow.pop %v1831
    %v1833 = vmul.f32 %v1822, 1.442695
    %v1834 = vpow.pop %v1833
    %v1835 = vmul.f32 %v1823, 1.442695
    %v1836 = vpow.pop %v1835
    %v1837 = vmul.f32 %v1824, 1.442695
    %v1838 = vpow.pop %v1837
    %v1839 = vmul.f32 %v1825, 1.442695
    %v1840 = vpow.pop %v1839
    %v1841 = vmul.f32 %v1826, 1.442695
    %v1842 = vpow.pop %v1841
    %v1843 = vlaneseq
    %v1844 = vshrl.u32 %v1843, 7
    %v1845 = vlaneseq
    %v1846 = vand.u32 %v1845, 127
    %v1847 = vsub.s32 %v1844, %v1846
    %vm1848 = vcmp.lt.s32.totalorder %v1847, 0
    %v1849 = vsub.s32 0, %v1847
    %v1850 = vsel %vm1848, %v1849, %v1847
    %vm1851 = vcmp.le.s32.totalorder %v1850, 2
    %v1852 = vsel %vm1851, 1, 0
    %v1853 = vcvt.s32.f32 %v1852
    %v1862 = vlaneseq
    %v1863 = vshrl.u32 %v1862, 7
    %v1864 = vsub.s32 %v1846, %v1863
    %v1865 = vrot.slane %v1828, %v1864
    %v1866 = vlaneseq
    %v1867 = vshrl.u32 %v1866, 7
    %v1868 = vsub.s32 %v1846, %v1867
    %v1869 = vrot.slane %v1830, %v1868
    %v1870 = vlaneseq
    %v1871 = vshrl.u32 %v1870, 7
    %v1872 = vsub.s32 %v1846, %v1871
    %v1873 = vrot.slane %v1832, %v1872
    %v1874 = vlaneseq
    %v1875 = vshrl.u32 %v1874, 7
    %v1876 = vsub.s32 %v1846, %v1875
    %v1877 = vrot.slane %v1834, %v1876
    %v1878 = vlaneseq
    %v1879 = vshrl.u32 %v1878, 7
    %v1880 = vsub.s32 %v1846, %v1879
    %v1881 = vrot.slane %v1836, %v1880
    %v1882 = vlaneseq
    %v1883 = vshrl.u32 %v1882, 7
    %v1884 = vsub.s32 %v1846, %v1883
    %v1885 = vrot.slane %v1838, %v1884
    %v1886 = vlaneseq
    %v1887 = vshrl.u32 %v1886, 7
    %v1888 = vsub.s32 %v1846, %v1887
    %v1889 = vrot.slane %v1840, %v1888
    %v1890 = vlaneseq
    %v1891 = vshrl.u32 %v1890, 7
    %v1892 = vsub.s32 %v1846, %v1891
    %v1893 = vrot.slane %v1842, %v1892
    %vm1894 = vcmask 1041409
    %v1895 = vsel %vm1894, %v1869, %v1865
    %vm1896 = vcmask 1042434
    %v1897 = vsel %vm1896, %v1873, %v1895
    %vm1898 = vcmask 1043459
    %v1899 = vsel %vm1898, %v1877, %v1897
    %vm1900 = vcmask 1044484
    %v1901 = vsel %vm1900, %v1881, %v1899
    %vm1902 = vcmask 1045509
    %v1903 = vsel %vm1902, %v1885, %v1901
    %vm1904 = vcmask 1046534
    %v1905 = vsel %vm1904, %v1889, %v1903
    %vm1906 = vcmask 1047559
    %v1907 = vsel %vm1906, %v1893, %v1905
    %vm1909 = vcmask 64512
    %v1911 = vsel %vm1909, %v1853, 0
    %1913 = vmatprep.subr.mxu0 0.0
    %1914 = vmatpush1.msra.mxu0 %v1907
    %1915 = vmatprep.subr.mxu0 0.0
    %1916 = vmatpush1.msra.mxu0 0.0
    %1917 = vmatprep.subr.mxu0 0.0
    %1918 = vmatpush1.msra.mxu0 0.0
    %1919 = vmatprep.subr.mxu0 0.0
    %1920 = vmatpush1.msra.mxu0 0.0
    %1921 = vmatprep.subr.mxu0 0.0
    %1922 = vmatpush1.msra.mxu0 0.0
    %1923 = vmatprep.subr.mxu0 0.0
    %1924 = vmatpush1.msra.mxu0 0.0
    %1925 = vmatprep.subr.mxu0 0.0
    %1926 = vmatpush1.msra.mxu0 0.0
    %1927 = vmatprep.subr.mxu0 0.0
    %1928 = vmatpush1.msra.mxu0 0.0
    %1929 = vmatprep.subr.mxu0 0.0
    %1930 = vmatpush1.msra.mxu0 0.0
    %1931 = vmatprep.subr.mxu0 0.0
    %1932 = vmatpush1.msra.mxu0 0.0
    %1933 = vmatprep.subr.mxu0 0.0
    %1934 = vmatpush1.msra.mxu0 0.0
    %1935 = vmatprep.subr.mxu0 0.0
    %1936 = vmatpush1.msra.mxu0 0.0
    %1937 = vmatprep.subr.mxu0 0.0
    %1938 = vmatpush1.msra.mxu0 0.0
    %1939 = vmatprep.subr.mxu0 0.0
    %1940 = vmatpush1.msra.mxu0 0.0
    %1941 = vmatprep.subr.mxu0 0.0
    %1942 = vmatpush1.msra.mxu0 0.0
    %1943 = vmatprep.subr.mxu0 0.0
    %1944 = vmatpush1.msra.mxu0 0.0
    %1945 = vmatprep.subr.mxu0 0.0
    %1946 = vmatpush1.msra.mxu0 0.0
    %1947 = vmatprep.subr.mxu0 0.0
    %1948 = vmatpush1.msra.mxu0 0.0
    %1949 = vmatprep.subr.mxu0 0.0
    %1950 = vmatpush1.msra.mxu0 0.0
    %1951 = vmatprep.subr.mxu0 0.0
    %1952 = vmatpush1.msra.mxu0 0.0
    %1953 = vmatprep.subr.mxu0 0.0
    %1954 = vmatpush1.msra.mxu0 0.0
    %1955 = vmatprep.subr.mxu0 0.0
    %1956 = vmatpush1.msra.mxu0 0.0
    %1957 = vmatprep.subr.mxu0 0.0
    %1958 = vmatpush1.msra.mxu0 0.0
    %1959 = vmatprep.subr.mxu0 0.0
    %1960 = vmatpush1.msra.mxu0 0.0
    %1961 = vmatprep.subr.mxu0 0.0
    %1962 = vmatpush1.msra.mxu0 0.0
    %1963 = vmatprep.subr.mxu0 0.0
    %1964 = vmatpush1.msra.mxu0 0.0
    %1965 = vmatprep.subr.mxu0 0.0
    %1966 = vmatpush1.msra.mxu0 0.0
    %1967 = vmatprep.subr.mxu0 0.0
    %1968 = vmatpush1.msra.mxu0 0.0
    %1969 = vmatprep.subr.mxu0 0.0
    %1970 = vmatpush1.msra.mxu0 0.0
    %1971 = vmatprep.subr.mxu0 0.0
    %1972 = vmatpush1.msra.mxu0 0.0
    %1973 = vmatprep.subr.mxu0 0.0
    %1974 = vmatpush1.msra.mxu0 0.0
    %1975 = vmatprep.subr.mxu0 0.0
    %1976 = vmatpush1.msra.mxu0 0.0
    %1977 = vmatprep.mubr.f32.mxu0 0.0
    %1978 = vmatmul.mubr.f32.gmra.mrb[0].mxu0 %v1911
    %v1979 = vpop.f32.mrb[0].mxu0
    %v1980 = vadd.f32 0.0, %v1979
    %v1981 = vpop.f32.mrb[0].mxu0
    %1982 = vdwg.mxu0
    %v1983 = vrcp.pop %v1980
    %1984 = vmatprep.subr.mxu0 0.0
    %1985 = vmatpush1.msra.mxu0 %v1983
    %1986 = vmatprep.subr.mxu0 0.0
    %1987 = vmatpush1.msra.mxu0 0.0
    %1988 = vmatprep.subr.mxu0 0.0
    %1989 = vmatpush1.msra.mxu0 0.0
    %1990 = vmatprep.subr.mxu0 0.0
    %1991 = vmatpush1.msra.mxu0 0.0
    %1992 = vmatprep.subr.mxu0 0.0
    %1993 = vmatpush1.msra.mxu0 0.0
    %1994 = vmatprep.subr.mxu0 0.0
    %1995 = vmatpush1.msra.mxu0 0.0
    %1996 = vmatprep.subr.mxu0 0.0
    %1997 = vmatpush1.msra.mxu0 0.0
    %1998 = vmatprep.subr.mxu0 0.0
    %1999 = vmatpush1.msra.mxu0 0.0
    %2000 = vmatprep.subr.mxu0 0.0
    %2001 = vmatpush1.msra.mxu0 0.0
    %2002 = vmatprep.subr.mxu0 0.0
    %2003 = vmatpush1.msra.mxu0 0.0
    %2004 = vmatprep.subr.mxu0 0.0
    %2005 = vmatpush1.msra.mxu0 0.0
    %2006 = vmatprep.subr.mxu0 0.0
    %2007 = vmatpush1.msra.mxu0 0.0
    %2008 = vmatprep.subr.mxu0 0.0
    %2009 = vmatpush1.msra.mxu0 0.0
    %2010 = vmatprep.subr.mxu0 0.0
    %2011 = vmatpush1.msra.mxu0 0.0
    %2012 = vmatprep.subr.mxu0 0.0
    %2013 = vmatpush1.msra.mxu0 0.0
    %2014 = vmatprep.subr.mxu0 0.0
    %2015 = vmatpush1.msra.mxu0 0.0
    %2016 = vmatprep.subr.mxu0 0.0
    %2017 = vmatpush1.msra.mxu0 0.0
    %2018 = vmatprep.subr.mxu0 0.0
    %2019 = vmatpush1.msra.mxu0 0.0
    %2020 = vmatprep.subr.mxu0 0.0
    %2021 = vmatpush1.msra.mxu0 0.0
    %2022 = vmatprep.subr.mxu0 0.0
    %2023 = vmatpush1.msra.mxu0 0.0
    %2024 = vmatprep.subr.mxu0 0.0
    %2025 = vmatpush1.msra.mxu0 0.0
    %2026 = vmatprep.subr.mxu0 0.0
    %2027 = vmatpush1.msra.mxu0 0.0
    %2028 = vmatprep.subr.mxu0 0.0
    %2029 = vmatpush1.msra.mxu0 0.0
    %2030 = vmatprep.subr.mxu0 0.0
    %2031 = vmatpush1.msra.mxu0 0.0
    %2032 = vmatprep.subr.mxu0 0.0
    %2033 = vmatpush1.msra.mxu0 0.0
    %2034 = vmatprep.subr.mxu0 0.0
    %2035 = vmatpush1.msra.mxu0 0.0
    %2036 = vmatprep.subr.mxu0 0.0
    %2037 = vmatpush1.msra.mxu0 0.0
    %2038 = vmatprep.subr.mxu0 0.0
    %2039 = vmatpush1.msra.mxu0 0.0
    %2040 = vmatprep.subr.mxu0 0.0
    %2041 = vmatpush1.msra.mxu0 0.0
    %2042 = vmatprep.subr.mxu0 0.0
    %2043 = vmatpush1.msra.mxu0 0.0
    %2044 = vmatprep.subr.mxu0 0.0
    %2045 = vmatpush1.msra.mxu0 0.0
    %2046 = vmatprep.subr.mxu0 0.0
    %2047 = vmatpush1.msra.mxu0 0.0
    %2048 = vmatprep.mubr.f32.mxu0 0.0
    %2049 = vmatmul.mubr.f32.gmra.mrb[0].mxu0 %v1911
    %v2050 = vpop.f32.mrb[0].mxu0
    %v2051 = vadd.f32 0.0, %v2050
    %v2052 = vpop.f32.mrb[0].mxu0
    %2053 = vdwg.mxu0
    %v2055 = vlaneseq
    %v2056 = vshrl.u32 %v2055, 7
    %v2057 = vsub.s32 0, %v2056
    %v2058 = vrot.slane %v2051, %v2057
    %2060 = vbcast.lane.b32.xlu0 %v2058, 256
    %v2061 = vpop.permute.xlu0 %2060
    %v2062 = vlaneseq
    %v2063 = vshrl.u32 %v2062, 7
    %v2064 = vsub.s32 1, %v2063
    %v2065 = vrot.slane %v2051, %v2064
    %2067 = vbcast.lane.b32.xlu0 %v2065, 256
    %v2068 = vpop.permute.xlu0 %2067
    %v2069 = vlaneseq
    %v2070 = vshrl.u32 %v2069, 7
    %v2071 = vsub.s32 2, %v2070
    %v2072 = vrot.slane %v2051, %v2071
    %2074 = vbcast.lane.b32.xlu0 %v2072, 256
    %v2075 = vpop.permute.xlu0 %2074
    %v2076 = vlaneseq
    %v2077 = vshrl.u32 %v2076, 7
    %v2078 = vsub.s32 3, %v2077
    %v2079 = vrot.slane %v2051, %v2078
    %2081 = vbcast.lane.b32.xlu0 %v2079, 256
    %v2082 = vpop.permute.xlu0 %2081
    %v2083 = vlaneseq
    %v2084 = vshrl.u32 %v2083, 7
    %v2085 = vsub.s32 4, %v2084
    %v2086 = vrot.slane %v2051, %v2085
    %2088 = vbcast.lane.b32.xlu0 %v2086, 256
    %v2089 = vpop.permute.xlu0 %2088
    %v2090 = vlaneseq
    %v2091 = vshrl.u32 %v2090, 7
    %v2092 = vsub.s32 5, %v2091
    %v2093 = vrot.slane %v2051, %v2092
    %2095 = vbcast.lane.b32.xlu0 %v2093, 256
    %v2096 = vpop.permute.xlu0 %2095
    %v2097 = vlaneseq
    %v2098 = vshrl.u32 %v2097, 7
    %v2099 = vsub.s32 6, %v2098
    %v2100 = vrot.slane %v2051, %v2099
    %2102 = vbcast.lane.b32.xlu0 %v2100, 256
    %v2103 = vpop.permute.xlu0 %2102
    %v2104 = vlaneseq
    %v2105 = vshrl.u32 %v2104, 7
    %v2106 = vsub.s32 7, %v2105
    %v2107 = vrot.slane %v2051, %v2106
    %2109 = vbcast.lane.b32.xlu0 %v2107, 256
    %v2110 = vpop.permute.xlu0 %2109
    %v2119 = vmul.f32 %v1828, %v2061
    %v2120 = vmul.f32 %v1830, %v2068
    %v2121 = vmul.f32 %v1832, %v2075
    %v2122 = vmul.f32 %v1834, %v2082
    %v2123 = vmul.f32 %v1836, %v2089
    %v2124 = vmul.f32 %v1838, %v2096
    %v2125 = vmul.f32 %v1840, %v2103
    %v2126 = vmul.f32 %v1842, %v2110
    %v2127 = vmul.f32 %v2119, 0.125
    %v2128 = vmul.f32 %v2120, 0.125
    %v2129 = vmul.f32 %v2121, 0.125
    %v2130 = vmul.f32 %v2122, 0.125
    %v2131 = vmul.f32 %v2123, 0.125
    %v2132 = vmul.f32 %v2124, 0.125
    %v2133 = vmul.f32 %v2125, 0.125
    %v2134 = vmul.f32 %v2126, 0.125
    %2136 = vset.pattern.permute.xlu0 0
    %2137 = vperm.xlu0 %2136, %v2127
    %v2138 = vpop.permute.xlu0 %2137
    %2141 = vset.pattern.permute.xlu0 0
    %2142 = vperm.xlu0 %2141, %v2128
    %v2143 = vpop.permute.xlu0 %2142
    %2146 = vset.pattern.permute.xlu0 0
    %2147 = vperm.xlu0 %2146, %v2129
    %v2148 = vpop.permute.xlu0 %2147
    %2151 = vset.pattern.permute.xlu0 0
    %2152 = vperm.xlu0 %2151, %v2130
    %v2153 = vpop.permute.xlu0 %2152
    %2156 = vset.pattern.permute.xlu0 0
    %2157 = vperm.xlu0 %2156, %v2131
    %v2158 = vpop.permute.xlu0 %2157
    %2161 = vset.pattern.permute.xlu0 0
    %2162 = vperm.xlu0 %2161, %v2132
    %v2163 = vpop.permute.xlu0 %2162
    %2166 = vset.pattern.permute.xlu0 0
    %2167 = vperm.xlu0 %2166, %v2133
    %v2168 = vpop.permute.xlu0 %2167
    %2171 = vset.pattern.permute.xlu0 0
    %2172 = vperm.xlu0 %2171, %v2134
    %v2173 = vpop.permute.xlu0 %2172
    %v2175 = vmul.f32 %v2138, %v1683
    %v2176 = vmul.f32 %v2143, %v1684
    %v2177 = vmul.f32 %v2148, %v1685
    %v2178 = vmul.f32 %v2153, %v1686
    %v2179 = vmul.f32 %v2158, %v1687
    %v2180 = vmul.f32 %v2163, %v1688
    %v2181 = vmul.f32 %v2168, %v1689
    %v2182 = vmul.f32 %v2173, %v1690
    %v2183 = vsel %vm765, %v2175, 0.0
    %v2184 = vsel %vm765, %v2176, 0.0
    %v2185 = vadd.f32 %v2183, %v2184
    %v2186 = vsel %vm765, %v2177, 0.0
    %v2187 = vadd.f32 %v2185, %v2186
    %v2188 = vsel %vm765, %v2178, 0.0
    %v2189 = vadd.f32 %v2187, %v2188
    %v2190 = vsel %vm765, %v2179, 0.0
    %v2191 = vadd.f32 %v2189, %v2190
    %v2192 = vsel %vm765, %v2180, 0.0
    %v2193 = vadd.f32 %v2191, %v2192
    %v2194 = vsel %vm765, %v2181, 0.0
    %v2195 = vadd.f32 %v2193, %v2194
    %v2196 = vsel %vm765, %v2182, 0.0
    %v2197 = vadd.f32 %v2195, %v2196
    %v2198 = vmul.f32 %v2138, %v1691
    %v2199 = vmul.f32 %v2143, %v1692
    %v2200 = vmul.f32 %v2148, %v1693
    %v2201 = vmul.f32 %v2153, %v1694
    %v2202 = vmul.f32 %v2158, %v1695
    %v2203 = vmul.f32 %v2163, %v1696
    %v2204 = vmul.f32 %v2168, %v1697
    %v2205 = vmul.f32 %v2173, %v1698
    %v2206 = vsel %vm765, %v2198, 0.0
    %v2207 = vsel %vm765, %v2199, 0.0
    %v2208 = vadd.f32 %v2206, %v2207
    %v2209 = vsel %vm765, %v2200, 0.0
    %v2210 = vadd.f32 %v2208, %v2209
    %v2211 = vsel %vm765, %v2201, 0.0
    %v2212 = vadd.f32 %v2210, %v2211
    %v2213 = vsel %vm765, %v2202, 0.0
    %v2214 = vadd.f32 %v2212, %v2213
    %v2215 = vsel %vm765, %v2203, 0.0
    %v2216 = vadd.f32 %v2214, %v2215
    %v2217 = vsel %vm765, %v2204, 0.0
    %v2218 = vadd.f32 %v2216, %v2217
    %v2219 = vsel %vm765, %v2205, 0.0
    %v2220 = vadd.f32 %v2218, %v2219
    %v2221 = vpack.c.bf16 %v2197, %v2197
    %v2222 = vld [vmem:[%s7] sm:$0xf]
    %v2223 = vld [vmem:[%s7 + $0x4] sm:$0xf]
    %v2224 = vld [vmem:[%s7 + $0x8] sm:$0xf]
    %v2225 = vld [vmem:[%s7 + $0xc] sm:$0xf]
    %v2226 = vpack.c.bf16 %v2220, %v2220
    %v2227 = vld [vmem:[#allocation16] sm:$0xf]
    %v2228 = vld [vmem:[#allocation16 + $0x4] sm:$0xf]
    %v2229 = vld [vmem:[#allocation16 + $0x8] sm:$0xf]
    %v2230 = vld [vmem:[#allocation16 + $0xc] sm:$0xf]
    %v2235 = vunpack.c.l.b16 %v2227
    %v2236 = vunpack.c.l.b16 %v2228
    %v2237 = vunpack.c.l.b16 %v2229
    %v2238 = vunpack.c.l.b16 %v2230
    %v2239 = vpack.c.b16 %v2236, %v2235
    %v2240 = vpack.c.b16 %v2238, %v2237
    %v2244 = vsel %vm783, %v2226, 0
    %2246 = vmatprep.subr.bf16.mxu0 0
    %2247 = vmatpush1.bf16.msra.mxu0 %v2239
    %2248 = vmatprep.subr.bf16.mxu0 0
    %2249 = vmatpush1.bf16.msra.mxu0 %v2240
    %2250 = vmatprep.subr.bf16.mxu0 0
    %2251 = vmatpush1.bf16.msra.mxu0 0
    %2252 = vmatprep.subr.bf16.mxu0 0
    %2253 = vmatpush1.bf16.msra.mxu0 0
    %2254 = vmatprep.subr.bf16.mxu0 0
    %2255 = vmatpush1.bf16.msra.mxu0 0
    %2256 = vmatprep.subr.bf16.mxu0 0
    %2257 = vmatpush1.bf16.msra.mxu0 0
    %2258 = vmatprep.subr.bf16.mxu0 0
    %2259 = vmatpush1.bf16.msra.mxu0 0
    %2260 = vmatprep.subr.bf16.mxu0 0
    %2261 = vmatpush1.bf16.msra.mxu0 0
    %2262 = vmatprep.subr.bf16.mxu0 0
    %2263 = vmatpush1.bf16.msra.mxu0 0
    %2264 = vmatprep.subr.bf16.mxu0 0
    %2265 = vmatpush1.bf16.msra.mxu0 0
    %2266 = vmatprep.subr.bf16.mxu0 0
    %2267 = vmatpush1.bf16.msra.mxu0 0
    %2268 = vmatprep.subr.bf16.mxu0 0
    %2269 = vmatpush1.bf16.msra.mxu0 0
    %2270 = vmatprep.subr.bf16.mxu0 0
    %2271 = vmatpush1.bf16.msra.mxu0 0
    %2272 = vmatprep.subr.bf16.mxu0 0
    %2273 = vmatpush1.bf16.msra.mxu0 0
    %2274 = vmatprep.subr.bf16.mxu0 0
    %2275 = vmatpush1.bf16.msra.mxu0 0
    %2276 = vmatprep.subr.bf16.mxu0 0
    %2277 = vmatpush1.bf16.msra.mxu0 0
    %2278 = vmatprep.mubr.bf16.mxu0 0
    %2279 = vmatmul.mubr.bf16.gmra.mrb[0].mxu0 %v2244
    %v2280 = vpop.f32.mrb[0].mxu0
    %v2281 = vadd.f32 0.0, %v2280
    %v2282 = vpop.f32.mrb[0].mxu0
    %v2283 = vpop.f32.mrb[0].mxu0
    %v2284 = vpop.f32.mrb[0].mxu0
    %2285 = vdwg.mxu0
    %v2290 = vunpack.c.l.b16 %v2222
    %v2291 = vunpack.c.l.b16 %v2223
    %v2292 = vunpack.c.l.b16 %v2224
    %v2293 = vunpack.c.l.b16 %v2225
    %v2294 = vpack.c.b16 %v2291, %v2290
    %v2295 = vpack.c.b16 %v2293, %v2292
    %v2299 = vsel %vm783, %v2221, 0
    %2301 = vmatprep.subr.bf16.mxu0 0
    %2302 = vmatpush1.bf16.msra.mxu0 %v2294
    %2303 = vmatprep.subr.bf16.mxu0 0
    %2304 = vmatpush1.bf16.msra.mxu0 %v2295
    %2305 = vmatprep.subr.bf16.mxu0 0
    %2306 = vmatpush1.bf16.msra.mxu0 0
    %2307 = vmatprep.subr.bf16.mxu0 0
    %2308 = vmatpush1.bf16.msra.mxu0 0
    %2309 = vmatprep.subr.bf16.mxu0 0
    %2310 = vmatpush1.bf16.msra.mxu0 0
    %2311 = vmatprep.subr.bf16.mxu0 0
    %2312 = vmatpush1.bf16.msra.mxu0 0
    %2313 = vmatprep.subr.bf16.mxu0 0
    %2314 = vmatpush1.bf16.msra.mxu0 0
    %2315 = vmatprep.subr.bf16.mxu0 0
    %2316 = vmatpush1.bf16.msra.mxu0 0
    %2317 = vmatprep.subr.bf16.mxu0 0
    %2318 = vmatpush1.bf16.msra.mxu0 0
    %2319 = vmatprep.subr.bf16.mxu0 0
    %2320 = vmatpush1.bf16.msra.mxu0 0
    %2321 = vmatprep.subr.bf16.mxu0 0
    %2322 = vmatpush1.bf16.msra.mxu0 0
    %2323 = vmatprep.subr.bf16.mxu0 0
    %2324 = vmatpush1.bf16.msra.mxu0 0
    %2325 = vmatprep.subr.bf16.mxu0 0
    %2326 = vmatpush1.bf16.msra.mxu0 0
    %2327 = vmatprep.subr.bf16.mxu0 0
    %2328 = vmatpush1.bf16.msra.mxu0 0
    %2329 = vmatprep.subr.bf16.mxu0 0
    %2330 = vmatpush1.bf16.msra.mxu0 0
    %2331 = vmatprep.subr.bf16.mxu0 0
    %2332 = vmatpush1.bf16.msra.mxu0 0
    %2333 = vmatprep.mubr.bf16.mxu0 0
    %2334 = vmatmul.mubr.bf16.gmra.mrb[0].mxu0 %v2299
    %v2335 = vpop.f32.mrb[0].mxu0
    %v2336 = vadd.f32 %v2281, %v2335
    %v2337 = vpop.f32.mrb[0].mxu0
    %v2338 = vpop.f32.mrb[0].mxu0
    %v2339 = vpop.f32.mrb[0].mxu0
    %2340 = vdwg.mxu0
    %v2341 = vld [vmem:[#allocation18] sm:$0x1]
    %v2343 = vlaneseq
    %v2344 = vshrl.u32 %v2343, 7
    %v2345 = vsub.s32 0, %v2344
    %v2346 = vrot.slane %v2341, %v2345
    %v2348 = vadd.f32 %v2336, %v2346
    %v2349 = vmax.f32 %v2348, 0.0
    %v2350 = vpack.c.bf16 %v2349, %v2349
    %v2351 = vld [vmem:[%s10] sm:$0xf]
    %v2352 = vld [vmem:[%s10 + $0x4] sm:$0xf]
    %v2353 = vld [vmem:[%s10 + $0x8] sm:$0xf]
    %v2354 = vld [vmem:[%s10 + $0xc] sm:$0xf]
    %v2355 = vld [vmem:[%s11] sm:$0x1]
    %v2357 = vlaneseq
    %v2358 = vshrl.u32 %v2357, 7
    %v2359 = vsub.s32 0, %v2358
    %v2360 = vrot.slane %v2355, %v2359
    %v2366 = vunpack.c.l.b16 %v2351
    %v2367 = vunpack.c.l.b16 %v2352
    %v2368 = vunpack.c.l.b16 %v2353
    %v2369 = vunpack.c.l.b16 %v2354
    %v2370 = vpack.c.b16 %v2367, %v2366
    %v2371 = vpack.c.b16 %v2369, %v2368
    %v2375 = vsel %vm783, %v2350, 0
    %2377 = vmatprep.subr.bf16.mxu0 0
    %2378 = vmatpush1.bf16.msra.mxu0 %v2370
    %2379 = vmatprep.subr.bf16.mxu0 0
    %2380 = vmatpush1.bf16.msra.mxu0 %v2371
    %2381 = vmatprep.subr.bf16.mxu0 0
    %2382 = vmatpush1.bf16.msra.mxu0 0
    %2383 = vmatprep.subr.bf16.mxu0 0
    %2384 = vmatpush1.bf16.msra.mxu0 0
    %2385 = vmatprep.subr.bf16.mxu0 0
    %2386 = vmatpush1.bf16.msra.mxu0 0
    %2387 = vmatprep.subr.bf16.mxu0 0
    %2388 = vmatpush1.bf16.msra.mxu0 0
    %2389 = vmatprep.subr.bf16.mxu0 0
    %2390 = vmatpush1.bf16.msra.mxu0 0
    %2391 = vmatprep.subr.bf16.mxu0 0
    %2392 = vmatpush1.bf16.msra.mxu0 0
    %2393 = vmatprep.subr.bf16.mxu0 0
    %2394 = vmatpush1.bf16.msra.mxu0 0
    %2395 = vmatprep.subr.bf16.mxu0 0
    %2396 = vmatpush1.bf16.msra.mxu0 0
    %2397 = vmatprep.subr.bf16.mxu0 0
    %2398 = vmatpush1.bf16.msra.mxu0 0
    %2399 = vmatprep.subr.bf16.mxu0 0
    %2400 = vmatpush1.bf16.msra.mxu0 0
    %2401 = vmatprep.subr.bf16.mxu0 0
    %2402 = vmatpush1.bf16.msra.mxu0 0
    %2403 = vmatprep.subr.bf16.mxu0 0
    %2404 = vmatpush1.bf16.msra.mxu0 0
    %2405 = vmatprep.subr.bf16.mxu0 0
    %2406 = vmatpush1.bf16.msra.mxu0 0
    %2407 = vmatprep.subr.bf16.mxu0 0
    %2408 = vmatpush1.bf16.msra.mxu0 0
    %2409 = vmatprep.mubr.bf16.mxu0 0
    %2410 = vmatmul.mubr.bf16.gmra.mrb[0].mxu0 %v2375
    %v2411 = vpop.f32.mrb[0].mxu0
    %v2412 = vadd.f32 %v2360, %v2411
    %v2413 = vpop.f32.mrb[0].mxu0
    %v2414 = vpop.f32.mrb[0].mxu0
    %v2415 = vpop.f32.mrb[0].mxu0
    %2416 = vdwg.mxu0
    %2417 = vst [vmem:[#allocation19] sm:$0x3] %v2412
    // Predicated region
    $region78: #{tpu_custom_call.1} parent=1 // pred_check
      _
    $region79: #{tpu_custom_call.1} parent=1 // pred_check_branch
      %2419 = sbr.rel (0) target = $region81
    $region80: #{tpu_custom_call.1} parent=1 // pred_region
      %s2421 = ssub.s32 32, 32
      %2422 = vsyncadd [#allocation9], %s2421
      %s2424 = sshll.u32 [#allocation19], 4
      %s2425 = int_to_ptr.vmem [resolvable:$true] %s2424
      %2427 = dma.vmem_to_hbm [thread:$0]  %s2425, 32, %s12, [#allocation9]
    $region81: #{tpu_custom_call.1} parent=1 // pred_fallthru
      _
    // Predicated region
    $region82: #{tpu_custom_call.1} parent=1 // pred_check
      _
    $region83: #{tpu_custom_call.1} parent=1 // pred_check_branch
      %2429 = sbr.rel (0) target = $region85
    $region84: #{tpu_custom_call.1} parent=1 // pred_region
      %2430 = dma.done [#allocation9], 32
    $region85: #{tpu_custom_call.1} parent=1 // pred_fallthru
      _
    %2431 = vsyncpa [#allocation8], 1
    %2432 = vsyncpa [#allocation11], 1
    %2433 = vsyncpa [#allocation14], 1
    %2434 = vsyncpa [#allocation17], 1
    %2435 = vsyncpa [#allocation9], 1

</llo_original>
